<compile_context>
chip_gen: v6e
topology: v6e:2x2x1
jax: 0.10.0
libtpu: 0.0.40
codegen_flags: <defaults>
</compile_context>

<pallas_src>
import functools
import math

import jax
import jax.numpy as jnp
from jax import lax
from jax.experimental import pallas as pl
from jax.experimental.pallas import tpu as pltpu


# ----------------------------------------------------------------------------
# Pallas kernel: one grid step == one (batch block, time block)
# ----------------------------------------------------------------------------
def _lstm_block_kernel(x_ref, w_ih_t_ref, bias_ref, w_hh_t_ref, h0_ref, c0_ref,
                       out_ref, cy_ref, proj_scr, h_scr, c_scr,
                       *, seq_len, t_blk, unroll, mask_tail):
    """grid = (batch_blocks, time_blocks); serial LSTM recurrence over t_blk steps."""
    t_idx = pl.program_id(1)
    b_blk, H = h_scr.shape                 # padded (batch block, hidden); H % 128 == 0
    mm_dtype = w_hh_t_ref.dtype            # matmul operand dtype (f32 or bf16)

    @pl.when(t_idx == 0)
    def _():
        h_scr[...] = h0_ref[...].astype(jnp.float32)
        c_scr[...] = c0_ref[...].astype(jnp.float32)

    # ---- non-recurrent input projection for the whole time block ------------
    # (off the serial critical path; M = t_blk * b_blk is MXU friendly)
    x_blk = x_ref[...].reshape(t_blk * b_blk, x_ref.shape[-1])
    proj_scr[...] = (jnp.dot(x_blk, w_ih_t_ref[...],
                             preferred_element_type=jnp.float32)
                     + bias_ref[...])

    t0 = t_idx * t_blk

    def _sigmoid(v):
        # sigmoid(x) = 0.5*tanh(0.5*x) + 0.5 : one EUP op instead of exp + recip.
        return 0.5 * jnp.tanh(0.5 * v) + 0.5

    def step(i, carry):
        h, c = carry
        row0 = pl.multiple_of(i * b_blk, b_blk)
        gates = proj_scr[pl.ds(row0, b_blk), :] + jnp.dot(
            h.astype(mm_dtype), w_hh_t_ref[...],
            preferred_element_type=jnp.float32)
        # cuDNN / PyTorch gate order [i, f, g, o]; slices lane-aligned (H % 128 == 0).
        i_g = _sigmoid(gates[:, 0 * H:1 * H])
        f_g = _sigmoid(gates[:, 1 * H:2 * H])
        g_g = jnp.tanh(gates[:, 2 * H:3 * H])
        o_g = _sigmoid(gates[:, 3 * H:4 * H])
        c_new = f_g * c + i_g * g_g
        h_new = o_g * jnp.tanh(c_new)
        out_ref[i] = h_new.astype(out_ref.dtype)
        if mask_tail:
            # Padded tail timesteps (global t >= seq_len) must not advance state.
            valid = (t0 + i) < seq_len
            h_new = jnp.where(valid, h_new, h)
            c_new = jnp.where(valid, c_new, c)
        return h_new, c_new

    h_fin, c_fin = lax.fori_loop(0, t_blk, step, (h_scr[...], c_scr[...]),
                                 unroll=unroll)
    h_scr[...] = h_fin
    c_scr[...] = c_fin

    @pl.when(t_idx == pl.num_programs(1) - 1)
    def _():
        cy_ref[...] = c_fin.astype(cy_ref.dtype)


# ----------------------------------------------------------------------------
# Wrapper: padding, weight layout, generation-dependent tiling
# ----------------------------------------------------------------------------
def _round_up(v, m):
    return ((v + m - 1) // m) * m


def _pad_gates(w, H, H_pad):
    """Pad the fused 4H gate axis gate-wise from 4*H to 4*H_pad with zeros."""
    w4 = w.reshape((4, H) + w.shape[1:])
    pad_width = [(0, 0), (0, H_pad - H)] + [(0, 0)] * (w.ndim - 1)
    return jnp.pad(w4, pad_width).reshape((4 * H_pad,) + w.shape[1:])


def _tensorcores_per_chip():
    """2 on v7x (megacore); 1 on v5e/v6e (single TensorCore)."""
    try:
        kind = jax.devices()[0].device_kind.lower()
    except Exception:
        return 1
    return 2 if "v7" in kind else 1


@functools.partial(jax.jit, static_argnames=("recurrent_dtype",))
def cudnn_lstm_forward(x, w_ih, w_hh, b_ih, b_hh, hx=None, cx=None,
                       recurrent_dtype=jnp.bfloat16):
    """Pallas implementation of CudnnLstm.forward (inference path).

    x:    (T, B, inputSize)   seq-first, like torch._cudnn_rnn
    w_ih: (4H, inputSize), w_hh: (4H, H), b_ih/b_hh: (4H,)
    Returns (output, (hy, cy)) with output (T, B, H), hy/cy (1, B, H).
    recurrent_dtype: dtype of matmul *operands* (bf16 default, or f32);
                     accumulation, gate math and h/c state are always f32.
    """
    T, B, In = x.shape
    H = w_ih.shape[0] // 4
    out_dtype = x.dtype
    f32 = jnp.float32

    # -------- generation-dependent tiling --------------------------------
    n_cores = _tensorcores_per_chip()
    b_mult = 16 if recurrent_dtype == jnp.bfloat16 else 8   # bf16 wants (16,128) tiles
    n_b = 2 if (n_cores >= 2 and B > b_mult) else 1          # split batch only on v7x
    B_pad = _round_up(B, n_b * b_mult)
    b_blk = B_pad // n_b

    H_pad = _round_up(H, 128)                                 # lane-aligned hidden/gates

    # time blocking: minimize padded tail steps, prefer larger blocks on ties
    if T <= 32:
        t_blk = T
    else:
        t_blk = min((32, 16, 8), key=lambda c: (_round_up(T, c), -c))
    T_pad = _round_up(T, t_blk)
    n_t = T_pad // t_blk
    mask_tail = (T_pad != T)

    # unroll cap: per-step gate live set ~ (4*H_pad/128)*(b_blk/8) vregs
    live_tiles = (4 * H_pad // 128) * max(1, b_blk // 8)
    unroll = t_blk if live_tiles <= 16 else min(t_blk, 4)

    # -------- weights: gate-wise padded, pre-transposed, operand dtype ---
    w_ih_t = _pad_gates(w_ih.astype(f32), H, H_pad).T.astype(recurrent_dtype)  # (In, 4H_pad)
    w_hh_t = jnp.pad(_pad_gates(w_hh.astype(f32), H, H_pad),
                     ((0, 0), (0, H_pad - H))).T.astype(recurrent_dtype)       # (H_pad, 4H_pad)
    bias = _pad_gates((b_ih + b_hh).astype(f32), H, H_pad).reshape(1, 4 * H_pad)

    # -------- initial state (zero padding keeps padded lanes exactly zero)
    if hx is None:
        h0 = jnp.zeros((B_pad, H_pad), f32)
    else:
        h0 = jnp.pad(hx[0].astype(f32), ((0, B_pad - B), (0, H_pad - H)))
    if cx is None:
        c0 = jnp.zeros((B_pad, H_pad), f32)
    else:
        c0 = jnp.pad(cx[0].astype(f32), ((0, B_pad - B), (0, H_pad - H)))

    # input, padded in time (masked in-kernel) and batch, in operand dtype
    x_pad = jnp.pad(x.astype(f32), ((0, T_pad - T), (0, B_pad - B), (0, 0)))
    x_pad = x_pad.astype(recurrent_dtype)

    kernel = functools.partial(_lstm_block_kernel, seq_len=T, t_blk=t_blk,
                               unroll=unroll, mask_tail=mask_tail)

    grid_spec = pltpu.PrefetchScalarGridSpec(
        num_scalar_prefetch=0,
        grid=(n_b, n_t),
        in_specs=[
            pl.BlockSpec((t_blk, b_blk, In), lambda b, t: (t, b, 0)),     # x
            pl.BlockSpec((In, 4 * H_pad), lambda b, t: (0, 0)),           # w_ih^T (resident)
            pl.BlockSpec((1, 4 * H_pad), lambda b, t: (0, 0)),            # bias
            pl.BlockSpec((H_pad, 4 * H_pad), lambda b, t: (0, 0)),        # w_hh^T (resident)
            pl.BlockSpec((b_blk, H_pad), lambda b, t: (b, 0)),            # h0
            pl.BlockSpec((b_blk, H_pad), lambda b, t: (b, 0)),            # c0
        ],
        out_specs=[
            pl.BlockSpec((t_blk, b_blk, H_pad), lambda b, t: (t, b, 0)),  # output
            pl.BlockSpec((b_blk, H_pad), lambda b, t: (b, 0)),            # cy
        ],
        scratch_shapes=[
            pltpu.VMEM((t_blk * b_blk, 4 * H_pad), f32),   # per-block input projection
            pltpu.VMEM((b_blk, H_pad), f32),               # h carry
            pltpu.VMEM((b_blk, H_pad), f32),               # c carry
        ],
    )

    # -------- VMEM budget + cost estimate ---------------------------------
    mm_bytes = jnp.dtype(recurrent_dtype).itemsize
    out_bytes = jnp.dtype(out_dtype).itemsize
    est_vmem = (2 * t_blk * b_blk * In * mm_bytes            # x block (double-buffered)
                + 2 * In * 4 * H_pad * mm_bytes              # w_ih^T
                + 2 * 4 * H_pad * 4                          # bias
                + 2 * H_pad * 4 * H_pad * mm_bytes           # w_hh^T
                + 4 * b_blk * H_pad * 4                      # h0 + c0
                + 2 * t_blk * b_blk * H_pad * out_bytes      # out block
                + 2 * b_blk * H_pad * 4                      # cy
                + t_blk * b_blk * 4 * H_pad * 4              # proj scratch
                + 2 * b_blk * H_pad * 4)                     # h/c carry scratch
    vmem_limit = int(min(max(est_vmem * 3 // 2, 32 * 1024 * 1024),
                         100 * 1024 * 1024))

    flops = (2 * T_pad * B_pad * 4 * H_pad * (H_pad + In)    # recurrent + input matmuls
             + 12 * T_pad * B_pad * H_pad)
    transcendentals = 5 * T_pad * B_pad * H_pad              # 4 gate nonlins + tanh(c)
    bytes_accessed = (T_pad * B_pad * In * mm_bytes
                      + T_pad * B_pad * H_pad * out_bytes
                      + (In + H_pad) * 4 * H_pad * mm_bytes
                      + 4 * H_pad * 4
                      + 3 * B_pad * H_pad * 4)
    cost = pl.CostEstimate(flops=int(flops), transcendentals=int(transcendentals),
                           bytes_accessed=int(bytes_accessed))

    if n_b > 1:
        # v7x megacore: shard batch blocks across the two TensorCores.
        dim_sem = (pltpu.CORE_PARALLEL, pltpu.ARBITRARY)
    else:
        dim_sem = ("arbitrary", "arbitrary")

    out_pad, cy_pad = pl.pallas_call(
        kernel,
        out_shape=(jax.ShapeDtypeStruct((T_pad, B_pad, H_pad), out_dtype),
                   jax.ShapeDtypeStruct((B_pad, H_pad), f32)),
        grid_spec=grid_spec,
        compiler_params=pltpu.CompilerParams(
            dimension_semantics=dim_sem,
            vmem_limit_bytes=vmem_limit),
        cost_estimate=cost,
    )(x_pad, w_ih_t, bias, w_hh_t, h0, c0)

    output = out_pad[:T, :B, :H]
    hy = output[-1:]                                   # h at the last real timestep
    cy = cy_pad[:B, :H][None].astype(out_dtype)
    return output, (hy, cy)


# ----------------------------------------------------------------------------
# Pure-JAX lax.scan reference (cuDNN/PyTorch gate semantics)
# ----------------------------------------------------------------------------
def _reference_lstm(x, w_ih, w_hh, b_ih, b_hh):
    T, B, In = x.shape
    H = w_hh.shape[1]
    b = b_ih + b_hh

    def step(carry, x_t):
        h, c = carry
        gates = x_t @ w_ih.T + h @ w_hh.T + b
        i_g = jax.nn.sigmoid(gates[:, 0 * H:1 * H])
        f_g = jax.nn.sigmoid(gates[:, 1 * H:2 * H])
        g_g = jnp.tanh(gates[:, 2 * H:3 * H])
        o_g = jax.nn.sigmoid(gates[:, 3 * H:4 * H])
        c_new = f_g * c + i_g * g_g
        h_new = o_g * jnp.tanh(c_new)
        return (h_new, c_new), h_new

    h0 = jnp.zeros((B, H), x.dtype)
    c0 = jnp.zeros((B, H), x.dtype)
    (hT, cT), ys = lax.scan(step, (h0, c0), x)
    return ys, hT[None], cT[None]


if __name__ == "__main__":
    # Small shapes consistent with CudnnLstm: seq=8, batch=2, in=16, hidden=32
    T, B, inputSize, hiddenSize = 8, 2, 16, 32

    key = jax.random.PRNGKey(0)
    k_x, k_x2, k_wih, k_whh, k_bih, k_bhh = jax.random.split(key, 6)

    # reset_parameters(): uniform(-stdv, stdv), stdv = 1/sqrt(hiddenSize)
    stdv = 1.0 / math.sqrt(hiddenSize)
    w_ih = jax.random.uniform(k_wih, (4 * hiddenSize, inputSize),
                              minval=-stdv, maxval=stdv, dtype=jnp.float32)
    w_hh = jax.random.uniform(k_whh, (4 * hiddenSize, hiddenSize),
                              minval=-stdv, maxval=stdv, dtype=jnp.float32)
    b_ih = jax.random.uniform(k_bih, (4 * hiddenSize,),
                              minval=-stdv, maxval=stdv, dtype=jnp.float32)
    b_hh = jax.random.uniform(k_bhh, (4 * hiddenSize,),
                              minval=-stdv, maxval=stdv, dtype=jnp.float32)

    x = jax.random.normal(k_x, (T, B, inputSize), dtype=jnp.float32)

    # ---- f32 matmul-operand path ----------------------------------------
    output, (hy, cy) = cudnn_lstm_forward(x, w_ih, w_hh, b_ih, b_hh,
                                          recurrent_dtype=jnp.float32)
    jax.block_until_ready((output, hy, cy))

    ref_out, ref_hy, ref_cy = _reference_lstm(x, w_ih, w_hh, b_ih, b_hh)
    assert output.shape == (T, B, hiddenSize)
    assert hy.shape == (1, B, hiddenSize) and cy.shape == (1, B, hiddenSize)
    assert jnp.allclose(output, ref_out, atol=5e-3, rtol=5e-3)
    assert jnp.allclose(hy, ref_hy, atol=5e-3, rtol=5e-3)
    assert jnp.allclose(cy, ref_cy, atol=5e-3, rtol=5e-3)

    # ---- default path (bf16 matmul operands; gate/state math stays f32) --
    out_bf, (hy_bf, cy_bf) = cudnn_lstm_forward(x, w_ih, w_hh, b_ih, b_hh)
    jax.block_until_ready((out_bf, hy_bf, cy_bf))
    assert float(jnp.max(jnp.abs(out_bf - ref_out))) < 7e-2
    assert float(jnp.max(jnp.abs(cy_bf - ref_cy))) < 7e-2

    # ---- T not divisible by the time block: multi-block carry + tail mask
    T2 = 37
    x2 = jax.random.normal(k_x2, (T2, B, inputSize), dtype=jnp.float32)
    out2, (hy2, cy2) = cudnn_lstm_forward(x2, w_ih, w_hh, b_ih, b_hh,
                                          recurrent_dtype=jnp.float32)
    jax.block_until_ready((out2, hy2, cy2))
    r_out2, r_hy2, r_cy2 = _reference_lstm(x2, w_ih, w_hh, b_ih, b_hh)
    assert out2.shape == (T2, B, hiddenSize)
    assert jnp.allclose(out2, r_out2, atol=5e-3, rtol=5e-3)
    assert jnp.allclose(hy2, r_hy2, atol=5e-3, rtol=5e-3)
    assert jnp.allclose(cy2, r_cy2, atol=5e-3, rtol=5e-3)

    print("KERNEL_OK")
</pallas_src>

<mosaic_0001>
module attributes {stable_mosaic.version = 11 : i64} {
  func.func @_lstm_block_kernel(%arg0: i32, %arg1: i32, %arg2: memref<8x8x16xf32, #tpu.memory_space<vmem>>, %arg3: memref<16x512xf32, #tpu.memory_space<vmem>>, %arg4: memref<1x512xf32, #tpu.memory_space<vmem>>, %arg5: memref<128x512xf32, #tpu.memory_space<vmem>>, %arg6: memref<8x128xf32, #tpu.memory_space<vmem>>, %arg7: memref<8x128xf32, #tpu.memory_space<vmem>>, %arg8: memref<8x8x128xf32, #tpu.memory_space<vmem>>, %arg9: memref<8x128xf32, #tpu.memory_space<vmem>>, %arg10: memref<64x512xf32, #tpu.memory_space<vmem>>, %arg11: memref<8x128xf32, #tpu.memory_space<vmem>>, %arg12: memref<8x128xf32, #tpu.memory_space<vmem>>) attributes {dimension_semantics = [#tpu.dimension_semantics<arbitrary>, #tpu.dimension_semantics<arbitrary>], iteration_bounds = array<i64: 1, 1>, scalar_prefetch = 0 : i64, scratch_operands = 3 : i64, tpu.core_type = #tpu.core_type<tc>, window_params = [{transform_indices = @transform_0, window_bounds = array<i64: 8, 8, 16>}, {pipeline_mode = #tpu.pipeline_mode<synchronous>, transform_indices = @transform_1, window_bounds = array<i64: 16, 512>}, {pipeline_mode = #tpu.pipeline_mode<synchronous>, transform_indices = @transform_2, window_bounds = array<i64: 1, 512>}, {pipeline_mode = #tpu.pipeline_mode<synchronous>, transform_indices = @transform_3, window_bounds = array<i64: 128, 512>}, {transform_indices = @transform_4, window_bounds = array<i64: 8, 128>}, {transform_indices = @transform_5, window_bounds = array<i64: 8, 128>}, {transform_indices = @transform_6, window_bounds = array<i64: 8, 8, 128>}, {transform_indices = @transform_7, window_bounds = array<i64: 8, 128>}]} {
    %c0_i32 = arith.constant 0 : i32
    %0 = arith.cmpi eq, %arg1, %c0_i32 : i32
    %1 = arith.extui %0 : i1 to i32
    %c0_i32_0 = arith.constant 0 : i32
    %2 = arith.cmpi ne, %1, %c0_i32_0 : i32
    scf.if %2 {
      %c0_148 = arith.constant 0 : index
      %c0_149 = arith.constant 0 : index
      %354 = vector.load %arg6[%c0_148, %c0_149] : memref<8x128xf32, #tpu.memory_space<vmem>>, vector<8x128xf32>
      %c0_150 = arith.constant 0 : index
      %c0_151 = arith.constant 0 : index
      %355 = vector.load %arg11[%c0_150, %c0_151] : memref<8x128xf32, #tpu.memory_space<vmem>>, vector<8x128xf32>
      tpu.vector_store %arg11[%c0_150, %c0_151], %354 {strides = array<i32>} : memref<8x128xf32, #tpu.memory_space<vmem>>, vector<8x128xf32>,
      %c0_152 = arith.constant 0 : index
      %c0_153 = arith.constant 0 : index
      %356 = vector.load %arg7[%c0_152, %c0_153] : memref<8x128xf32, #tpu.memory_space<vmem>>, vector<8x128xf32>
      %c0_154 = arith.constant 0 : index
      %c0_155 = arith.constant 0 : index
      %357 = vector.load %arg12[%c0_154, %c0_155] : memref<8x128xf32, #tpu.memory_space<vmem>>, vector<8x128xf32>
      tpu.vector_store %arg12[%c0_154, %c0_155], %356 {strides = array<i32>} : memref<8x128xf32, #tpu.memory_space<vmem>>, vector<8x128xf32>,
    } else {
    }
    %c0 = arith.constant 0 : index
    %c0_1 = arith.constant 0 : index
    %c0_2 = arith.constant 0 : index
    %3 = vector.load %arg2[%c0, %c0_1, %c0_2] : memref<8x8x16xf32, #tpu.memory_space<vmem>>, vector<8x8x16xf32>
    %4 = vector.shape_cast %3 : vector<8x8x16xf32> to vector<64x16xf32>
    %c0_3 = arith.constant 0 : index
    %c0_4 = arith.constant 0 : index
    %5 = vector.load %arg3[%c0_3, %c0_4] : memref<16x512xf32, #tpu.memory_space<vmem>>, vector<16x512xf32>
    %cst = arith.constant dense<0.000000e+00> : vector<64x512xf32>
    %6 = tpu.matmul %4, %5, %cst {dimension_numbers = #tpu.dot_dimension_numbers<[1], [0], [0], [1], [0, 0, 1, 1], [], []>} : vector<64x16xf32>, vector<16x512xf32>, vector<64x512xf32> -> vector<64x512xf32>
    %c0_5 = arith.constant 0 : index
    %c0_6 = arith.constant 0 : index
    %7 = vector.load %arg4[%c0_5, %c0_6] : memref<1x512xf32, #tpu.memory_space<vmem>>, vector<1x512xf32>
    %8 = vector.broadcast %7 : vector<1x512xf32> to vector<64x512xf32>
    %9 = arith.addf %6, %8 : vector<64x512xf32>
    %c0_7 = arith.constant 0 : index
    %c0_8 = arith.constant 0 : index
    %10 = vector.load %arg10[%c0_7, %c0_8] : memref<64x512xf32, #tpu.memory_space<vmem>>, vector<64x512xf32>
    tpu.vector_store %arg10[%c0_7, %c0_8], %9 {strides = array<i32>} : memref<64x512xf32, #tpu.memory_space<vmem>>, vector<64x512xf32>,
    %c0_9 = arith.constant 0 : index
    %c0_10 = arith.constant 0 : index
    %11 = vector.load %arg11[%c0_9, %c0_10] : memref<8x128xf32, #tpu.memory_space<vmem>>, vector<8x128xf32>
    %c0_11 = arith.constant 0 : index
    %c0_12 = arith.constant 0 : index
    %12 = vector.load %arg12[%c0_11, %c0_12] : memref<8x128xf32, #tpu.memory_space<vmem>>, vector<8x128xf32>
    %c0_i32_13 = arith.constant 0 : i32
    %c8_i32 = arith.constant 8 : i32
    %13 = arith.muli %c0_i32_13, %c8_i32 : i32
    %14 = tpu.assume_multiple %13, 8 : i32
    %15 = arith.index_cast %14 : i32 to index
    %c0_14 = arith.constant 0 : index
    %16 = vector.load %arg10[%15, %c0_14] : memref<64x512xf32, #tpu.memory_space<vmem>>, vector<8x512xf32>
    %c0_15 = arith.constant 0 : index
    %c0_16 = arith.constant 0 : index
    %17 = vector.load %arg5[%c0_15, %c0_16] : memref<128x512xf32, #tpu.memory_space<vmem>>, vector<128x512xf32>
    %cst_17 = arith.constant dense<0.000000e+00> : vector<8x512xf32>
    %18 = tpu.matmul %11, %17, %cst_17 {dimension_numbers = #tpu.dot_dimension_numbers<[1], [0], [0], [1], [0, 0, 1, 1], [], []>} : vector<8x128xf32>, vector<128x512xf32>, vector<8x512xf32> -> vector<8x512xf32>
    %19 = arith.addf %16, %18 : vector<8x512xf32>
    %20 = vector.extract_strided_slice %19 {offsets = [0, 0], sizes = [8, 128], strides = [1, 1]} : vector<8x512xf32> to vector<8x128xf32>
    %cst_18 = arith.constant 5.000000e-01 : f32
    %21 = vector.broadcast %cst_18 : f32 to vector<8x128xf32>
    %22 = arith.mulf %21, %20 : vector<8x128xf32>
    %23 = math.tanh %22 : vector<8x128xf32>
    %cst_19 = arith.constant 5.000000e-01 : f32
    %24 = vector.broadcast %cst_19 : f32 to vector<8x128xf32>
    %25 = arith.mulf %24, %23 : vector<8x128xf32>
    %cst_20 = arith.constant 5.000000e-01 : f32
    %26 = vector.broadcast %cst_20 : f32 to vector<8x128xf32>
    %27 = arith.addf %25, %26 : vector<8x128xf32>
    %28 = vector.extract_strided_slice %19 {offsets = [0, 128], sizes = [8, 128], strides = [1, 1]} : vector<8x512xf32> to vector<8x128xf32>
    %cst_21 = arith.constant 5.000000e-01 : f32
    %29 = vector.broadcast %cst_21 : f32 to vector<8x128xf32>
    %30 = arith.mulf %29, %28 : vector<8x128xf32>
    %31 = math.tanh %30 : vector<8x128xf32>
    %cst_22 = arith.constant 5.000000e-01 : f32
    %32 = vector.broadcast %cst_22 : f32 to vector<8x128xf32>
    %33 = arith.mulf %32, %31 : vector<8x128xf32>
    %cst_23 = arith.constant 5.000000e-01 : f32
    %34 = vector.broadcast %cst_23 : f32 to vector<8x128xf32>
    %35 = arith.addf %33, %34 : vector<8x128xf32>
    %36 = vector.extract_strided_slice %19 {offsets = [0, 256], sizes = [8, 128], strides = [1, 1]} : vector<8x512xf32> to vector<8x128xf32>
    %37 = math.tanh %36 : vector<8x128xf32>
    %38 = vector.extract_strided_slice %19 {offsets = [0, 384], sizes = [8, 128], strides = [1, 1]} : vector<8x512xf32> to vector<8x128xf32>
    %cst_24 = arith.constant 5.000000e-01 : f32
    %39 = vector.broadcast %cst_24 : f32 to vector<8x128xf32>
    %40 = arith.mulf %39, %38 : vector<8x128xf32>
    %41 = math.tanh %40 : vector<8x128xf32>
    %cst_25 = arith.constant 5.000000e-01 : f32
    %42 = vector.broadcast %cst_25 : f32 to vector<8x128xf32>
    %43 = arith.mulf %42, %41 : vector<8x128xf32>
    %cst_26 = arith.constant 5.000000e-01 : f32
    %44 = vector.broadcast %cst_26 : f32 to vector<8x128xf32>
    %45 = arith.addf %43, %44 : vector<8x128xf32>
    %46 = arith.mulf %35, %12 : vector<8x128xf32>
    %47 = arith.mulf %27, %37 : vector<8x128xf32>
    %48 = arith.addf %46, %47 : vector<8x128xf32>
    %49 = math.tanh %48 : vector<8x128xf32>
    %50 = arith.mulf %45, %49 : vector<8x128xf32>
    %51 = arith.index_cast %c0_i32_13 : i32 to index
    %c0_27 = arith.constant 0 : index
    %c0_28 = arith.constant 0 : index
    %52 = vector.load %arg8[%51, %c0_27, %c0_28] : memref<8x8x128xf32, #tpu.memory_space<vmem>>, vector<1x8x128xf32>
    %53 = vector.shape_cast %52 : vector<1x8x128xf32> to vector<8x128xf32>
    %54 = vector.shape_cast %50 : vector<8x128xf32> to vector<1x8x128xf32>
    tpu.vector_store %arg8[%51, %c0_27, %c0_28], %54 {strides = array<i32>} : memref<8x8x128xf32, #tpu.memory_space<vmem>>, vector<1x8x128xf32>,
    %c1_i32 = arith.constant 1 : i32
    %c8_i32_29 = arith.constant 8 : i32
    %55 = arith.muli %c1_i32, %c8_i32_29 : i32
    %56 = tpu.assume_multiple %55, 8 : i32
    %57 = arith.index_cast %56 : i32 to index
    %c0_30 = arith.constant 0 : index
    %58 = vector.load %arg10[%57, %c0_30] : memref<64x512xf32, #tpu.memory_space<vmem>>, vector<8x512xf32>
    %c0_31 = arith.constant 0 : index
    %c0_32 = arith.constant 0 : index
    %59 = vector.load %arg5[%c0_31, %c0_32] : memref<128x512xf32, #tpu.memory_space<vmem>>, vector<128x512xf32>
    %cst_33 = arith.constant dense<0.000000e+00> : vector<8x512xf32>
    %60 = tpu.matmul %50, %59, %cst_33 {dimension_numbers = #tpu.dot_dimension_numbers<[1], [0], [0], [1], [0, 0, 1, 1], [], []>} : vector<8x128xf32>, vector<128x512xf32>, vector<8x512xf32> -> vector<8x512xf32>
    %61 = arith.addf %58, %60 : vector<8x512xf32>
    %62 = vector.extract_strided_slice %61 {offsets = [0, 0], sizes = [8, 128], strides = [1, 1]} : vector<8x512xf32> to vector<8x128xf32>
    %cst_34 = arith.constant 5.000000e-01 : f32
    %63 = vector.broadcast %cst_34 : f32 to vector<8x128xf32>
    %64 = arith.mulf %63, %62 : vector<8x128xf32>
    %65 = math.tanh %64 : vector<8x128xf32>
    %cst_35 = arith.constant 5.000000e-01 : f32
    %66 = vector.broadcast %cst_35 : f32 to vector<8x128xf32>
    %67 = arith.mulf %66, %65 : vector<8x128xf32>
    %cst_36 = arith.constant 5.000000e-01 : f32
    %68 = vector.broadcast %cst_36 : f32 to vector<8x128xf32>
    %69 = arith.addf %67, %68 : vector<8x128xf32>
    %70 = vector.extract_strided_slice %61 {offsets = [0, 128], sizes = [8, 128], strides = [1, 1]} : vector<8x512xf32> to vector<8x128xf32>
    %cst_37 = arith.constant 5.000000e-01 : f32
    %71 = vector.broadcast %cst_37 : f32 to vector<8x128xf32>
    %72 = arith.mulf %71, %70 : vector<8x128xf32>
    %73 = math.tanh %72 : vector<8x128xf32>
    %cst_38 = arith.constant 5.000000e-01 : f32
    %74 = vector.broadcast %cst_38 : f32 to vector<8x128xf32>
    %75 = arith.mulf %74, %73 : vector<8x128xf32>
    %cst_39 = arith.constant 5.000000e-01 : f32
    %76 = vector.broadcast %cst_39 : f32 to vector<8x128xf32>
    %77 = arith.addf %75, %76 : vector<8x128xf32>
    %78 = vector.extract_strided_slice %61 {offsets = [0, 256], sizes = [8, 128], strides = [1, 1]} : vector<8x512xf32> to vector<8x128xf32>
    %79 = math.tanh %78 : vector<8x128xf32>
    %80 = vector.extract_strided_slice %61 {offsets = [0, 384], sizes = [8, 128], strides = [1, 1]} : vector<8x512xf32> to vector<8x128xf32>
    %cst_40 = arith.constant 5.000000e-01 : f32
    %81 = vector.broadcast %cst_40 : f32 to vector<8x128xf32>
    %82 = arith.mulf %81, %80 : vector<8x128xf32>
    %83 = math.tanh %82 : vector<8x128xf32>
    %cst_41 = arith.constant 5.000000e-01 : f32
    %84 = vector.broadcast %cst_41 : f32 to vector<8x128xf32>
    %85 = arith.mulf %84, %83 : vector<8x128xf32>
    %cst_42 = arith.constant 5.000000e-01 : f32
    %86 = vector.broadcast %cst_42 : f32 to vector<8x128xf32>
    %87 = arith.addf %85, %86 : vector<8x128xf32>
    %88 = arith.mulf %77, %48 : vector<8x128xf32>
    %89 = arith.mulf %69, %79 : vector<8x128xf32>
    %90 = arith.addf %88, %89 : vector<8x128xf32>
    %91 = math.tanh %90 : vector<8x128xf32>
    %92 = arith.mulf %87, %91 : vector<8x128xf32>
    %93 = arith.index_cast %c1_i32 : i32 to index
    %c0_43 = arith.constant 0 : index
    %c0_44 = arith.constant 0 : index
    %94 = vector.load %arg8[%93, %c0_43, %c0_44] : memref<8x8x128xf32, #tpu.memory_space<vmem>>, vector<1x8x128xf32>
    %95 = vector.shape_cast %94 : vector<1x8x128xf32> to vector<8x128xf32>
    %96 = vector.shape_cast %92 : vector<8x128xf32> to vector<1x8x128xf32>
    tpu.vector_store %arg8[%93, %c0_43, %c0_44], %96 {strides = array<i32>} : memref<8x8x128xf32, #tpu.memory_space<vmem>>, vector<1x8x128xf32>,
    %c2_i32 = arith.constant 2 : i32
    %c8_i32_45 = arith.constant 8 : i32
    %97 = arith.muli %c2_i32, %c8_i32_45 : i32
    %98 = tpu.assume_multiple %97, 8 : i32
    %99 = arith.index_cast %98 : i32 to index
    %c0_46 = arith.constant 0 : index
    %100 = vector.load %arg10[%99, %c0_46] : memref<64x512xf32, #tpu.memory_space<vmem>>, vector<8x512xf32>
    %c0_47 = arith.constant 0 : index
    %c0_48 = arith.constant 0 : index
    %101 = vector.load %arg5[%c0_47, %c0_48] : memref<128x512xf32, #tpu.memory_space<vmem>>, vector<128x512xf32>
    %cst_49 = arith.constant dense<0.000000e+00> : vector<8x512xf32>
    %102 = tpu.matmul %92, %101, %cst_49 {dimension_numbers = #tpu.dot_dimension_numbers<[1], [0], [0], [1], [0, 0, 1, 1], [], []>} : vector<8x128xf32>, vector<128x512xf32>, vector<8x512xf32> -> vector<8x512xf32>
    %103 = arith.addf %100, %102 : vector<8x512xf32>
    %104 = vector.extract_strided_slice %103 {offsets = [0, 0], sizes = [8, 128], strides = [1, 1]} : vector<8x512xf32> to vector<8x128xf32>
    %cst_50 = arith.constant 5.000000e-01 : f32
    %105 = vector.broadcast %cst_50 : f32 to vector<8x128xf32>
    %106 = arith.mulf %105, %104 : vector<8x128xf32>
    %107 = math.tanh %106 : vector<8x128xf32>
    %cst_51 = arith.constant 5.000000e-01 : f32
    %108 = vector.broadcast %cst_51 : f32 to vector<8x128xf32>
    %109 = arith.mulf %108, %107 : vector<8x128xf32>
    %cst_52 = arith.constant 5.000000e-01 : f32
    %110 = vector.broadcast %cst_52 : f32 to vector<8x128xf32>
    %111 = arith.addf %109, %110 : vector<8x128xf32>
    %112 = vector.extract_strided_slice %103 {offsets = [0, 128], sizes = [8, 128], strides = [1, 1]} : vector<8x512xf32> to vector<8x128xf32>
    %cst_53 = arith.constant 5.000000e-01 : f32
    %113 = vector.broadcast %cst_53 : f32 to vector<8x128xf32>
    %114 = arith.mulf %113, %112 : vector<8x128xf32>
    %115 = math.tanh %114 : vector<8x128xf32>
    %cst_54 = arith.constant 5.000000e-01 : f32
    %116 = vector.broadcast %cst_54 : f32 to vector<8x128xf32>
    %117 = arith.mulf %116, %115 : vector<8x128xf32>
    %cst_55 = arith.constant 5.000000e-01 : f32
    %118 = vector.broadcast %cst_55 : f32 to vector<8x128xf32>
    %119 = arith.addf %117, %118 : vector<8x128xf32>
    %120 = vector.extract_strided_slice %103 {offsets = [0, 256], sizes = [8, 128], strides = [1, 1]} : vector<8x512xf32> to vector<8x128xf32>
    %121 = math.tanh %120 : vector<8x128xf32>
    %122 = vector.extract_strided_slice %103 {offsets = [0, 384], sizes = [8, 128], strides = [1, 1]} : vector<8x512xf32> to vector<8x128xf32>
    %cst_56 = arith.constant 5.000000e-01 : f32
    %123 = vector.broadcast %cst_56 : f32 to vector<8x128xf32>
    %124 = arith.mulf %123, %122 : vector<8x128xf32>
    %125 = math.tanh %124 : vector<8x128xf32>
    %cst_57 = arith.constant 5.000000e-01 : f32
    %126 = vector.broadcast %cst_57 : f32 to vector<8x128xf32>
    %127 = arith.mulf %126, %125 : vector<8x128xf32>
    %cst_58 = arith.constant 5.000000e-01 : f32
    %128 = vector.broadcast %cst_58 : f32 to vector<8x128xf32>
    %129 = arith.addf %127, %128 : vector<8x128xf32>
    %130 = arith.mulf %119, %90 : vector<8x128xf32>
    %131 = arith.mulf %111, %121 : vector<8x128xf32>
    %132 = arith.addf %130, %131 : vector<8x128xf32>
    %133 = math.tanh %132 : vector<8x128xf32>
    %134 = arith.mulf %129, %133 : vector<8x128xf32>
    %135 = arith.index_cast %c2_i32 : i32 to index
    %c0_59 = arith.constant 0 : index
    %c0_60 = arith.constant 0 : index
    %136 = vector.load %arg8[%135, %c0_59, %c0_60] : memref<8x8x128xf32, #tpu.memory_space<vmem>>, vector<1x8x128xf32>
    %137 = vector.shape_cast %136 : vector<1x8x128xf32> to vector<8x128xf32>
    %138 = vector.shape_cast %134 : vector<8x128xf32> to vector<1x8x128xf32>
    tpu.vector_store %arg8[%135, %c0_59, %c0_60], %138 {strides = array<i32>} : memref<8x8x128xf32, #tpu.memory_space<vmem>>, vector<1x8x128xf32>,
    %c3_i32 = arith.constant 3 : i32
    %c8_i32_61 = arith.constant 8 : i32
    %139 = arith.muli %c3_i32, %c8_i32_61 : i32
    %140 = tpu.assume_multiple %139, 8 : i32
    %141 = arith.index_cast %140 : i32 to index
    %c0_62 = arith.constant 0 : index
    %142 = vector.load %arg10[%141, %c0_62] : memref<64x512xf32, #tpu.memory_space<vmem>>, vector<8x512xf32>
    %c0_63 = arith.constant 0 : index
    %c0_64 = arith.constant 0 : index
    %143 = vector.load %arg5[%c0_63, %c0_64] : memref<128x512xf32, #tpu.memory_space<vmem>>, vector<128x512xf32>
    %cst_65 = arith.constant dense<0.000000e+00> : vector<8x512xf32>
    %144 = tpu.matmul %134, %143, %cst_65 {dimension_numbers = #tpu.dot_dimension_numbers<[1], [0], [0], [1], [0, 0, 1, 1], [], []>} : vector<8x128xf32>, vector<128x512xf32>, vector<8x512xf32> -> vector<8x512xf32>
    %145 = arith.addf %142, %144 : vector<8x512xf32>
    %146 = vector.extract_strided_slice %145 {offsets = [0, 0], sizes = [8, 128], strides = [1, 1]} : vector<8x512xf32> to vector<8x128xf32>
    %cst_66 = arith.constant 5.000000e-01 : f32
    %147 = vector.broadcast %cst_66 : f32 to vector<8x128xf32>
    %148 = arith.mulf %147, %146 : vector<8x128xf32>
    %149 = math.tanh %148 : vector<8x128xf32>
    %cst_67 = arith.constant 5.000000e-01 : f32
    %150 = vector.broadcast %cst_67 : f32 to vector<8x128xf32>
    %151 = arith.mulf %150, %149 : vector<8x128xf32>
    %cst_68 = arith.constant 5.000000e-01 : f32
    %152 = vector.broadcast %cst_68 : f32 to vector<8x128xf32>
    %153 = arith.addf %151, %152 : vector<8x128xf32>
    %154 = vector.extract_strided_slice %145 {offsets = [0, 128], sizes = [8, 128], strides = [1, 1]} : vector<8x512xf32> to vector<8x128xf32>
    %cst_69 = arith.constant 5.000000e-01 : f32
    %155 = vector.broadcast %cst_69 : f32 to vector<8x128xf32>
    %156 = arith.mulf %155, %154 : vector<8x128xf32>
    %157 = math.tanh %156 : vector<8x128xf32>
    %cst_70 = arith.constant 5.000000e-01 : f32
    %158 = vector.broadcast %cst_70 : f32 to vector<8x128xf32>
    %159 = arith.mulf %158, %157 : vector<8x128xf32>
    %cst_71 = arith.constant 5.000000e-01 : f32
    %160 = vector.broadcast %cst_71 : f32 to vector<8x128xf32>
    %161 = arith.addf %159, %160 : vector<8x128xf32>
    %162 = vector.extract_strided_slice %145 {offsets = [0, 256], sizes = [8, 128], strides = [1, 1]} : vector<8x512xf32> to vector<8x128xf32>
    %163 = math.tanh %162 : vector<8x128xf32>
    %164 = vector.extract_strided_slice %145 {offsets = [0, 384], sizes = [8, 128], strides = [1, 1]} : vector<8x512xf32> to vector<8x128xf32>
    %cst_72 = arith.constant 5.000000e-01 : f32
    %165 = vector.broadcast %cst_72 : f32 to vector<8x128xf32>
    %166 = arith.mulf %165, %164 : vector<8x128xf32>
    %167 = math.tanh %166 : vector<8x128xf32>
    %cst_73 = arith.constant 5.000000e-01 : f32
    %168 = vector.broadcast %cst_73 : f32 to vector<8x128xf32>
    %169 = arith.mulf %168, %167 : vector<8x128xf32>
    %cst_74 = arith.constant 5.000000e-01 : f32
    %170 = vector.broadcast %cst_74 : f32 to vector<8x128xf32>
    %171 = arith.addf %169, %170 : vector<8x128xf32>
    %172 = arith.mulf %161, %132 : vector<8x128xf32>
    %173 = arith.mulf %153, %163 : vector<8x128xf32>
    %174 = arith.addf %172, %173 : vector<8x128xf32>
    %175 = math.tanh %174 : vector<8x128xf32>
    %176 = arith.mulf %171, %175 : vector<8x128xf32>
    %177 = arith.index_cast %c3_i32 : i32 to index
    %c0_75 = arith.constant 0 : index
    %c0_76 = arith.constant 0 : index
    %178 = vector.load %arg8[%177, %c0_75, %c0_76] : memref<8x8x128xf32, #tpu.memory_space<vmem>>, vector<1x8x128xf32>
    %179 = vector.shape_cast %178 : vector<1x8x128xf32> to vector<8x128xf32>
    %180 = vector.shape_cast %176 : vector<8x128xf32> to vector<1x8x128xf32>
    tpu.vector_store %arg8[%177, %c0_75, %c0_76], %180 {strides = array<i32>} : memref<8x8x128xf32, #tpu.memory_space<vmem>>, vector<1x8x128xf32>,
    %c4_i32 = arith.constant 4 : i32
    %c8_i32_77 = arith.constant 8 : i32
    %181 = arith.muli %c4_i32, %c8_i32_77 : i32
    %182 = tpu.assume_multiple %181, 8 : i32
    %183 = arith.index_cast %182 : i32 to index
    %c0_78 = arith.constant 0 : index
    %184 = vector.load %arg10[%183, %c0_78] : memref<64x512xf32, #tpu.memory_space<vmem>>, vector<8x512xf32>
    %c0_79 = arith.constant 0 : index
    %c0_80 = arith.constant 0 : index
    %185 = vector.load %arg5[%c0_79, %c0_80] : memref<128x512xf32, #tpu.memory_space<vmem>>, vector<128x512xf32>
    %cst_81 = arith.constant dense<0.000000e+00> : vector<8x512xf32>
    %186 = tpu.matmul %176, %185, %cst_81 {dimension_numbers = #tpu.dot_dimension_numbers<[1], [0], [0], [1], [0, 0, 1, 1], [], []>} : vector<8x128xf32>, vector<128x512xf32>, vector<8x512xf32> -> vector<8x512xf32>
    %187 = arith.addf %184, %186 : vector<8x512xf32>
    %188 = vector.extract_strided_slice %187 {offsets = [0, 0], sizes = [8, 128], strides = [1, 1]} : vector<8x512xf32> to vector<8x128xf32>
    %cst_82 = arith.constant 5.000000e-01 : f32
    %189 = vector.broadcast %cst_82 : f32 to vector<8x128xf32>
    %190 = arith.mulf %189, %188 : vector<8x128xf32>
    %191 = math.tanh %190 : vector<8x128xf32>
    %cst_83 = arith.constant 5.000000e-01 : f32
    %192 = vector.broadcast %cst_83 : f32 to vector<8x128xf32>
    %193 = arith.mulf %192, %191 : vector<8x128xf32>
    %cst_84 = arith.constant 5.000000e-01 : f32
    %194 = vector.broadcast %cst_84 : f32 to vector<8x128xf32>
    %195 = arith.addf %193, %194 : vector<8x128xf32>
    %196 = vector.extract_strided_slice %187 {offsets = [0, 128], sizes = [8, 128], strides = [1, 1]} : vector<8x512xf32> to vector<8x128xf32>
    %cst_85 = arith.constant 5.000000e-01 : f32
    %197 = vector.broadcast %cst_85 : f32 to vector<8x128xf32>
    %198 = arith.mulf %197, %196 : vector<8x128xf32>
    %199 = math.tanh %198 : vector<8x128xf32>
    %cst_86 = arith.constant 5.000000e-01 : f32
    %200 = vector.broadcast %cst_86 : f32 to vector<8x128xf32>
    %201 = arith.mulf %200, %199 : vector<8x128xf32>
    %cst_87 = arith.constant 5.000000e-01 : f32
    %202 = vector.broadcast %cst_87 : f32 to vector<8x128xf32>
    %203 = arith.addf %201, %202 : vector<8x128xf32>
    %204 = vector.extract_strided_slice %187 {offsets = [0, 256], sizes = [8, 128], strides = [1, 1]} : vector<8x512xf32> to vector<8x128xf32>
    %205 = math.tanh %204 : vector<8x128xf32>
    %206 = vector.extract_strided_slice %187 {offsets = [0, 384], sizes = [8, 128], strides = [1, 1]} : vector<8x512xf32> to vector<8x128xf32>
    %cst_88 = arith.constant 5.000000e-01 : f32
    %207 = vector.broadcast %cst_88 : f32 to vector<8x128xf32>
    %208 = arith.mulf %207, %206 : vector<8x128xf32>
    %209 = math.tanh %208 : vector<8x128xf32>
    %cst_89 = arith.constant 5.000000e-01 : f32
    %210 = vector.broadcast %cst_89 : f32 to vector<8x128xf32>
    %211 = arith.mulf %210, %209 : vector<8x128xf32>
    %cst_90 = arith.constant 5.000000e-01 : f32
    %212 = vector.broadcast %cst_90 : f32 to vector<8x128xf32>
    %213 = arith.addf %211, %212 : vector<8x128xf32>
    %214 = arith.mulf %203, %174 : vector<8x128xf32>
    %215 = arith.mulf %195, %205 : vector<8x128xf32>
    %216 = arith.addf %214, %215 : vector<8x128xf32>
    %217 = math.tanh %216 : vector<8x128xf32>
    %218 = arith.mulf %213, %217 : vector<8x128xf32>
    %219 = arith.index_cast %c4_i32 : i32 to index
    %c0_91 = arith.constant 0 : index
    %c0_92 = arith.constant 0 : index
    %220 = vector.load %arg8[%219, %c0_91, %c0_92] : memref<8x8x128xf32, #tpu.memory_space<vmem>>, vector<1x8x128xf32>
    %221 = vector.shape_cast %220 : vector<1x8x128xf32> to vector<8x128xf32>
    %222 = vector.shape_cast %218 : vector<8x128xf32> to vector<1x8x128xf32>
    tpu.vector_store %arg8[%219, %c0_91, %c0_92], %222 {strides = array<i32>} : memref<8x8x128xf32, #tpu.memory_space<vmem>>, vector<1x8x128xf32>,
    %c5_i32 = arith.constant 5 : i32
    %c8_i32_93 = arith.constant 8 : i32
    %223 = arith.muli %c5_i32, %c8_i32_93 : i32
    %224 = tpu.assume_multiple %223, 8 : i32
    %225 = arith.index_cast %224 : i32 to index
    %c0_94 = arith.constant 0 : index
    %226 = vector.load %arg10[%225, %c0_94] : memref<64x512xf32, #tpu.memory_space<vmem>>, vector<8x512xf32>
    %c0_95 = arith.constant 0 : index
    %c0_96 = arith.constant 0 : index
    %227 = vector.load %arg5[%c0_95, %c0_96] : memref<128x512xf32, #tpu.memory_space<vmem>>, vector<128x512xf32>
    %cst_97 = arith.constant dense<0.000000e+00> : vector<8x512xf32>
    %228 = tpu.matmul %218, %227, %cst_97 {dimension_numbers = #tpu.dot_dimension_numbers<[1], [0], [0], [1], [0, 0, 1, 1], [], []>} : vector<8x128xf32>, vector<128x512xf32>, vector<8x512xf32> -> vector<8x512xf32>
    %229 = arith.addf %226, %228 : vector<8x512xf32>
    %230 = vector.extract_strided_slice %229 {offsets = [0, 0], sizes = [8, 128], strides = [1, 1]} : vector<8x512xf32> to vector<8x128xf32>
    %cst_98 = arith.constant 5.000000e-01 : f32
    %231 = vector.broadcast %cst_98 : f32 to vector<8x128xf32>
    %232 = arith.mulf %231, %230 : vector<8x128xf32>
    %233 = math.tanh %232 : vector<8x128xf32>
    %cst_99 = arith.constant 5.000000e-01 : f32
    %234 = vector.broadcast %cst_99 : f32 to vector<8x128xf32>
    %235 = arith.mulf %234, %233 : vector<8x128xf32>
    %cst_100 = arith.constant 5.000000e-01 : f32
    %236 = vector.broadcast %cst_100 : f32 to vector<8x128xf32>
    %237 = arith.addf %235, %236 : vector<8x128xf32>
    %238 = vector.extract_strided_slice %229 {offsets = [0, 128], sizes = [8, 128], strides = [1, 1]} : vector<8x512xf32> to vector<8x128xf32>
    %cst_101 = arith.constant 5.000000e-01 : f32
    %239 = vector.broadcast %cst_101 : f32 to vector<8x128xf32>
    %240 = arith.mulf %239, %238 : vector<8x128xf32>
    %241 = math.tanh %240 : vector<8x128xf32>
    %cst_102 = arith.constant 5.000000e-01 : f32
    %242 = vector.broadcast %cst_102 : f32 to vector<8x128xf32>
    %243 = arith.mulf %242, %241 : vector<8x128xf32>
    %cst_103 = arith.constant 5.000000e-01 : f32
    %244 = vector.broadcast %cst_103 : f32 to vector<8x128xf32>
    %245 = arith.addf %243, %244 : vector<8x128xf32>
    %246 = vector.extract_strided_slice %229 {offsets = [0, 256], sizes = [8, 128], strides = [1, 1]} : vector<8x512xf32> to vector<8x128xf32>
    %247 = math.tanh %246 : vector<8x128xf32>
    %248 = vector.extract_strided_slice %229 {offsets = [0, 384], sizes = [8, 128], strides = [1, 1]} : vector<8x512xf32> to vector<8x128xf32>
    %cst_104 = arith.constant 5.000000e-01 : f32
    %249 = vector.broadcast %cst_104 : f32 to vector<8x128xf32>
    %250 = arith.mulf %249, %248 : vector<8x128xf32>
    %251 = math.tanh %250 : vector<8x128xf32>
    %cst_105 = arith.constant 5.000000e-01 : f32
    %252 = vector.broadcast %cst_105 : f32 to vector<8x128xf32>
    %253 = arith.mulf %252, %251 : vector<8x128xf32>
    %cst_106 = arith.constant 5.000000e-01 : f32
    %254 = vector.broadcast %cst_106 : f32 to vector<8x128xf32>
    %255 = arith.addf %253, %254 : vector<8x128xf32>
    %256 = arith.mulf %245, %216 : vector<8x128xf32>
    %257 = arith.mulf %237, %247 : vector<8x128xf32>
    %258 = arith.addf %256, %257 : vector<8x128xf32>
    %259 = math.tanh %258 : vector<8x128xf32>
    %260 = arith.mulf %255, %259 : vector<8x128xf32>
    %261 = arith.index_cast %c5_i32 : i32 to index
    %c0_107 = arith.constant 0 : index
    %c0_108 = arith.constant 0 : index
    %262 = vector.load %arg8[%261, %c0_107, %c0_108] : memref<8x8x128xf32, #tpu.memory_space<vmem>>, vector<1x8x128xf32>
    %263 = vector.shape_cast %262 : vector<1x8x128xf32> to vector<8x128xf32>
    %264 = vector.shape_cast %260 : vector<8x128xf32> to vector<1x8x128xf32>
    tpu.vector_store %arg8[%261, %c0_107, %c0_108], %264 {strides = array<i32>} : memref<8x8x128xf32, #tpu.memory_space<vmem>>, vector<1x8x128xf32>,
    %c6_i32 = arith.constant 6 : i32
    %c8_i32_109 = arith.constant 8 : i32
    %265 = arith.muli %c6_i32, %c8_i32_109 : i32
    %266 = tpu.assume_multiple %265, 8 : i32
    %267 = arith.index_cast %266 : i32 to index
    %c0_110 = arith.constant 0 : index
    %268 = vector.load %arg10[%267, %c0_110] : memref<64x512xf32, #tpu.memory_space<vmem>>, vector<8x512xf32>
    %c0_111 = arith.constant 0 : index
    %c0_112 = arith.constant 0 : index
    %269 = vector.load %arg5[%c0_111, %c0_112] : memref<128x512xf32, #tpu.memory_space<vmem>>, vector<128x512xf32>
    %cst_113 = arith.constant dense<0.000000e+00> : vector<8x512xf32>
    %270 = tpu.matmul %260, %269, %cst_113 {dimension_numbers = #tpu.dot_dimension_numbers<[1], [0], [0], [1], [0, 0, 1, 1], [], []>} : vector<8x128xf32>, vector<128x512xf32>, vector<8x512xf32> -> vector<8x512xf32>
    %271 = arith.addf %268, %270 : vector<8x512xf32>
    %272 = vector.extract_strided_slice %271 {offsets = [0, 0], sizes = [8, 128], strides = [1, 1]} : vector<8x512xf32> to vector<8x128xf32>
    %cst_114 = arith.constant 5.000000e-01 : f32
    %273 = vector.broadcast %cst_114 : f32 to vector<8x128xf32>
    %274 = arith.mulf %273, %272 : vector<8x128xf32>
    %275 = math.tanh %274 : vector<8x128xf32>
    %cst_115 = arith.constant 5.000000e-01 : f32
    %276 = vector.broadcast %cst_115 : f32 to vector<8x128xf32>
    %277 = arith.mulf %276, %275 : vector<8x128xf32>
    %cst_116 = arith.constant 5.000000e-01 : f32
    %278 = vector.broadcast %cst_116 : f32 to vector<8x128xf32>
    %279 = arith.addf %277, %278 : vector<8x128xf32>
    %280 = vector.extract_strided_slice %271 {offsets = [0, 128], sizes = [8, 128], strides = [1, 1]} : vector<8x512xf32> to vector<8x128xf32>
    %cst_117 = arith.constant 5.000000e-01 : f32
    %281 = vector.broadcast %cst_117 : f32 to vector<8x128xf32>
    %282 = arith.mulf %281, %280 : vector<8x128xf32>
    %283 = math.tanh %282 : vector<8x128xf32>
    %cst_118 = arith.constant 5.000000e-01 : f32
    %284 = vector.broadcast %cst_118 : f32 to vector<8x128xf32>
    %285 = arith.mulf %284, %283 : vector<8x128xf32>
    %cst_119 = arith.constant 5.000000e-01 : f32
    %286 = vector.broadcast %cst_119 : f32 to vector<8x128xf32>
    %287 = arith.addf %285, %286 : vector<8x128xf32>
    %288 = vector.extract_strided_slice %271 {offsets = [0, 256], sizes = [8, 128], strides = [1, 1]} : vector<8x512xf32> to vector<8x128xf32>
    %289 = math.tanh %288 : vector<8x128xf32>
    %290 = vector.extract_strided_slice %271 {offsets = [0, 384], sizes = [8, 128], strides = [1, 1]} : vector<8x512xf32> to vector<8x128xf32>
    %cst_120 = arith.constant 5.000000e-01 : f32
    %291 = vector.broadcast %cst_120 : f32 to vector<8x128xf32>
    %292 = arith.mulf %291, %290 : vector<8x128xf32>
    %293 = math.tanh %292 : vector<8x128xf32>
    %cst_121 = arith.constant 5.000000e-01 : f32
    %294 = vector.broadcast %cst_121 : f32 to vector<8x128xf32>
    %295 = arith.mulf %294, %293 : vector<8x128xf32>
    %cst_122 = arith.constant 5.000000e-01 : f32
    %296 = vector.broadcast %cst_122 : f32 to vector<8x128xf32>
    %297 = arith.addf %295, %296 : vector<8x128xf32>
    %298 = arith.mulf %287, %258 : vector<8x128xf32>
    %299 = arith.mulf %279, %289 : vector<8x128xf32>
    %300 = arith.addf %298, %299 : vector<8x128xf32>
    %301 = math.tanh %300 : vector<8x128xf32>
    %302 = arith.mulf %297, %301 : vector<8x128xf32>
    %303 = arith.index_cast %c6_i32 : i32 to index
    %c0_123 = arith.constant 0 : index
    %c0_124 = arith.constant 0 : index
    %304 = vector.load %arg8[%303, %c0_123, %c0_124] : memref<8x8x128xf32, #tpu.memory_space<vmem>>, vector<1x8x128xf32>
    %305 = vector.shape_cast %304 : vector<1x8x128xf32> to vector<8x128xf32>
    %306 = vector.shape_cast %302 : vector<8x128xf32> to vector<1x8x128xf32>
    tpu.vector_store %arg8[%303, %c0_123, %c0_124], %306 {strides = array<i32>} : memref<8x8x128xf32, #tpu.memory_space<vmem>>, vector<1x8x128xf32>,
    %c7_i32 = arith.constant 7 : i32
    %c8_i32_125 = arith.constant 8 : i32
    %307 = arith.muli %c7_i32, %c8_i32_125 : i32
    %308 = tpu.assume_multiple %307, 8 : i32
    %309 = arith.index_cast %308 : i32 to index
    %c0_126 = arith.constant 0 : index
    %310 = vector.load %arg10[%309, %c0_126] : memref<64x512xf32, #tpu.memory_space<vmem>>, vector<8x512xf32>
    %c0_127 = arith.constant 0 : index
    %c0_128 = arith.constant 0 : index
    %311 = vector.load %arg5[%c0_127, %c0_128] : memref<128x512xf32, #tpu.memory_space<vmem>>, vector<128x512xf32>
    %cst_129 = arith.constant dense<0.000000e+00> : vector<8x512xf32>
    %312 = tpu.matmul %302, %311, %cst_129 {dimension_numbers = #tpu.dot_dimension_numbers<[1], [0], [0], [1], [0, 0, 1, 1], [], []>} : vector<8x128xf32>, vector<128x512xf32>, vector<8x512xf32> -> vector<8x512xf32>
    %313 = arith.addf %310, %312 : vector<8x512xf32>
    %314 = vector.extract_strided_slice %313 {offsets = [0, 0], sizes = [8, 128], strides = [1, 1]} : vector<8x512xf32> to vector<8x128xf32>
    %cst_130 = arith.constant 5.000000e-01 : f32
    %315 = vector.broadcast %cst_130 : f32 to vector<8x128xf32>
    %316 = arith.mulf %315, %314 : vector<8x128xf32>
    %317 = math.tanh %316 : vector<8x128xf32>
    %cst_131 = arith.constant 5.000000e-01 : f32
    %318 = vector.broadcast %cst_131 : f32 to vector<8x128xf32>
    %319 = arith.mulf %318, %317 : vector<8x128xf32>
    %cst_132 = arith.constant 5.000000e-01 : f32
    %320 = vector.broadcast %cst_132 : f32 to vector<8x128xf32>
    %321 = arith.addf %319, %320 : vector<8x128xf32>
    %322 = vector.extract_strided_slice %313 {offsets = [0, 128], sizes = [8, 128], strides = [1, 1]} : vector<8x512xf32> to vector<8x128xf32>
    %cst_133 = arith.constant 5.000000e-01 : f32
    %323 = vector.broadcast %cst_133 : f32 to vector<8x128xf32>
    %324 = arith.mulf %323, %322 : vector<8x128xf32>
    %325 = math.tanh %324 : vector<8x128xf32>
    %cst_134 = arith.constant 5.000000e-01 : f32
    %326 = vector.broadcast %cst_134 : f32 to vector<8x128xf32>
    %327 = arith.mulf %326, %325 : vector<8x128xf32>
    %cst_135 = arith.constant 5.000000e-01 : f32
    %328 = vector.broadcast %cst_135 : f32 to vector<8x128xf32>
    %329 = arith.addf %327, %328 : vector<8x128xf32>
    %330 = vector.extract_strided_slice %313 {offsets = [0, 256], sizes = [8, 128], strides = [1, 1]} : vector<8x512xf32> to vector<8x128xf32>
    %331 = math.tanh %330 : vector<8x128xf32>
    %332 = vector.extract_strided_slice %313 {offsets = [0, 384], sizes = [8, 128], strides = [1, 1]} : vector<8x512xf32> to vector<8x128xf32>
    %cst_136 = arith.constant 5.000000e-01 : f32
    %333 = vector.broadcast %cst_136 : f32 to vector<8x128xf32>
    %334 = arith.mulf %333, %332 : vector<8x128xf32>
    %335 = math.tanh %334 : vector<8x128xf32>
    %cst_137 = arith.constant 5.000000e-01 : f32
    %336 = vector.broadcast %cst_137 : f32 to vector<8x128xf32>
    %337 = arith.mulf %336, %335 : vector<8x128xf32>
    %cst_138 = arith.constant 5.000000e-01 : f32
    %338 = vector.broadcast %cst_138 : f32 to vector<8x128xf32>
    %339 = arith.addf %337, %338 : vector<8x128xf32>
    %340 = arith.mulf %329, %300 : vector<8x128xf32>
    %341 = arith.mulf %321, %331 : vector<8x128xf32>
    %342 = arith.addf %340, %341 : vector<8x128xf32>
    %343 = math.tanh %342 : vector<8x128xf32>
    %344 = arith.mulf %339, %343 : vector<8x128xf32>
    %345 = arith.index_cast %c7_i32 : i32 to index
    %c0_139 = arith.constant 0 : index
    %c0_140 = arith.constant 0 : index
    %346 = vector.load %arg8[%345, %c0_139, %c0_140] : memref<8x8x128xf32, #tpu.memory_space<vmem>>, vector<1x8x128xf32>
    %347 = vector.shape_cast %346 : vector<1x8x128xf32> to vector<8x128xf32>
    %348 = vector.shape_cast %344 : vector<8x128xf32> to vector<1x8x128xf32>
    tpu.vector_store %arg8[%345, %c0_139, %c0_140], %348 {strides = array<i32>} : memref<8x8x128xf32, #tpu.memory_space<vmem>>, vector<1x8x128xf32>,
    %c8_i32_141 = arith.constant 8 : i32
    %c0_142 = arith.constant 0 : index
    %c0_143 = arith.constant 0 : index
    %349 = vector.load %arg11[%c0_142, %c0_143] : memref<8x128xf32, #tpu.memory_space<vmem>>, vector<8x128xf32>
    tpu.vector_store %arg11[%c0_142, %c0_143], %344 {strides = array<i32>} : memref<8x128xf32, #tpu.memory_space<vmem>>, vector<8x128xf32>,
    %c0_144 = arith.constant 0 : index
    %c0_145 = arith.constant 0 : index
    %350 = vector.load %arg12[%c0_144, %c0_145] : memref<8x128xf32, #tpu.memory_space<vmem>>, vector<8x128xf32>
    tpu.vector_store %arg12[%c0_144, %c0_145], %342 {strides = array<i32>} : memref<8x128xf32, #tpu.memory_space<vmem>>, vector<8x128xf32>,
    %c0_i32_146 = arith.constant 0 : i32
    %351 = arith.cmpi eq, %arg1, %c0_i32_146 : i32
    %352 = arith.extui %351 : i1 to i32
    %c0_i32_147 = arith.constant 0 : i32
    %353 = arith.cmpi ne, %352, %c0_i32_147 : i32
    scf.if %353 {
      %c0_148 = arith.constant 0 : index
      %c0_149 = arith.constant 0 : index
      %354 = vector.load %arg9[%c0_148, %c0_149] : memref<8x128xf32, #tpu.memory_space<vmem>>, vector<8x128xf32>
      tpu.vector_store %arg9[%c0_148, %c0_149], %342 {strides = array<i32>} : memref<8x128xf32, #tpu.memory_space<vmem>>, vector<8x128xf32>,
    } else {
    }
    return
  }
  func.func @transform_0(%arg0: i32, %arg1: i32) -> (i32, i32, i32) {
    %c0_i32 = arith.constant 0 : i32
    %c0_i32_0 = arith.constant 0 : i32
    return %arg1, %arg0, %c0_i32 : i32, i32, i32
  }
  func.func @transform_1(%arg0: i32, %arg1: i32) -> (i32, i32) {
    %c0_i32 = arith.constant 0 : i32
    %c0_i32_0 = arith.constant 0 : i32
    %c0_i32_1 = arith.constant 0 : i32
    return %c0_i32, %c0_i32_0 : i32, i32
  }
  func.func @transform_2(%arg0: i32, %arg1: i32) -> (i32, i32) {
    %c0_i32 = arith.constant 0 : i32
    %c0_i32_0 = arith.constant 0 : i32
    %c0_i32_1 = arith.constant 0 : i32
    return %c0_i32, %c0_i32_0 : i32, i32
  }
  func.func @transform_3(%arg0: i32, %arg1: i32) -> (i32, i32) {
    %c0_i32 = arith.constant 0 : i32
    %c0_i32_0 = arith.constant 0 : i32
    %c0_i32_1 = arith.constant 0 : i32
    return %c0_i32, %c0_i32_0 : i32, i32
  }
  func.func @transform_4(%arg0: i32, %arg1: i32) -> (i32, i32) {
    %c0_i32 = arith.constant 0 : i32
    %c0_i32_0 = arith.constant 0 : i32
    return %arg0, %c0_i32 : i32, i32
  }
  func.func @transform_5(%arg0: i32, %arg1: i32) -> (i32, i32) {
    %c0_i32 = arith.constant 0 : i32
    %c0_i32_0 = arith.constant 0 : i32
    return %arg0, %c0_i32 : i32, i32
  }
  func.func @transform_6(%arg0: i32, %arg1: i32) -> (i32, i32, i32) {
    %c0_i32 = arith.constant 0 : i32
    %c0_i32_0 = arith.constant 0 : i32
    return %arg1, %arg0, %c0_i32 : i32, i32, i32
  }
  func.func @transform_7(%arg0: i32, %arg1: i32) -> (i32, i32) {
    %c0_i32 = arith.constant 0 : i32
    %c0_i32_0 = arith.constant 0 : i32
    return %arg0, %c0_i32 : i32, i32
  }
}

</mosaic_0001>

<llo_original>
// kernel: cudnn_lstm_forward.1
$region0: #{cudnn_lstm_forward.1}
  #allocation0 [shape = 'u32[]', space=smem, size = 0x4, offset = 0x4, fixed_abs, tag = 'smem constant byte address 0x4 - core index']
  #allocation1 [shape = 'u32[144,128]{1,0:T(1,128)}', space=vmem, size = 0x12000, scoped, tag = 'internal scratch']
  #allocation2 [shape = 'f32[64,512]{1,0:T(8,128)}', space=vmem, size = 0x20000, scoped, tag = 'scratch operand']
  #allocation3 [shape = 'f32[8,128]{1,0:T(8,128)}', space=vmem, size = 0x1000, scoped, tag = 'scratch operand']
  #allocation4 [shape = 'f32[8,128]{1,0:T(8,128)}', space=vmem, size = 0x1000, scoped, tag = 'scratch operand']
  %s0 = inlined_call_operand.vmem [shape: f32[8,8,16], index: 0, kind: input, shape index: {}]
  %s1 = inlined_call_operand.vmem [shape: f32[16,512], index: 1, kind: input, shape index: {}]
  %s2 = inlined_call_operand.vmem [shape: f32[1,512], index: 2, kind: input, shape index: {}]
  %s3 = inlined_call_operand.vmem [shape: f32[128,512], index: 3, kind: input, shape index: {}]
  %s4 = inlined_call_operand.vmem [shape: f32[8,128], index: 4, kind: input, shape index: {}, may-alias: {4,5}]
  %s5 = inlined_call_operand.vmem [shape: f32[8,128], index: 5, kind: input, shape index: {}, may-alias: {4,5}]
  %s6 = inlined_call_operand.vmem [shape: f32[8,8,128], index: 6, kind: output, shape index: {0}]
  %s7 = inlined_call_operand.vmem [shape: f32[8,128], index: 7, kind: output, shape index: {1}]
  %8 = xla_tuple %s6, %s7
  %s9 = sld [smem:[#allocation0]]
  $region50: #{cudnn_lstm_forward.1} parent=0
    _
  %s11 = ssub.s32 1, %s9
  %s12 = scalar_select 0, %s11, %s9
  // Predicated region
  $region2: #{cudnn_lstm_forward.1} parent=0 // pred_check
    _
  $region3: #{cudnn_lstm_forward.1} parent=0 // pred_check_branch
    %14 = sbr.rel (0) target = $region5
  $region4: #{cudnn_lstm_forward.1} parent=0 // pred_region
    _
  $region5: #{cudnn_lstm_forward.1} parent=0 // pred_fallthru
    _
  // Predicated region
  $region6: #{cudnn_lstm_forward.1} parent=0 // pred_check
    _
  $region7: #{cudnn_lstm_forward.1} parent=0 // pred_check_branch
    %16 = sbr.rel (0) target = $region9
  $region8: #{cudnn_lstm_forward.1} parent=0 // pred_region
    _
  $region9: #{cudnn_lstm_forward.1} parent=0 // pred_fallthru
    _
  // Predicated region
  $region10: #{cudnn_lstm_forward.1} parent=0 // pred_check
    _
  $region11: #{cudnn_lstm_forward.1} parent=0 // pred_check_branch
    %18 = sbr.rel (0) target = $region13
  $region12: #{cudnn_lstm_forward.1} parent=0 // pred_region
    _
  $region13: #{cudnn_lstm_forward.1} parent=0 // pred_fallthru
    _
  // Predicated region
  $region14: #{cudnn_lstm_forward.1} parent=0 // pred_check
    _
  $region15: #{cudnn_lstm_forward.1} parent=0 // pred_check_branch
    %20 = sbr.rel (0) target = $region17
  $region16: #{cudnn_lstm_forward.1} parent=0 // pred_region
    _
  $region17: #{cudnn_lstm_forward.1} parent=0 // pred_fallthru
    _
  // Predicated region
  $region18: #{cudnn_lstm_forward.1} parent=0 // pred_check
    _
  $region19: #{cudnn_lstm_forward.1} parent=0 // pred_check_branch
    %22 = sbr.rel (0) target = $region21
  $region20: #{cudnn_lstm_forward.1} parent=0 // pred_region
    _
  $region21: #{cudnn_lstm_forward.1} parent=0 // pred_fallthru
    _
  // Predicated region
  $region22: #{cudnn_lstm_forward.1} parent=0 // pred_check
    _
  $region23: #{cudnn_lstm_forward.1} parent=0 // pred_check_branch
    %24 = sbr.rel (0) target = $region25
  $region24: #{cudnn_lstm_forward.1} parent=0 // pred_region
    _
  $region25: #{cudnn_lstm_forward.1} parent=0 // pred_fallthru
    _
  %p25 = scmp.eq.s32.totalorder 0, 0
  // Predicated region
  $region26: #{cudnn_lstm_forward.1} parent=0 // pred_check
    %p26 = pneg %p25
  $region27: #{cudnn_lstm_forward.1} parent=0 // pred_check_branch
    %28 = sbr.rel (%p26) target = $region29
  $region28: #{cudnn_lstm_forward.1} parent=0 // pred_region
    %v29 = vld [vmem:[%s4] sm:$0xff]
    %30 = vst [vmem:[#allocation3] sm:$0xff] %v29
    %v31 = vld [vmem:[%s5] sm:$0xff]
    %32 = vst [vmem:[#allocation4] sm:$0xff] %v31
  $region29: #{cudnn_lstm_forward.1} parent=0 // pred_fallthru
    _
  %v33 = vld [vmem:[%s0] sm:$0xff]
  %v34 = vld [vmem:[%s0 + $0x8] sm:$0xff]
  %v35 = vld [vmem:[%s0 + $0x10] sm:$0xff]
  %v36 = vld [vmem:[%s0 + $0x18] sm:$0xff]
  %v37 = vld [vmem:[%s0 + $0x20] sm:$0xff]
  %v38 = vld [vmem:[%s0 + $0x28] sm:$0xff]
  %v39 = vld [vmem:[%s0 + $0x30] sm:$0xff]
  %v40 = vld [vmem:[%s0 + $0x38] sm:$0xff]
  %v41 = vld [vmem:[%s1] sm:$0xff]
  %v42 = vld [vmem:[%s1 + $0x8] sm:$0xff]
  %v43 = vld [vmem:[%s1 + $0x10] sm:$0xff]
  %v44 = vld [vmem:[%s1 + $0x18] sm:$0xff]
  %v45 = vld [vmem:[%s1 + $0x20] sm:$0xff]
  %v46 = vld [vmem:[%s1 + $0x28] sm:$0xff]
  %v47 = vld [vmem:[%s1 + $0x30] sm:$0xff]
  %v48 = vld [vmem:[%s1 + $0x38] sm:$0xff]
  %v49 = vld [vmem:[%s2] sm:$0xf]
  %v51 = vlaneseq
  %v52 = vshrl.u32 %v51, 7
  %v53 = vsub.s32 0, %v52
  %v54 = vrot.slane %v49, %v53
  %v55 = vlaneseq
  %v56 = vshrl.u32 %v55, 7
  %v57 = vsub.s32 1, %v56
  %v58 = vrot.slane %v49, %v57
  %v59 = vlaneseq
  %v60 = vshrl.u32 %v59, 7
  %v61 = vsub.s32 2, %v60
  %v62 = vrot.slane %v49, %v61
  %v63 = vlaneseq
  %v64 = vshrl.u32 %v63, 7
  %v65 = vsub.s32 3, %v64
  %v66 = vrot.slane %v49, %v65
  %vm71 = vcmask 130048
  %v73 = vsel %vm71, %v33, 0
  %v76 = vsel %vm71, %v34, 0
  %v79 = vsel %vm71, %v35, 0
  %v82 = vsel %vm71, %v36, 0
  %v85 = vsel %vm71, %v37, 0
  %v88 = vsel %vm71, %v38, 0
  %v91 = vsel %vm71, %v39, 0
  %v94 = vsel %vm71, %v40, 0
  %96 = vmatprep.subr.mxu0 0.0
  %97 = vmatpush1.msra.mxu0 0.0
  %98 = vmatprep.subr.mxu0 0.0
  %99 = vmatpush1.msra.mxu0 0.0
  %100 = vmatprep.subr.mxu0 0.0
  %101 = vmatpush1.msra.mxu0 0.0
  %102 = vmatprep.subr.mxu0 0.0
  %103 = vmatpush1.msra.mxu0 0.0
  %104 = vmatprep.subr.mxu0 0.0
  %105 = vmatpush1.msra.mxu0 0.0
  %106 = vmatprep.subr.mxu0 0.0
  %107 = vmatpush1.msra.mxu0 0.0
  %108 = vmatprep.subr.mxu0 0.0
  %109 = vmatpush1.msra.mxu0 0.0
  %110 = vmatprep.subr.mxu0 0.0
  %111 = vmatpush1.msra.mxu0 0.0
  %112 = vmatprep.subr.mxu0 0.0
  %113 = vmatpush1.msra.mxu0 0.0
  %114 = vmatprep.subr.mxu0 0.0
  %115 = vmatpush1.msra.mxu0 0.0
  %116 = vmatprep.subr.mxu0 0.0
  %117 = vmatpush1.msra.mxu0 0.0
  %118 = vmatprep.subr.mxu0 0.0
  %119 = vmatpush1.msra.mxu0 0.0
  %120 = vmatprep.subr.mxu0 0.0
  %121 = vmatpush1.msra.mxu0 0.0
  %122 = vmatprep.subr.mxu0 0.0
  %123 = vmatpush1.msra.mxu0 0.0
  %124 = vmatprep.subr.mxu0 %v46
  %125 = vmatpush1.msra.mxu0 %v45
  %126 = vmatprep.subr.mxu0 %v42
  %127 = vmatpush1.msra.mxu0 %v41
  %128 = vmatprep.subr.mxu0 0.0
  %129 = vmatpush2.msra.mxu0 0.0
  %130 = vmatprep.subr.mxu0 0.0
  %131 = vmatpush2.msra.mxu0 0.0
  %132 = vmatprep.subr.mxu0 0.0
  %133 = vmatpush2.msra.mxu0 0.0
  %134 = vmatprep.subr.mxu0 0.0
  %135 = vmatpush2.msra.mxu0 0.0
  %136 = vmatprep.subr.mxu0 0.0
  %137 = vmatpush2.msra.mxu0 0.0
  %138 = vmatprep.subr.mxu0 0.0
  %139 = vmatpush2.msra.mxu0 0.0
  %140 = vmatprep.subr.mxu0 0.0
  %141 = vmatpush2.msra.mxu0 0.0
  %142 = vmatprep.subr.mxu0 0.0
  %143 = vmatpush2.msra.mxu0 0.0
  %144 = vmatprep.subr.mxu0 0.0
  %145 = vmatpush2.msra.mxu0 0.0
  %146 = vmatprep.subr.mxu0 0.0
  %147 = vmatpush2.msra.mxu0 0.0
  %148 = vmatprep.subr.mxu0 0.0
  %149 = vmatpush2.msra.mxu0 0.0
  %150 = vmatprep.subr.mxu0 0.0
  %151 = vmatpush2.msra.mxu0 0.0
  %152 = vmatprep.subr.mxu0 0.0
  %153 = vmatpush2.msra.mxu0 0.0
  %154 = vmatprep.subr.mxu0 0.0
  %155 = vmatpush2.msra.mxu0 0.0
  %156 = vmatprep.subr.mxu0 0.0
  %157 = vmatpush2.msra.mxu0 0.0
  %158 = vmatprep.subr.mxu0 0.0
  %159 = vmatpush2.msra.mxu0 0.0
  %160 = vmatprep.mubr.f32.mxu0 0.0
  %161 = vmatmul.mubr.f32.gmra.mxu0 %v73
  %v162 = vpop.f32.mrf.mxu0
  %v163 = vadd.f32 %v54, %v162
  %v164 = vpop.f32.mrf.mxu0
  %v165 = vadd.f32 %v58, %v164
  %166 = vmatprep.mubr.f32.mxu0 0.0
  %167 = vmatmul.mubr.f32.gmra.mxu0 %v76
  %v168 = vpop.f32.mrf.mxu0
  %v169 = vadd.f32 %v54, %v168
  %v170 = vpop.f32.mrf.mxu0
  %v171 = vadd.f32 %v58, %v170
  %172 = vmatprep.mubr.f32.mxu0 0.0
  %173 = vmatmul.mubr.f32.gmra.mxu0 %v79
  %v174 = vpop.f32.mrf.mxu0
  %v175 = vadd.f32 %v54, %v174
  %v176 = vpop.f32.mrf.mxu0
  %v177 = vadd.f32 %v58, %v176
  %178 = vmatprep.mubr.f32.mxu0 0.0
  %179 = vmatmul.mubr.f32.gmra.mxu0 %v82
  %v180 = vpop.f32.mrf.mxu0
  %v181 = vadd.f32 %v54, %v180
  %v182 = vpop.f32.mrf.mxu0
  %v183 = vadd.f32 %v58, %v182
  %184 = vmatprep.mubr.f32.mxu0 0.0
  %185 = vmatmul.mubr.f32.gmra.mxu0 %v85
  %v186 = vpop.f32.mrf.mxu0
  %v187 = vadd.f32 %v54, %v186
  %v188 = vpop.f32.mrf.mxu0
  %v189 = vadd.f32 %v58, %v188
  %190 = vmatprep.mubr.f32.mxu0 0.0
  %191 = vmatmul.mubr.f32.gmra.mxu0 %v88
  %v192 = vpop.f32.mrf.mxu0
  %v193 = vadd.f32 %v54, %v192
  %v194 = vpop.f32.mrf.mxu0
  %v195 = vadd.f32 %v58, %v194
  %196 = vmatprep.mubr.f32.mxu0 0.0
  %197 = vmatmul.mubr.f32.gmra.mxu0 %v91
  %v198 = vpop.f32.mrf.mxu0
  %v199 = vadd.f32 %v54, %v198
  %v200 = vpop.f32.mrf.mxu0
  %v201 = vadd.f32 %v58, %v200
  %202 = vmatprep.mubr.f32.mxu0 0.0
  %203 = vmatmul.mubr.f32.gmra.mxu0 %v94
  %v204 = vpop.f32.mrf.mxu0
  %v205 = vadd.f32 %v54, %v204
  %v206 = vpop.f32.mrf.mxu0
  %v207 = vadd.f32 %v58, %v206
  %208 = vdwg.mxu0
  %209 = vmatprep.subr.mxu0 0.0
  %210 = vmatpush1.msra.mxu0 0.0
  %211 = vmatprep.subr.mxu0 0.0
  %212 = vmatpush1.msra.mxu0 0.0
  %213 = vmatprep.subr.mxu0 0.0
  %214 = vmatpush1.msra.mxu0 0.0
  %215 = vmatprep.subr.mxu0 0.0
  %216 = vmatpush1.msra.mxu0 0.0
  %217 = vmatprep.subr.mxu0 0.0
  %218 = vmatpush1.msra.mxu0 0.0
  %219 = vmatprep.subr.mxu0 0.0
  %220 = vmatpush1.msra.mxu0 0.0
  %221 = vmatprep.subr.mxu0 0.0
  %222 = vmatpush1.msra.mxu0 0.0
  %223 = vmatprep.subr.mxu0 0.0
  %224 = vmatpush1.msra.mxu0 0.0
  %225 = vmatprep.subr.mxu0 0.0
  %226 = vmatpush1.msra.mxu0 0.0
  %227 = vmatprep.subr.mxu0 0.0
  %228 = vmatpush1.msra.mxu0 0.0
  %229 = vmatprep.subr.mxu0 0.0
  %230 = vmatpush1.msra.mxu0 0.0
  %231 = vmatprep.subr.mxu0 0.0
  %232 = vmatpush1.msra.mxu0 0.0
  %233 = vmatprep.subr.mxu0 0.0
  %234 = vmatpush1.msra.mxu0 0.0
  %235 = vmatprep.subr.mxu0 0.0
  %236 = vmatpush1.msra.mxu0 0.0
  %237 = vmatprep.subr.mxu0 %v48
  %238 = vmatpush1.msra.mxu0 %v47
  %239 = vmatprep.subr.mxu0 %v44
  %240 = vmatpush1.msra.mxu0 %v43
  %241 = vmatprep.subr.mxu0 0.0
  %242 = vmatpush2.msra.mxu0 0.0
  %243 = vmatprep.subr.mxu0 0.0
  %244 = vmatpush2.msra.mxu0 0.0
  %245 = vmatprep.subr.mxu0 0.0
  %246 = vmatpush2.msra.mxu0 0.0
  %247 = vmatprep.subr.mxu0 0.0
  %248 = vmatpush2.msra.mxu0 0.0
  %249 = vmatprep.subr.mxu0 0.0
  %250 = vmatpush2.msra.mxu0 0.0
  %251 = vmatprep.subr.mxu0 0.0
  %252 = vmatpush2.msra.mxu0 0.0
  %253 = vmatprep.subr.mxu0 0.0
  %254 = vmatpush2.msra.mxu0 0.0
  %255 = vmatprep.subr.mxu0 0.0
  %256 = vmatpush2.msra.mxu0 0.0
  %257 = vmatprep.subr.mxu0 0.0
  %258 = vmatpush2.msra.mxu0 0.0
  %259 = vmatprep.subr.mxu0 0.0
  %260 = vmatpush2.msra.mxu0 0.0
  %261 = vmatprep.subr.mxu0 0.0
  %262 = vmatpush2.msra.mxu0 0.0
  %263 = vmatprep.subr.mxu0 0.0
  %264 = vmatpush2.msra.mxu0 0.0
  %265 = vmatprep.subr.mxu0 0.0
  %266 = vmatpush2.msra.mxu0 0.0
  %267 = vmatprep.subr.mxu0 0.0
  %268 = vmatpush2.msra.mxu0 0.0
  %269 = vmatprep.subr.mxu0 0.0
  %270 = vmatpush2.msra.mxu0 0.0
  %271 = vmatprep.subr.mxu0 0.0
  %272 = vmatpush2.msra.mxu0 0.0
  %273 = vmatprep.mubr.f32.mxu0 0.0
  %274 = vmatmul.mubr.f32.gmra.mxu0 %v73
  %v275 = vpop.f32.mrf.mxu0
  %v276 = vadd.f32 %v62, %v275
  %v277 = vpop.f32.mrf.mxu0
  %v278 = vadd.f32 %v66, %v277
  %279 = vmatprep.mubr.f32.mxu0 0.0
  %280 = vmatmul.mubr.f32.gmra.mxu0 %v76
  %v281 = vpop.f32.mrf.mxu0
  %v282 = vadd.f32 %v62, %v281
  %v283 = vpop.f32.mrf.mxu0
  %v284 = vadd.f32 %v66, %v283
  %285 = vmatprep.mubr.f32.mxu0 0.0
  %286 = vmatmul.mubr.f32.gmra.mxu0 %v79
  %v287 = vpop.f32.mrf.mxu0
  %v288 = vadd.f32 %v62, %v287
  %v289 = vpop.f32.mrf.mxu0
  %v290 = vadd.f32 %v66, %v289
  %291 = vmatprep.mubr.f32.mxu0 0.0
  %292 = vmatmul.mubr.f32.gmra.mxu0 %v82
  %v293 = vpop.f32.mrf.mxu0
  %v294 = vadd.f32 %v62, %v293
  %v295 = vpop.f32.mrf.mxu0
  %v296 = vadd.f32 %v66, %v295
  %297 = vmatprep.mubr.f32.mxu0 0.0
  %298 = vmatmul.mubr.f32.gmra.mxu0 %v85
  %v299 = vpop.f32.mrf.mxu0
  %v300 = vadd.f32 %v62, %v299
  %v301 = vpop.f32.mrf.mxu0
  %v302 = vadd.f32 %v66, %v301
  %303 = vmatprep.mubr.f32.mxu0 0.0
  %304 = vmatmul.mubr.f32.gmra.mxu0 %v88
  %v305 = vpop.f32.mrf.mxu0
  %v306 = vadd.f32 %v62, %v305
  %v307 = vpop.f32.mrf.mxu0
  %v308 = vadd.f32 %v66, %v307
  %309 = vmatprep.mubr.f32.mxu0 0.0
  %310 = vmatmul.mubr.f32.gmra.mxu0 %v91
  %v311 = vpop.f32.mrf.mxu0
  %v312 = vadd.f32 %v62, %v311
  %v313 = vpop.f32.mrf.mxu0
  %v314 = vadd.f32 %v66, %v313
  %315 = vmatprep.mubr.f32.mxu0 0.0
  %316 = vmatmul.mubr.f32.gmra.mxu0 %v94
  %v317 = vpop.f32.mrf.mxu0
  %v318 = vadd.f32 %v62, %v317
  %v319 = vpop.f32.mrf.mxu0
  %v320 = vadd.f32 %v66, %v319
  %321 = vdwg.mxu0
  %322 = vst [vmem:[#allocation2] sm:$0xff] %v163
  %323 = vst [vmem:[#allocation2 + $0x8] sm:$0xff] %v165
  %324 = vst [vmem:[#allocation2 + $0x10] sm:$0xff] %v276
  %325 = vst [vmem:[#allocation2 + $0x18] sm:$0xff] %v278
  %326 = vst [vmem:[#allocation2 + $0x20] sm:$0xff] %v169
  %327 = vst [vmem:[#allocation2 + $0x28] sm:$0xff] %v171
  %328 = vst [vmem:[#allocation2 + $0x30] sm:$0xff] %v282
  %329 = vst [vmem:[#allocation2 + $0x38] sm:$0xff] %v284
  %330 = vst [vmem:[#allocation2 + $0x40] sm:$0xff] %v175
  %331 = vst [vmem:[#allocation2 + $0x48] sm:$0xff] %v177
  %332 = vst [vmem:[#allocation2 + $0x50] sm:$0xff] %v288
  %333 = vst [vmem:[#allocation2 + $0x58] sm:$0xff] %v290
  %334 = vst [vmem:[#allocation2 + $0x60] sm:$0xff] %v181
  %335 = vst [vmem:[#allocation2 + $0x68] sm:$0xff] %v183
  %336 = vst [vmem:[#allocation2 + $0x70] sm:$0xff] %v294
  %337 = vst [vmem:[#allocation2 + $0x78] sm:$0xff] %v296
  %338 = vst [vmem:[#allocation2 + $0x80] sm:$0xff] %v187
  %339 = vst [vmem:[#allocation2 + $0x88] sm:$0xff] %v189
  %340 = vst [vmem:[#allocation2 + $0x90] sm:$0xff] %v300
  %341 = vst [vmem:[#allocation2 + $0x98] sm:$0xff] %v302
  %342 = vst [vmem:[#allocation2 + $0xa0] sm:$0xff] %v193
  %343 = vst [vmem:[#allocation2 + $0xa8] sm:$0xff] %v195
  %344 = vst [vmem:[#allocation2 + $0xb0] sm:$0xff] %v306
  %345 = vst [vmem:[#allocation2 + $0xb8] sm:$0xff] %v308
  %346 = vst [vmem:[#allocation2 + $0xc0] sm:$0xff] %v199
  %347 = vst [vmem:[#allocation2 + $0xc8] sm:$0xff] %v201
  %348 = vst [vmem:[#allocation2 + $0xd0] sm:$0xff] %v312
  %349 = vst [vmem:[#allocation2 + $0xd8] sm:$0xff] %v314
  %350 = vst [vmem:[#allocation2 + $0xe0] sm:$0xff] %v205
  %351 = vst [vmem:[#allocation2 + $0xe8] sm:$0xff] %v207
  %352 = vst [vmem:[#allocation2 + $0xf0] sm:$0xff] %v318
  %353 = vst [vmem:[#allocation2 + $0xf8] sm:$0xff] %v320
  %v354 = vld [vmem:[#allocation3] sm:$0xff]
  %v355 = vld [vmem:[#allocation4] sm:$0xff]
  %s356 = smul.u32 0, 4
  %s357 = smul.addr %s356, 8
  %s358 = scalar_lea.vmem [#allocation2], %s357
  %v359 = vld [vmem:[%s358] sm:$0xff]
  %v360 = vld [vmem:[%s358 + $0x8] sm:$0xff]
  %v361 = vld [vmem:[%s358 + $0x10] sm:$0xff]
  %v362 = vld [vmem:[%s358 + $0x18] sm:$0xff]
  %v363 = vld [vmem:[%s3] sm:$0xff]
  %v364 = vld [vmem:[%s3 + $0x8] sm:$0xff]
  %v365 = vld [vmem:[%s3 + $0x10] sm:$0xff]
  %v366 = vld [vmem:[%s3 + $0x18] sm:$0xff]
  %v367 = vld [vmem:[%s3 + $0x20] sm:$0xff]
  %v368 = vld [vmem:[%s3 + $0x28] sm:$0xff]
  %v369 = vld [vmem:[%s3 + $0x30] sm:$0xff]
  %v370 = vld [vmem:[%s3 + $0x38] sm:$0xff]
  %v371 = vld [vmem:[%s3 + $0x40] sm:$0xff]
  %v372 = vld [vmem:[%s3 + $0x48] sm:$0xff]
  %v373 = vld [vmem:[%s3 + $0x50] sm:$0xff]
  %v374 = vld [vmem:[%s3 + $0x58] sm:$0xff]
  %v375 = vld [vmem:[%s3 + $0x60] sm:$0xff]
  %v376 = vld [vmem:[%s3 + $0x68] sm:$0xff]
  %v377 = vld [vmem:[%s3 + $0x70] sm:$0xff]
  %v378 = vld [vmem:[%s3 + $0x78] sm:$0xff]
  %v379 = vld [vmem:[%s3 + $0x80] sm:$0xff]
  %v380 = vld [vmem:[%s3 + $0x88] sm:$0xff]
  %v381 = vld [vmem:[%s3 + $0x90] sm:$0xff]
  %v382 = vld [vmem:[%s3 + $0x98] sm:$0xff]
  %v383 = vld [vmem:[%s3 + $0xa0] sm:$0xff]
  %v384 = vld [vmem:[%s3 + $0xa8] sm:$0xff]
  %v385 = vld [vmem:[%s3 + $0xb0] sm:$0xff]
  %v386 = vld [vmem:[%s3 + $0xb8] sm:$0xff]
  %v387 = vld [vmem:[%s3 + $0xc0] sm:$0xff]
  %v388 = vld [vmem:[%s3 + $0xc8] sm:$0xff]
  %v389 = vld [vmem:[%s3 + $0xd0] sm:$0xff]
  %v390 = vld [vmem:[%s3 + $0xd8] sm:$0xff]
  %v391 = vld [vmem:[%s3 + $0xe0] sm:$0xff]
  %v392 = vld [vmem:[%s3 + $0xe8] sm:$0xff]
  %v393 = vld [vmem:[%s3 + $0xf0] sm:$0xff]
  %v394 = vld [vmem:[%s3 + $0xf8] sm:$0xff]
  %v395 = vld [vmem:[%s3 + $0x100] sm:$0xff]
  %v396 = vld [vmem:[%s3 + $0x108] sm:$0xff]
  %v397 = vld [vmem:[%s3 + $0x110] sm:$0xff]
  %v398 = vld [vmem:[%s3 + $0x118] sm:$0xff]
  %v399 = vld [vmem:[%s3 + $0x120] sm:$0xff]
  %v400 = vld [vmem:[%s3 + $0x128] sm:$0xff]
  %v401 = vld [vmem:[%s3 + $0x130] sm:$0xff]
  %v402 = vld [vmem:[%s3 + $0x138] sm:$0xff]
  %v403 = vld [vmem:[%s3 + $0x140] sm:$0xff]
  %v404 = vld [vmem:[%s3 + $0x148] sm:$0xff]
  %v405 = vld [vmem:[%s3 + $0x150] sm:$0xff]
  %v406 = vld [vmem:[%s3 + $0x158] sm:$0xff]
  %v407 = vld [vmem:[%s3 + $0x160] sm:$0xff]
  %v408 = vld [vmem:[%s3 + $0x168] sm:$0xff]
  %v409 = vld [vmem:[%s3 + $0x170] sm:$0xff]
  %v410 = vld [vmem:[%s3 + $0x178] sm:$0xff]
  %v411 = vld [vmem:[%s3 + $0x180] sm:$0xff]
  %v412 = vld [vmem:[%s3 + $0x188] sm:$0xff]
  %v413 = vld [vmem:[%s3 + $0x190] sm:$0xff]
  %v414 = vld [vmem:[%s3 + $0x198] sm:$0xff]
  %v415 = vld [vmem:[%s3 + $0x1a0] sm:$0xff]
  %v416 = vld [vmem:[%s3 + $0x1a8] sm:$0xff]
  %v417 = vld [vmem:[%s3 + $0x1b0] sm:$0xff]
  %v418 = vld [vmem:[%s3 + $0x1b8] sm:$0xff]
  %v419 = vld [vmem:[%s3 + $0x1c0] sm:$0xff]
  %v420 = vld [vmem:[%s3 + $0x1c8] sm:$0xff]
  %v421 = vld [vmem:[%s3 + $0x1d0] sm:$0xff]
  %v422 = vld [vmem:[%s3 + $0x1d8] sm:$0xff]
  %v423 = vld [vmem:[%s3 + $0x1e0] sm:$0xff]
  %v424 = vld [vmem:[%s3 + $0x1e8] sm:$0xff]
  %v425 = vld [vmem:[%s3 + $0x1f0] sm:$0xff]
  %v426 = vld [vmem:[%s3 + $0x1f8] sm:$0xff]
  %427 = vmatprep.subr.mxu0 %v424
  %428 = vmatpush1.msra.mxu0 %v423
  %429 = vmatprep.subr.mxu0 %v420
  %430 = vmatpush1.msra.mxu0 %v419
  %431 = vmatprep.subr.mxu0 %v416
  %432 = vmatpush1.msra.mxu0 %v415
  %433 = vmatprep.subr.mxu0 %v412
  %434 = vmatpush1.msra.mxu0 %v411
  %435 = vmatprep.subr.mxu0 %v408
  %436 = vmatpush1.msra.mxu0 %v407
  %437 = vmatprep.subr.mxu0 %v404
  %438 = vmatpush1.msra.mxu0 %v403
  %439 = vmatprep.subr.mxu0 %v400
  %440 = vmatpush1.msra.mxu0 %v399
  %441 = vmatprep.subr.mxu0 %v396
  %442 = vmatpush1.msra.mxu0 %v395
  %443 = vmatprep.subr.mxu0 %v392
  %444 = vmatpush1.msra.mxu0 %v391
  %445 = vmatprep.subr.mxu0 %v388
  %446 = vmatpush1.msra.mxu0 %v387
  %447 = vmatprep.subr.mxu0 %v384
  %448 = vmatpush1.msra.mxu0 %v383
  %449 = vmatprep.subr.mxu0 %v380
  %450 = vmatpush1.msra.mxu0 %v379
  %451 = vmatprep.subr.mxu0 %v376
  %452 = vmatpush1.msra.mxu0 %v375
  %453 = vmatprep.subr.mxu0 %v372
  %454 = vmatpush1.msra.mxu0 %v371
  %455 = vmatprep.subr.mxu0 %v368
  %456 = vmatpush1.msra.mxu0 %v367
  %457 = vmatprep.subr.mxu0 %v364
  %458 = vmatpush1.msra.mxu0 %v363
  %459 = vmatprep.subr.mxu0 0.0
  %460 = vmatpush2.msra.mxu0 0.0
  %461 = vmatprep.subr.mxu0 0.0
  %462 = vmatpush2.msra.mxu0 0.0
  %463 = vmatprep.subr.mxu0 0.0
  %464 = vmatpush2.msra.mxu0 0.0
  %465 = vmatprep.subr.mxu0 0.0
  %466 = vmatpush2.msra.mxu0 0.0
  %467 = vmatprep.subr.mxu0 0.0
  %468 = vmatpush2.msra.mxu0 0.0
  %469 = vmatprep.subr.mxu0 0.0
  %470 = vmatpush2.msra.mxu0 0.0
  %471 = vmatprep.subr.mxu0 0.0
  %472 = vmatpush2.msra.mxu0 0.0
  %473 = vmatprep.subr.mxu0 0.0
  %474 = vmatpush2.msra.mxu0 0.0
  %475 = vmatprep.subr.mxu0 0.0
  %476 = vmatpush2.msra.mxu0 0.0
  %477 = vmatprep.subr.mxu0 0.0
  %478 = vmatpush2.msra.mxu0 0.0
  %479 = vmatprep.subr.mxu0 0.0
  %480 = vmatpush2.msra.mxu0 0.0
  %481 = vmatprep.subr.mxu0 0.0
  %482 = vmatpush2.msra.mxu0 0.0
  %483 = vmatprep.subr.mxu0 0.0
  %484 = vmatpush2.msra.mxu0 0.0
  %485 = vmatprep.subr.mxu0 0.0
  %486 = vmatpush2.msra.mxu0 0.0
  %487 = vmatprep.subr.mxu0 0.0
  %488 = vmatpush2.msra.mxu0 0.0
  %489 = vmatprep.subr.mxu0 0.0
  %490 = vmatpush2.msra.mxu0 0.0
  %491 = vmatprep.mubr.f32.mxu0 0.0
  %492 = vmatmul.mubr.f32.gmra.mxu0 %v354
  %v493 = vpop.f32.mrf.mxu0
  %v494 = vadd.f32 0.0, %v493
  %v495 = vpop.f32.mrf.mxu0
  %v496 = vadd.f32 0.0, %v495
  %497 = vdwg.mxu0
  %498 = vmatprep.subr.mxu0 %v426
  %499 = vmatpush1.msra.mxu0 %v425
  %500 = vmatprep.subr.mxu0 %v422
  %501 = vmatpush1.msra.mxu0 %v421
  %502 = vmatprep.subr.mxu0 %v418
  %503 = vmatpush1.msra.mxu0 %v417
  %504 = vmatprep.subr.mxu0 %v414
  %505 = vmatpush1.msra.mxu0 %v413
  %506 = vmatprep.subr.mxu0 %v410
  %507 = vmatpush1.msra.mxu0 %v409
  %508 = vmatprep.subr.mxu0 %v406
  %509 = vmatpush1.msra.mxu0 %v405
  %510 = vmatprep.subr.mxu0 %v402
  %511 = vmatpush1.msra.mxu0 %v401
  %512 = vmatprep.subr.mxu0 %v398
  %513 = vmatpush1.msra.mxu0 %v397
  %514 = vmatprep.subr.mxu0 %v394
  %515 = vmatpush1.msra.mxu0 %v393
  %516 = vmatprep.subr.mxu0 %v390
  %517 = vmatpush1.msra.mxu0 %v389
  %518 = vmatprep.subr.mxu0 %v386
  %519 = vmatpush1.msra.mxu0 %v385
  %520 = vmatprep.subr.mxu0 %v382
  %521 = vmatpush1.msra.mxu0 %v381
  %522 = vmatprep.subr.mxu0 %v378
  %523 = vmatpush1.msra.mxu0 %v377
  %524 = vmatprep.subr.mxu0 %v374
  %525 = vmatpush1.msra.mxu0 %v373
  %526 = vmatprep.subr.mxu0 %v370
  %527 = vmatpush1.msra.mxu0 %v369
  %528 = vmatprep.subr.mxu0 %v366
  %529 = vmatpush1.msra.mxu0 %v365
  %530 = vmatprep.subr.mxu0 0.0
  %531 = vmatpush2.msra.mxu0 0.0
  %532 = vmatprep.subr.mxu0 0.0
  %533 = vmatpush2.msra.mxu0 0.0
  %534 = vmatprep.subr.mxu0 0.0
  %535 = vmatpush2.msra.mxu0 0.0
  %536 = vmatprep.subr.mxu0 0.0
  %537 = vmatpush2.msra.mxu0 0.0
  %538 = vmatprep.subr.mxu0 0.0
  %539 = vmatpush2.msra.mxu0 0.0
  %540 = vmatprep.subr.mxu0 0.0
  %541 = vmatpush2.msra.mxu0 0.0
  %542 = vmatprep.subr.mxu0 0.0
  %543 = vmatpush2.msra.mxu0 0.0
  %544 = vmatprep.subr.mxu0 0.0
  %545 = vmatpush2.msra.mxu0 0.0
  %546 = vmatprep.subr.mxu0 0.0
  %547 = vmatpush2.msra.mxu0 0.0
  %548 = vmatprep.subr.mxu0 0.0
  %549 = vmatpush2.msra.mxu0 0.0
  %550 = vmatprep.subr.mxu0 0.0
  %551 = vmatpush2.msra.mxu0 0.0
  %552 = vmatprep.subr.mxu0 0.0
  %553 = vmatpush2.msra.mxu0 0.0
  %554 = vmatprep.subr.mxu0 0.0
  %555 = vmatpush2.msra.mxu0 0.0
  %556 = vmatprep.subr.mxu0 0.0
  %557 = vmatpush2.msra.mxu0 0.0
  %558 = vmatprep.subr.mxu0 0.0
  %559 = vmatpush2.msra.mxu0 0.0
  %560 = vmatprep.subr.mxu0 0.0
  %561 = vmatpush2.msra.mxu0 0.0
  %562 = vmatprep.mubr.f32.mxu0 0.0
  %563 = vmatmul.mubr.f32.gmra.mxu0 %v354
  %v564 = vpop.f32.mrf.mxu0
  %v565 = vadd.f32 0.0, %v564
  %v566 = vpop.f32.mrf.mxu0
  %v567 = vadd.f32 0.0, %v566
  %568 = vdwg.mxu0
  %v569 = vadd.f32 %v359, %v494
  %v570 = vadd.f32 %v360, %v496
  %v571 = vadd.f32 %v361, %v565
  %v572 = vadd.f32 %v362, %v567
  %v573 = vmul.f32 %v569, 0.5
  %v574 = vtanh.pop %v573
  %v575 = vmul.f32 %v574, 0.5
  %v576 = vadd.f32 %v575, 0.5
  %v577 = vmul.f32 %v570, 0.5
  %v578 = vtanh.pop %v577
  %v579 = vmul.f32 %v578, 0.5
  %v580 = vadd.f32 %v579, 0.5
  %v581 = vtanh.pop %v571
  %v582 = vmul.f32 %v572, 0.5
  %v583 = vtanh.pop %v582
  %v584 = vmul.f32 %v583, 0.5
  %v585 = vadd.f32 %v584, 0.5
  %v586 = vmul.f32 %v580, %v355
  %v587 = vmul.f32 %v576, %v581
  %v588 = vadd.f32 %v586, %v587
  %v589 = vtanh.pop %v588
  %v590 = vmul.f32 %v585, %v589
  %591 = vst [vmem:[%s6] sm:$0xff] %v590
  %s592 = smul.u32 1, 4
  %s593 = smul.addr %s592, 8
  %s594 = scalar_lea.vmem [#allocation2], %s593
  %v595 = vld [vmem:[%s594] sm:$0xff]
  %v596 = vld [vmem:[%s594 + $0x8] sm:$0xff]
  %v597 = vld [vmem:[%s594 + $0x10] sm:$0xff]
  %v598 = vld [vmem:[%s594 + $0x18] sm:$0xff]
  %v599 = vld [vmem:[%s3] sm:$0xff]
  %v600 = vld [vmem:[%s3 + $0x8] sm:$0xff]
  %v601 = vld [vmem:[%s3 + $0x10] sm:$0xff]
  %v602 = vld [vmem:[%s3 + $0x18] sm:$0xff]
  %v603 = vld [vmem:[%s3 + $0x20] sm:$0xff]
  %v604 = vld [vmem:[%s3 + $0x28] sm:$0xff]
  %v605 = vld [vmem:[%s3 + $0x30] sm:$0xff]
  %v606 = vld [vmem:[%s3 + $0x38] sm:$0xff]
  %v607 = vld [vmem:[%s3 + $0x40] sm:$0xff]
  %v608 = vld [vmem:[%s3 + $0x48] sm:$0xff]
  %v609 = vld [vmem:[%s3 + $0x50] sm:$0xff]
  %v610 = vld [vmem:[%s3 + $0x58] sm:$0xff]
  %v611 = vld [vmem:[%s3 + $0x60] sm:$0xff]
  %v612 = vld [vmem:[%s3 + $0x68] sm:$0xff]
  %v613 = vld [vmem:[%s3 + $0x70] sm:$0xff]
  %v614 = vld [vmem:[%s3 + $0x78] sm:$0xff]
  %v615 = vld [vmem:[%s3 + $0x80] sm:$0xff]
  %v616 = vld [vmem:[%s3 + $0x88] sm:$0xff]
  %v617 = vld [vmem:[%s3 + $0x90] sm:$0xff]
  %v618 = vld [vmem:[%s3 + $0x98] sm:$0xff]
  %v619 = vld [vmem:[%s3 + $0xa0] sm:$0xff]
  %v620 = vld [vmem:[%s3 + $0xa8] sm:$0xff]
  %v621 = vld [vmem:[%s3 + $0xb0] sm:$0xff]
  %v622 = vld [vmem:[%s3 + $0xb8] sm:$0xff]
  %v623 = vld [vmem:[%s3 + $0xc0] sm:$0xff]
  %v624 = vld [vmem:[%s3 + $0xc8] sm:$0xff]
  %v625 = vld [vmem:[%s3 + $0xd0] sm:$0xff]
  %v626 = vld [vmem:[%s3 + $0xd8] sm:$0xff]
  %v627 = vld [vmem:[%s3 + $0xe0] sm:$0xff]
  %v628 = vld [vmem:[%s3 + $0xe8] sm:$0xff]
  %v629 = vld [vmem:[%s3 + $0xf0] sm:$0xff]
  %v630 = vld [vmem:[%s3 + $0xf8] sm:$0xff]
  %v631 = vld [vmem:[%s3 + $0x100] sm:$0xff]
  %v632 = vld [vmem:[%s3 + $0x108] sm:$0xff]
  %v633 = vld [vmem:[%s3 + $0x110] sm:$0xff]
  %v634 = vld [vmem:[%s3 + $0x118] sm:$0xff]
  %v635 = vld [vmem:[%s3 + $0x120] sm:$0xff]
  %v636 = vld [vmem:[%s3 + $0x128] sm:$0xff]
  %v637 = vld [vmem:[%s3 + $0x130] sm:$0xff]
  %v638 = vld [vmem:[%s3 + $0x138] sm:$0xff]
  %v639 = vld [vmem:[%s3 + $0x140] sm:$0xff]
  %v640 = vld [vmem:[%s3 + $0x148] sm:$0xff]
  %v641 = vld [vmem:[%s3 + $0x150] sm:$0xff]
  %v642 = vld [vmem:[%s3 + $0x158] sm:$0xff]
  %v643 = vld [vmem:[%s3 + $0x160] sm:$0xff]
  %v644 = vld [vmem:[%s3 + $0x168] sm:$0xff]
  %v645 = vld [vmem:[%s3 + $0x170] sm:$0xff]
  %v646 = vld [vmem:[%s3 + $0x178] sm:$0xff]
  %v647 = vld [vmem:[%s3 + $0x180] sm:$0xff]
  %v648 = vld [vmem:[%s3 + $0x188] sm:$0xff]
  %v649 = vld [vmem:[%s3 + $0x190] sm:$0xff]
  %v650 = vld [vmem:[%s3 + $0x198] sm:$0xff]
  %v651 = vld [vmem:[%s3 + $0x1a0] sm:$0xff]
  %v652 = vld [vmem:[%s3 + $0x1a8] sm:$0xff]
  %v653 = vld [vmem:[%s3 + $0x1b0] sm:$0xff]
  %v654 = vld [vmem:[%s3 + $0x1b8] sm:$0xff]
  %v655 = vld [vmem:[%s3 + $0x1c0] sm:$0xff]
  %v656 = vld [vmem:[%s3 + $0x1c8] sm:$0xff]
  %v657 = vld [vmem:[%s3 + $0x1d0] sm:$0xff]
  %v658 = vld [vmem:[%s3 + $0x1d8] sm:$0xff]
  %v659 = vld [vmem:[%s3 + $0x1e0] sm:$0xff]
  %v660 = vld [vmem:[%s3 + $0x1e8] sm:$0xff]
  %v661 = vld [vmem:[%s3 + $0x1f0] sm:$0xff]
  %v662 = vld [vmem:[%s3 + $0x1f8] sm:$0xff]
  %663 = vmatprep.subr.mxu0 %v660
  %664 = vmatpush1.msra.mxu0 %v659
  %665 = vmatprep.subr.mxu0 %v656
  %666 = vmatpush1.msra.mxu0 %v655
  %667 = vmatprep.subr.mxu0 %v652
  %668 = vmatpush1.msra.mxu0 %v651
  %669 = vmatprep.subr.mxu0 %v648
  %670 = vmatpush1.msra.mxu0 %v647
  %671 = vmatprep.subr.mxu0 %v644
  %672 = vmatpush1.msra.mxu0 %v643
  %673 = vmatprep.subr.mxu0 %v640
  %674 = vmatpush1.msra.mxu0 %v639
  %675 = vmatprep.subr.mxu0 %v636
  %676 = vmatpush1.msra.mxu0 %v635
  %677 = vmatprep.subr.mxu0 %v632
  %678 = vmatpush1.msra.mxu0 %v631
  %679 = vmatprep.subr.mxu0 %v628
  %680 = vmatpush1.msra.mxu0 %v627
  %681 = vmatprep.subr.mxu0 %v624
  %682 = vmatpush1.msra.mxu0 %v623
  %683 = vmatprep.subr.mxu0 %v620
  %684 = vmatpush1.msra.mxu0 %v619
  %685 = vmatprep.subr.mxu0 %v616
  %686 = vmatpush1.msra.mxu0 %v615
  %687 = vmatprep.subr.mxu0 %v612
  %688 = vmatpush1.msra.mxu0 %v611
  %689 = vmatprep.subr.mxu0 %v608
  %690 = vmatpush1.msra.mxu0 %v607
  %691 = vmatprep.subr.mxu0 %v604
  %692 = vmatpush1.msra.mxu0 %v603
  %693 = vmatprep.subr.mxu0 %v600
  %694 = vmatpush1.msra.mxu0 %v599
  %695 = vmatprep.subr.mxu0 0.0
  %696 = vmatpush2.msra.mxu0 0.0
  %697 = vmatprep.subr.mxu0 0.0
  %698 = vmatpush2.msra.mxu0 0.0
  %699 = vmatprep.subr.mxu0 0.0
  %700 = vmatpush2.msra.mxu0 0.0
  %701 = vmatprep.subr.mxu0 0.0
  %702 = vmatpush2.msra.mxu0 0.0
  %703 = vmatprep.subr.mxu0 0.0
  %704 = vmatpush2.msra.mxu0 0.0
  %705 = vmatprep.subr.mxu0 0.0
  %706 = vmatpush2.msra.mxu0 0.0
  %707 = vmatprep.subr.mxu0 0.0
  %708 = vmatpush2.msra.mxu0 0.0
  %709 = vmatprep.subr.mxu0 0.0
  %710 = vmatpush2.msra.mxu0 0.0
  %711 = vmatprep.subr.mxu0 0.0
  %712 = vmatpush2.msra.mxu0 0.0
  %713 = vmatprep.subr.mxu0 0.0
  %714 = vmatpush2.msra.mxu0 0.0
  %715 = vmatprep.subr.mxu0 0.0
  %716 = vmatpush2.msra.mxu0 0.0
  %717 = vmatprep.subr.mxu0 0.0
  %718 = vmatpush2.msra.mxu0 0.0
  %719 = vmatprep.subr.mxu0 0.0
  %720 = vmatpush2.msra.mxu0 0.0
  %721 = vmatprep.subr.mxu0 0.0
  %722 = vmatpush2.msra.mxu0 0.0
  %723 = vmatprep.subr.mxu0 0.0
  %724 = vmatpush2.msra.mxu0 0.0
  %725 = vmatprep.subr.mxu0 0.0
  %726 = vmatpush2.msra.mxu0 0.0
  %727 = vmatprep.mubr.f32.mxu0 0.0
  %728 = vmatmul.mubr.f32.gmra.mxu0 %v590
  %v729 = vpop.f32.mrf.mxu0
  %v730 = vadd.f32 0.0, %v729
  %v731 = vpop.f32.mrf.mxu0
  %v732 = vadd.f32 0.0, %v731
  %733 = vdwg.mxu0
  %734 = vmatprep.subr.mxu0 %v662
  %735 = vmatpush1.msra.mxu0 %v661
  %736 = vmatprep.subr.mxu0 %v658
  %737 = vmatpush1.msra.mxu0 %v657
  %738 = vmatprep.subr.mxu0 %v654
  %739 = vmatpush1.msra.mxu0 %v653
  %740 = vmatprep.subr.mxu0 %v650
  %741 = vmatpush1.msra.mxu0 %v649
  %742 = vmatprep.subr.mxu0 %v646
  %743 = vmatpush1.msra.mxu0 %v645
  %744 = vmatprep.subr.mxu0 %v642
  %745 = vmatpush1.msra.mxu0 %v641
  %746 = vmatprep.subr.mxu0 %v638
  %747 = vmatpush1.msra.mxu0 %v637
  %748 = vmatprep.subr.mxu0 %v634
  %749 = vmatpush1.msra.mxu0 %v633
  %750 = vmatprep.subr.mxu0 %v630
  %751 = vmatpush1.msra.mxu0 %v629
  %752 = vmatprep.subr.mxu0 %v626
  %753 = vmatpush1.msra.mxu0 %v625
  %754 = vmatprep.subr.mxu0 %v622
  %755 = vmatpush1.msra.mxu0 %v621
  %756 = vmatprep.subr.mxu0 %v618
  %757 = vmatpush1.msra.mxu0 %v617
  %758 = vmatprep.subr.mxu0 %v614
  %759 = vmatpush1.msra.mxu0 %v613
  %760 = vmatprep.subr.mxu0 %v610
  %761 = vmatpush1.msra.mxu0 %v609
  %762 = vmatprep.subr.mxu0 %v606
  %763 = vmatpush1.msra.mxu0 %v605
  %764 = vmatprep.subr.mxu0 %v602
  %765 = vmatpush1.msra.mxu0 %v601
  %766 = vmatprep.subr.mxu0 0.0
  %767 = vmatpush2.msra.mxu0 0.0
  %768 = vmatprep.subr.mxu0 0.0
  %769 = vmatpush2.msra.mxu0 0.0
  %770 = vmatprep.subr.mxu0 0.0
  %771 = vmatpush2.msra.mxu0 0.0
  %772 = vmatprep.subr.mxu0 0.0
  %773 = vmatpush2.msra.mxu0 0.0
  %774 = vmatprep.subr.mxu0 0.0
  %775 = vmatpush2.msra.mxu0 0.0
  %776 = vmatprep.subr.mxu0 0.0
  %777 = vmatpush2.msra.mxu0 0.0
  %778 = vmatprep.subr.mxu0 0.0
  %779 = vmatpush2.msra.mxu0 0.0
  %780 = vmatprep.subr.mxu0 0.0
  %781 = vmatpush2.msra.mxu0 0.0
  %782 = vmatprep.subr.mxu0 0.0
  %783 = vmatpush2.msra.mxu0 0.0
  %784 = vmatprep.subr.mxu0 0.0
  %785 = vmatpush2.msra.mxu0 0.0
  %786 = vmatprep.subr.mxu0 0.0
  %787 = vmatpush2.msra.mxu0 0.0
  %788 = vmatprep.subr.mxu0 0.0
  %789 = vmatpush2.msra.mxu0 0.0
  %790 = vmatprep.subr.mxu0 0.0
  %791 = vmatpush2.msra.mxu0 0.0
  %792 = vmatprep.subr.mxu0 0.0
  %793 = vmatpush2.msra.mxu0 0.0
  %794 = vmatprep.subr.mxu0 0.0
  %795 = vmatpush2.msra.mxu0 0.0
  %796 = vmatprep.subr.mxu0 0.0
  %797 = vmatpush2.msra.mxu0 0.0
  %798 = vmatprep.mubr.f32.mxu0 0.0
  %799 = vmatmul.mubr.f32.gmra.mxu0 %v590
  %v800 = vpop.f32.mrf.mxu0
  %v801 = vadd.f32 0.0, %v800
  %v802 = vpop.f32.mrf.mxu0
  %v803 = vadd.f32 0.0, %v802
  %804 = vdwg.mxu0
  %v805 = vadd.f32 %v595, %v730
  %v806 = vadd.f32 %v596, %v732
  %v807 = vadd.f32 %v597, %v801
  %v808 = vadd.f32 %v598, %v803
  %v809 = vmul.f32 %v805, 0.5
  %v810 = vtanh.pop %v809
  %v811 = vmul.f32 %v810, 0.5
  %v812 = vadd.f32 %v811, 0.5
  %v813 = vmul.f32 %v806, 0.5
  %v814 = vtanh.pop %v813
  %v815 = vmul.f32 %v814, 0.5
  %v816 = vadd.f32 %v815, 0.5
  %v817 = vtanh.pop %v807
  %v818 = vmul.f32 %v808, 0.5
  %v819 = vtanh.pop %v818
  %v820 = vmul.f32 %v819, 0.5
  %v821 = vadd.f32 %v820, 0.5
  %v822 = vmul.f32 %v816, %v588
  %v823 = vmul.f32 %v812, %v817
  %v824 = vadd.f32 %v822, %v823
  %v825 = vtanh.pop %v824
  %v826 = vmul.f32 %v821, %v825
  %s827 = scalar_lea.vmem %s6, 8
  %828 = vst [vmem:[%s827] sm:$0xff] %v826
  %s829 = smul.u32 2, 4
  %s830 = smul.addr %s829, 8
  %s831 = scalar_lea.vmem [#allocation2], %s830
  %v832 = vld [vmem:[%s831] sm:$0xff]
  %v833 = vld [vmem:[%s831 + $0x8] sm:$0xff]
  %v834 = vld [vmem:[%s831 + $0x10] sm:$0xff]
  %v835 = vld [vmem:[%s831 + $0x18] sm:$0xff]
  %v836 = vld [vmem:[%s3] sm:$0xff]
  %v837 = vld [vmem:[%s3 + $0x8] sm:$0xff]
  %v838 = vld [vmem:[%s3 + $0x10] sm:$0xff]
  %v839 = vld [vmem:[%s3 + $0x18] sm:$0xff]
  %v840 = vld [vmem:[%s3 + $0x20] sm:$0xff]
  %v841 = vld [vmem:[%s3 + $0x28] sm:$0xff]
  %v842 = vld [vmem:[%s3 + $0x30] sm:$0xff]
  %v843 = vld [vmem:[%s3 + $0x38] sm:$0xff]
  %v844 = vld [vmem:[%s3 + $0x40] sm:$0xff]
  %v845 = vld [vmem:[%s3 + $0x48] sm:$0xff]
  %v846 = vld [vmem:[%s3 + $0x50] sm:$0xff]
  %v847 = vld [vmem:[%s3 + $0x58] sm:$0xff]
  %v848 = vld [vmem:[%s3 + $0x60] sm:$0xff]
  %v849 = vld [vmem:[%s3 + $0x68] sm:$0xff]
  %v850 = vld [vmem:[%s3 + $0x70] sm:$0xff]
  %v851 = vld [vmem:[%s3 + $0x78] sm:$0xff]
  %v852 = vld [vmem:[%s3 + $0x80] sm:$0xff]
  %v853 = vld [vmem:[%s3 + $0x88] sm:$0xff]
  %v854 = vld [vmem:[%s3 + $0x90] sm:$0xff]
  %v855 = vld [vmem:[%s3 + $0x98] sm:$0xff]
  %v856 = vld [vmem:[%s3 + $0xa0] sm:$0xff]
  %v857 = vld [vmem:[%s3 + $0xa8] sm:$0xff]
  %v858 = vld [vmem:[%s3 + $0xb0] sm:$0xff]
  %v859 = vld [vmem:[%s3 + $0xb8] sm:$0xff]
  %v860 = vld [vmem:[%s3 + $0xc0] sm:$0xff]
  %v861 = vld [vmem:[%s3 + $0xc8] sm:$0xff]
  %v862 = vld [vmem:[%s3 + $0xd0] sm:$0xff]
  %v863 = vld [vmem:[%s3 + $0xd8] sm:$0xff]
  %v864 = vld [vmem:[%s3 + $0xe0] sm:$0xff]
  %v865 = vld [vmem:[%s3 + $0xe8] sm:$0xff]
  %v866 = vld [vmem:[%s3 + $0xf0] sm:$0xff]
  %v867 = vld [vmem:[%s3 + $0xf8] sm:$0xff]
  %v868 = vld [vmem:[%s3 + $0x100] sm:$0xff]
  %v869 = vld [vmem:[%s3 + $0x108] sm:$0xff]
  %v870 = vld [vmem:[%s3 + $0x110] sm:$0xff]
  %v871 = vld [vmem:[%s3 + $0x118] sm:$0xff]
  %v872 = vld [vmem:[%s3 + $0x120] sm:$0xff]
  %v873 = vld [vmem:[%s3 + $0x128] sm:$0xff]
  %v874 = vld [vmem:[%s3 + $0x130] sm:$0xff]
  %v875 = vld [vmem:[%s3 + $0x138] sm:$0xff]
  %v876 = vld [vmem:[%s3 + $0x140] sm:$0xff]
  %v877 = vld [vmem:[%s3 + $0x148] sm:$0xff]
  %v878 = vld [vmem:[%s3 + $0x150] sm:$0xff]
  %v879 = vld [vmem:[%s3 + $0x158] sm:$0xff]
  %v880 = vld [vmem:[%s3 + $0x160] sm:$0xff]
  %v881 = vld [vmem:[%s3 + $0x168] sm:$0xff]
  %v882 = vld [vmem:[%s3 + $0x170] sm:$0xff]
  %v883 = vld [vmem:[%s3 + $0x178] sm:$0xff]
  %v884 = vld [vmem:[%s3 + $0x180] sm:$0xff]
  %v885 = vld [vmem:[%s3 + $0x188] sm:$0xff]
  %v886 = vld [vmem:[%s3 + $0x190] sm:$0xff]
  %v887 = vld [vmem:[%s3 + $0x198] sm:$0xff]
  %v888 = vld [vmem:[%s3 + $0x1a0] sm:$0xff]
  %v889 = vld [vmem:[%s3 + $0x1a8] sm:$0xff]
  %v890 = vld [vmem:[%s3 + $0x1b0] sm:$0xff]
  %v891 = vld [vmem:[%s3 + $0x1b8] sm:$0xff]
  %v892 = vld [vmem:[%s3 + $0x1c0] sm:$0xff]
  %v893 = vld [vmem:[%s3 + $0x1c8] sm:$0xff]
  %v894 = vld [vmem:[%s3 + $0x1d0] sm:$0xff]
  %v895 = vld [vmem:[%s3 + $0x1d8] sm:$0xff]
  %v896 = vld [vmem:[%s3 + $0x1e0] sm:$0xff]
  %v897 = vld [vmem:[%s3 + $0x1e8] sm:$0xff]
  %v898 = vld [vmem:[%s3 + $0x1f0] sm:$0xff]
  %v899 = vld [vmem:[%s3 + $0x1f8] sm:$0xff]
  %900 = vmatprep.subr.mxu0 %v897
  %901 = vmatpush1.msra.mxu0 %v896
  %902 = vmatprep.subr.mxu0 %v893
  %903 = vmatpush1.msra.mxu0 %v892
  %904 = vmatprep.subr.mxu0 %v889
  %905 = vmatpush1.msra.mxu0 %v888
  %906 = vmatprep.subr.mxu0 %v885
  %907 = vmatpush1.msra.mxu0 %v884
  %908 = vmatprep.subr.mxu0 %v881
  %909 = vmatpush1.msra.mxu0 %v880
  %910 = vmatprep.subr.mxu0 %v877
  %911 = vmatpush1.msra.mxu0 %v876
  %912 = vmatprep.subr.mxu0 %v873
  %913 = vmatpush1.msra.mxu0 %v872
  %914 = vmatprep.subr.mxu0 %v869
  %915 = vmatpush1.msra.mxu0 %v868
  %916 = vmatprep.subr.mxu0 %v865
  %917 = vmatpush1.msra.mxu0 %v864
  %918 = vmatprep.subr.mxu0 %v861
  %919 = vmatpush1.msra.mxu0 %v860
  %920 = vmatprep.subr.mxu0 %v857
  %921 = vmatpush1.msra.mxu0 %v856
  %922 = vmatprep.subr.mxu0 %v853
  %923 = vmatpush1.msra.mxu0 %v852
  %924 = vmatprep.subr.mxu0 %v849
  %925 = vmatpush1.msra.mxu0 %v848
  %926 = vmatprep.subr.mxu0 %v845
  %927 = vmatpush1.msra.mxu0 %v844
  %928 = vmatprep.subr.mxu0 %v841
  %929 = vmatpush1.msra.mxu0 %v840
  %930 = vmatprep.subr.mxu0 %v837
  %931 = vmatpush1.msra.mxu0 %v836
  %932 = vmatprep.subr.mxu0 0.0
  %933 = vmatpush2.msra.mxu0 0.0
  %934 = vmatprep.subr.mxu0 0.0
  %935 = vmatpush2.msra.mxu0 0.0
  %936 = vmatprep.subr.mxu0 0.0
  %937 = vmatpush2.msra.mxu0 0.0
  %938 = vmatprep.subr.mxu0 0.0
  %939 = vmatpush2.msra.mxu0 0.0
  %940 = vmatprep.subr.mxu0 0.0
  %941 = vmatpush2.msra.mxu0 0.0
  %942 = vmatprep.subr.mxu0 0.0
  %943 = vmatpush2.msra.mxu0 0.0
  %944 = vmatprep.subr.mxu0 0.0
  %945 = vmatpush2.msra.mxu0 0.0
  %946 = vmatprep.subr.mxu0 0.0
  %947 = vmatpush2.msra.mxu0 0.0
  %948 = vmatprep.subr.mxu0 0.0
  %949 = vmatpush2.msra.mxu0 0.0
  %950 = vmatprep.subr.mxu0 0.0
  %951 = vmatpush2.msra.mxu0 0.0
  %952 = vmatprep.subr.mxu0 0.0
  %953 = vmatpush2.msra.mxu0 0.0
  %954 = vmatprep.subr.mxu0 0.0
  %955 = vmatpush2.msra.mxu0 0.0
  %956 = vmatprep.subr.mxu0 0.0
  %957 = vmatpush2.msra.mxu0 0.0
  %958 = vmatprep.subr.mxu0 0.0
  %959 = vmatpush2.msra.mxu0 0.0
  %960 = vmatprep.subr.mxu0 0.0
  %961 = vmatpush2.msra.mxu0 0.0
  %962 = vmatprep.subr.mxu0 0.0
  %963 = vmatpush2.msra.mxu0 0.0
  %964 = vmatprep.mubr.f32.mxu0 0.0
  %965 = vmatmul.mubr.f32.gmra.mxu0 %v826
  %v966 = vpop.f32.mrf.mxu0
  %v967 = vadd.f32 0.0, %v966
  %v968 = vpop.f32.mrf.mxu0
  %v969 = vadd.f32 0.0, %v968
  %970 = vdwg.mxu0
  %971 = vmatprep.subr.mxu0 %v899
  %972 = vmatpush1.msra.mxu0 %v898
  %973 = vmatprep.subr.mxu0 %v895
  %974 = vmatpush1.msra.mxu0 %v894
  %975 = vmatprep.subr.mxu0 %v891
  %976 = vmatpush1.msra.mxu0 %v890
  %977 = vmatprep.subr.mxu0 %v887
  %978 = vmatpush1.msra.mxu0 %v886
  %979 = vmatprep.subr.mxu0 %v883
  %980 = vmatpush1.msra.mxu0 %v882
  %981 = vmatprep.subr.mxu0 %v879
  %982 = vmatpush1.msra.mxu0 %v878
  %983 = vmatprep.subr.mxu0 %v875
  %984 = vmatpush1.msra.mxu0 %v874
  %985 = vmatprep.subr.mxu0 %v871
  %986 = vmatpush1.msra.mxu0 %v870
  %987 = vmatprep.subr.mxu0 %v867
  %988 = vmatpush1.msra.mxu0 %v866
  %989 = vmatprep.subr.mxu0 %v863
  %990 = vmatpush1.msra.mxu0 %v862
  %991 = vmatprep.subr.mxu0 %v859
  %992 = vmatpush1.msra.mxu0 %v858
  %993 = vmatprep.subr.mxu0 %v855
  %994 = vmatpush1.msra.mxu0 %v854
  %995 = vmatprep.subr.mxu0 %v851
  %996 = vmatpush1.msra.mxu0 %v850
  %997 = vmatprep.subr.mxu0 %v847
  %998 = vmatpush1.msra.mxu0 %v846
  %999 = vmatprep.subr.mxu0 %v843
  %1000 = vmatpush1.msra.mxu0 %v842
  %1001 = vmatprep.subr.mxu0 %v839
  %1002 = vmatpush1.msra.mxu0 %v838
  %1003 = vmatprep.subr.mxu0 0.0
  %1004 = vmatpush2.msra.mxu0 0.0
  %1005 = vmatprep.subr.mxu0 0.0
  %1006 = vmatpush2.msra.mxu0 0.0
  %1007 = vmatprep.subr.mxu0 0.0
  %1008 = vmatpush2.msra.mxu0 0.0
  %1009 = vmatprep.subr.mxu0 0.0
  %1010 = vmatpush2.msra.mxu0 0.0
  %1011 = vmatprep.subr.mxu0 0.0
  %1012 = vmatpush2.msra.mxu0 0.0
  %1013 = vmatprep.subr.mxu0 0.0
  %1014 = vmatpush2.msra.mxu0 0.0
  %1015 = vmatprep.subr.mxu0 0.0
  %1016 = vmatpush2.msra.mxu0 0.0
  %1017 = vmatprep.subr.mxu0 0.0
  %1018 = vmatpush2.msra.mxu0 0.0
  %1019 = vmatprep.subr.mxu0 0.0
  %1020 = vmatpush2.msra.mxu0 0.0
  %1021 = vmatprep.subr.mxu0 0.0
  %1022 = vmatpush2.msra.mxu0 0.0
  %1023 = vmatprep.subr.mxu0 0.0
  %1024 = vmatpush2.msra.mxu0 0.0
  %1025 = vmatprep.subr.mxu0 0.0
  %1026 = vmatpush2.msra.mxu0 0.0
  %1027 = vmatprep.subr.mxu0 0.0
  %1028 = vmatpush2.msra.mxu0 0.0
  %1029 = vmatprep.subr.mxu0 0.0
  %1030 = vmatpush2.msra.mxu0 0.0
  %1031 = vmatprep.subr.mxu0 0.0
  %1032 = vmatpush2.msra.mxu0 0.0
  %1033 = vmatprep.subr.mxu0 0.0
  %1034 = vmatpush2.msra.mxu0 0.0
  %1035 = vmatprep.mubr.f32.mxu0 0.0
  %1036 = vmatmul.mubr.f32.gmra.mxu0 %v826
  %v1037 = vpop.f32.mrf.mxu0
  %v1038 = vadd.f32 0.0, %v1037
  %v1039 = vpop.f32.mrf.mxu0
  %v1040 = vadd.f32 0.0, %v1039
  %1041 = vdwg.mxu0
  %v1042 = vadd.f32 %v832, %v967
  %v1043 = vadd.f32 %v833, %v969
  %v1044 = vadd.f32 %v834, %v1038
  %v1045 = vadd.f32 %v835, %v1040
  %v1046 = vmul.f32 %v1042, 0.5
  %v1047 = vtanh.pop %v1046
  %v1048 = vmul.f32 %v1047, 0.5
  %v1049 = vadd.f32 %v1048, 0.5
  %v1050 = vmul.f32 %v1043, 0.5
  %v1051 = vtanh.pop %v1050
  %v1052 = vmul.f32 %v1051, 0.5
  %v1053 = vadd.f32 %v1052, 0.5
  %v1054 = vtanh.pop %v1044
  %v1055 = vmul.f32 %v1045, 0.5
  %v1056 = vtanh.pop %v1055
  %v1057 = vmul.f32 %v1056, 0.5
  %v1058 = vadd.f32 %v1057, 0.5
  %v1059 = vmul.f32 %v1053, %v824
  %v1060 = vmul.f32 %v1049, %v1054
  %v1061 = vadd.f32 %v1059, %v1060
  %v1062 = vtanh.pop %v1061
  %v1063 = vmul.f32 %v1058, %v1062
  %s1064 = scalar_lea.vmem %s6, 16
  %1065 = vst [vmem:[%s1064] sm:$0xff] %v1063
  %s1066 = smul.u32 3, 4
  %s1067 = smul.addr %s1066, 8
  %s1068 = scalar_lea.vmem [#allocation2], %s1067
  %v1069 = vld [vmem:[%s1068] sm:$0xff]
  %v1070 = vld [vmem:[%s1068 + $0x8] sm:$0xff]
  %v1071 = vld [vmem:[%s1068 + $0x10] sm:$0xff]
  %v1072 = vld [vmem:[%s1068 + $0x18] sm:$0xff]
  %v1073 = vld [vmem:[%s3] sm:$0xff]
  %v1074 = vld [vmem:[%s3 + $0x8] sm:$0xff]
  %v1075 = vld [vmem:[%s3 + $0x10] sm:$0xff]
  %v1076 = vld [vmem:[%s3 + $0x18] sm:$0xff]
  %v1077 = vld [vmem:[%s3 + $0x20] sm:$0xff]
  %v1078 = vld [vmem:[%s3 + $0x28] sm:$0xff]
  %v1079 = vld [vmem:[%s3 + $0x30] sm:$0xff]
  %v1080 = vld [vmem:[%s3 + $0x38] sm:$0xff]
  %v1081 = vld [vmem:[%s3 + $0x40] sm:$0xff]
  %v1082 = vld [vmem:[%s3 + $0x48] sm:$0xff]
  %v1083 = vld [vmem:[%s3 + $0x50] sm:$0xff]
  %v1084 = vld [vmem:[%s3 + $0x58] sm:$0xff]
  %v1085 = vld [vmem:[%s3 + $0x60] sm:$0xff]
  %v1086 = vld [vmem:[%s3 + $0x68] sm:$0xff]
  %v1087 = vld [vmem:[%s3 + $0x70] sm:$0xff]
  %v1088 = vld [vmem:[%s3 + $0x78] sm:$0xff]
  %v1089 = vld [vmem:[%s3 + $0x80] sm:$0xff]
  %v1090 = vld [vmem:[%s3 + $0x88] sm:$0xff]
  %v1091 = vld [vmem:[%s3 + $0x90] sm:$0xff]
  %v1092 = vld [vmem:[%s3 + $0x98] sm:$0xff]
  %v1093 = vld [vmem:[%s3 + $0xa0] sm:$0xff]
  %v1094 = vld [vmem:[%s3 + $0xa8] sm:$0xff]
  %v1095 = vld [vmem:[%s3 + $0xb0] sm:$0xff]
  %v1096 = vld [vmem:[%s3 + $0xb8] sm:$0xff]
  %v1097 = vld [vmem:[%s3 + $0xc0] sm:$0xff]
  %v1098 = vld [vmem:[%s3 + $0xc8] sm:$0xff]
  %v1099 = vld [vmem:[%s3 + $0xd0] sm:$0xff]
  %v1100 = vld [vmem:[%s3 + $0xd8] sm:$0xff]
  %v1101 = vld [vmem:[%s3 + $0xe0] sm:$0xff]
  %v1102 = vld [vmem:[%s3 + $0xe8] sm:$0xff]
  %v1103 = vld [vmem:[%s3 + $0xf0] sm:$0xff]
  %v1104 = vld [vmem:[%s3 + $0xf8] sm:$0xff]
  %v1105 = vld [vmem:[%s3 + $0x100] sm:$0xff]
  %v1106 = vld [vmem:[%s3 + $0x108] sm:$0xff]
  %v1107 = vld [vmem:[%s3 + $0x110] sm:$0xff]
  %v1108 = vld [vmem:[%s3 + $0x118] sm:$0xff]
  %v1109 = vld [vmem:[%s3 + $0x120] sm:$0xff]
  %v1110 = vld [vmem:[%s3 + $0x128] sm:$0xff]
  %v1111 = vld [vmem:[%s3 + $0x130] sm:$0xff]
  %v1112 = vld [vmem:[%s3 + $0x138] sm:$0xff]
  %v1113 = vld [vmem:[%s3 + $0x140] sm:$0xff]
  %v1114 = vld [vmem:[%s3 + $0x148] sm:$0xff]
  %v1115 = vld [vmem:[%s3 + $0x150] sm:$0xff]
  %v1116 = vld [vmem:[%s3 + $0x158] sm:$0xff]
  %v1117 = vld [vmem:[%s3 + $0x160] sm:$0xff]
  %v1118 = vld [vmem:[%s3 + $0x168] sm:$0xff]
  %v1119 = vld [vmem:[%s3 + $0x170] sm:$0xff]
  %v1120 = vld [vmem:[%s3 + $0x178] sm:$0xff]
  %v1121 = vld [vmem:[%s3 + $0x180] sm:$0xff]
  %v1122 = vld [vmem:[%s3 + $0x188] sm:$0xff]
  %v1123 = vld [vmem:[%s3 + $0x190] sm:$0xff]
  %v1124 = vld [vmem:[%s3 + $0x198] sm:$0xff]
  %v1125 = vld [vmem:[%s3 + $0x1a0] sm:$0xff]
  %v1126 = vld [vmem:[%s3 + $0x1a8] sm:$0xff]
  %v1127 = vld [vmem:[%s3 + $0x1b0] sm:$0xff]
  %v1128 = vld [vmem:[%s3 + $0x1b8] sm:$0xff]
  %v1129 = vld [vmem:[%s3 + $0x1c0] sm:$0xff]
  %v1130 = vld [vmem:[%s3 + $0x1c8] sm:$0xff]
  %v1131 = vld [vmem:[%s3 + $0x1d0] sm:$0xff]
  %v1132 = vld [vmem:[%s3 + $0x1d8] sm:$0xff]
  %v1133 = vld [vmem:[%s3 + $0x1e0] sm:$0xff]
  %v1134 = vld [vmem:[%s3 + $0x1e8] sm:$0xff]
  %v1135 = vld [vmem:[%s3 + $0x1f0] sm:$0xff]
  %v1136 = vld [vmem:[%s3 + $0x1f8] sm:$0xff]
  %1137 = vmatprep.subr.mxu0 %v1134
  %1138 = vmatpush1.msra.mxu0 %v1133
  %1139 = vmatprep.subr.mxu0 %v1130
  %1140 = vmatpush1.msra.mxu0 %v1129
  %1141 = vmatprep.subr.mxu0 %v1126
  %1142 = vmatpush1.msra.mxu0 %v1125
  %1143 = vmatprep.subr.mxu0 %v1122
  %1144 = vmatpush1.msra.mxu0 %v1121
  %1145 = vmatprep.subr.mxu0 %v1118
  %1146 = vmatpush1.msra.mxu0 %v1117
  %1147 = vmatprep.subr.mxu0 %v1114
  %1148 = vmatpush1.msra.mxu0 %v1113
  %1149 = vmatprep.subr.mxu0 %v1110
  %1150 = vmatpush1.msra.mxu0 %v1109
  %1151 = vmatprep.subr.mxu0 %v1106
  %1152 = vmatpush1.msra.mxu0 %v1105
  %1153 = vmatprep.subr.mxu0 %v1102
  %1154 = vmatpush1.msra.mxu0 %v1101
  %1155 = vmatprep.subr.mxu0 %v1098
  %1156 = vmatpush1.msra.mxu0 %v1097
  %1157 = vmatprep.subr.mxu0 %v1094
  %1158 = vmatpush1.msra.mxu0 %v1093
  %1159 = vmatprep.subr.mxu0 %v1090
  %1160 = vmatpush1.msra.mxu0 %v1089
  %1161 = vmatprep.subr.mxu0 %v1086
  %1162 = vmatpush1.msra.mxu0 %v1085
  %1163 = vmatprep.subr.mxu0 %v1082
  %1164 = vmatpush1.msra.mxu0 %v1081
  %1165 = vmatprep.subr.mxu0 %v1078
  %1166 = vmatpush1.msra.mxu0 %v1077
  %1167 = vmatprep.subr.mxu0 %v1074
  %1168 = vmatpush1.msra.mxu0 %v1073
  %1169 = vmatprep.subr.mxu0 0.0
  %1170 = vmatpush2.msra.mxu0 0.0
  %1171 = vmatprep.subr.mxu0 0.0
  %1172 = vmatpush2.msra.mxu0 0.0
  %1173 = vmatprep.subr.mxu0 0.0
  %1174 = vmatpush2.msra.mxu0 0.0
  %1175 = vmatprep.subr.mxu0 0.0
  %1176 = vmatpush2.msra.mxu0 0.0
  %1177 = vmatprep.subr.mxu0 0.0
  %1178 = vmatpush2.msra.mxu0 0.0
  %1179 = vmatprep.subr.mxu0 0.0
  %1180 = vmatpush2.msra.mxu0 0.0
  %1181 = vmatprep.subr.mxu0 0.0
  %1182 = vmatpush2.msra.mxu0 0.0
  %1183 = vmatprep.subr.mxu0 0.0
  %1184 = vmatpush2.msra.mxu0 0.0
  %1185 = vmatprep.subr.mxu0 0.0
  %1186 = vmatpush2.msra.mxu0 0.0
  %1187 = vmatprep.subr.mxu0 0.0
  %1188 = vmatpush2.msra.mxu0 0.0
  %1189 = vmatprep.subr.mxu0 0.0
  %1190 = vmatpush2.msra.mxu0 0.0
  %1191 = vmatprep.subr.mxu0 0.0
  %1192 = vmatpush2.msra.mxu0 0.0
  %1193 = vmatprep.subr.mxu0 0.0
  %1194 = vmatpush2.msra.mxu0 0.0
  %1195 = vmatprep.subr.mxu0 0.0
  %1196 = vmatpush2.msra.mxu0 0.0
  %1197 = vmatprep.subr.mxu0 0.0
  %1198 = vmatpush2.msra.mxu0 0.0
  %1199 = vmatprep.subr.mxu0 0.0
  %1200 = vmatpush2.msra.mxu0 0.0
  %1201 = vmatprep.mubr.f32.mxu0 0.0
  %1202 = vmatmul.mubr.f32.gmra.mxu0 %v1063
  %v1203 = vpop.f32.mrf.mxu0
  %v1204 = vadd.f32 0.0, %v1203
  %v1205 = vpop.f32.mrf.mxu0
  %v1206 = vadd.f32 0.0, %v1205
  %1207 = vdwg.mxu0
  %1208 = vmatprep.subr.mxu0 %v1136
  %1209 = vmatpush1.msra.mxu0 %v1135
  %1210 = vmatprep.subr.mxu0 %v1132
  %1211 = vmatpush1.msra.mxu0 %v1131
  %1212 = vmatprep.subr.mxu0 %v1128
  %1213 = vmatpush1.msra.mxu0 %v1127
  %1214 = vmatprep.subr.mxu0 %v1124
  %1215 = vmatpush1.msra.mxu0 %v1123
  %1216 = vmatprep.subr.mxu0 %v1120
  %1217 = vmatpush1.msra.mxu0 %v1119
  %1218 = vmatprep.subr.mxu0 %v1116
  %1219 = vmatpush1.msra.mxu0 %v1115
  %1220 = vmatprep.subr.mxu0 %v1112
  %1221 = vmatpush1.msra.mxu0 %v1111
  %1222 = vmatprep.subr.mxu0 %v1108
  %1223 = vmatpush1.msra.mxu0 %v1107
  %1224 = vmatprep.subr.mxu0 %v1104
  %1225 = vmatpush1.msra.mxu0 %v1103
  %1226 = vmatprep.subr.mxu0 %v1100
  %1227 = vmatpush1.msra.mxu0 %v1099
  %1228 = vmatprep.subr.mxu0 %v1096
  %1229 = vmatpush1.msra.mxu0 %v1095
  %1230 = vmatprep.subr.mxu0 %v1092
  %1231 = vmatpush1.msra.mxu0 %v1091
  %1232 = vmatprep.subr.mxu0 %v1088
  %1233 = vmatpush1.msra.mxu0 %v1087
  %1234 = vmatprep.subr.mxu0 %v1084
  %1235 = vmatpush1.msra.mxu0 %v1083
  %1236 = vmatprep.subr.mxu0 %v1080
  %1237 = vmatpush1.msra.mxu0 %v1079
  %1238 = vmatprep.subr.mxu0 %v1076
  %1239 = vmatpush1.msra.mxu0 %v1075
  %1240 = vmatprep.subr.mxu0 0.0
  %1241 = vmatpush2.msra.mxu0 0.0
  %1242 = vmatprep.subr.mxu0 0.0
  %1243 = vmatpush2.msra.mxu0 0.0
  %1244 = vmatprep.subr.mxu0 0.0
  %1245 = vmatpush2.msra.mxu0 0.0
  %1246 = vmatprep.subr.mxu0 0.0
  %1247 = vmatpush2.msra.mxu0 0.0
  %1248 = vmatprep.subr.mxu0 0.0
  %1249 = vmatpush2.msra.mxu0 0.0
  %1250 = vmatprep.subr.mxu0 0.0
  %1251 = vmatpush2.msra.mxu0 0.0
  %1252 = vmatprep.subr.mxu0 0.0
  %1253 = vmatpush2.msra.mxu0 0.0
  %1254 = vmatprep.subr.mxu0 0.0
  %1255 = vmatpush2.msra.mxu0 0.0
  %1256 = vmatprep.subr.mxu0 0.0
  %1257 = vmatpush2.msra.mxu0 0.0
  %1258 = vmatprep.subr.mxu0 0.0
  %1259 = vmatpush2.msra.mxu0 0.0
  %1260 = vmatprep.subr.mxu0 0.0
  %1261 = vmatpush2.msra.mxu0 0.0
  %1262 = vmatprep.subr.mxu0 0.0
  %1263 = vmatpush2.msra.mxu0 0.0
  %1264 = vmatprep.subr.mxu0 0.0
  %1265 = vmatpush2.msra.mxu0 0.0
  %1266 = vmatprep.subr.mxu0 0.0
  %1267 = vmatpush2.msra.mxu0 0.0
  %1268 = vmatprep.subr.mxu0 0.0
  %1269 = vmatpush2.msra.mxu0 0.0
  %1270 = vmatprep.subr.mxu0 0.0
  %1271 = vmatpush2.msra.mxu0 0.0
  %1272 = vmatprep.mubr.f32.mxu0 0.0
  %1273 = vmatmul.mubr.f32.gmra.mxu0 %v1063
  %v1274 = vpop.f32.mrf.mxu0
  %v1275 = vadd.f32 0.0, %v1274
  %v1276 = vpop.f32.mrf.mxu0
  %v1277 = vadd.f32 0.0, %v1276
  %1278 = vdwg.mxu0
  %v1279 = vadd.f32 %v1069, %v1204
  %v1280 = vadd.f32 %v1070, %v1206
  %v1281 = vadd.f32 %v1071, %v1275
  %v1282 = vadd.f32 %v1072, %v1277
  %v1283 = vmul.f32 %v1279, 0.5
  %v1284 = vtanh.pop %v1283
  %v1285 = vmul.f32 %v1284, 0.5
  %v1286 = vadd.f32 %v1285, 0.5
  %v1287 = vmul.f32 %v1280, 0.5
  %v1288 = vtanh.pop %v1287
  %v1289 = vmul.f32 %v1288, 0.5
  %v1290 = vadd.f32 %v1289, 0.5
  %v1291 = vtanh.pop %v1281
  %v1292 = vmul.f32 %v1282, 0.5
  %v1293 = vtanh.pop %v1292
  %v1294 = vmul.f32 %v1293, 0.5
  %v1295 = vadd.f32 %v1294, 0.5
  %v1296 = vmul.f32 %v1290, %v1061
  %v1297 = vmul.f32 %v1286, %v1291
  %v1298 = vadd.f32 %v1296, %v1297
  %v1299 = vtanh.pop %v1298
  %v1300 = vmul.f32 %v1295, %v1299
  %s1301 = scalar_lea.vmem %s6, 24
  %1302 = vst [vmem:[%s1301] sm:$0xff] %v1300
  %s1303 = smul.u32 4, 4
  %s1304 = smul.addr %s1303, 8
  %s1305 = scalar_lea.vmem [#allocation2], %s1304
  %v1306 = vld [vmem:[%s1305] sm:$0xff]
  %v1307 = vld [vmem:[%s1305 + $0x8] sm:$0xff]
  %v1308 = vld [vmem:[%s1305 + $0x10] sm:$0xff]
  %v1309 = vld [vmem:[%s1305 + $0x18] sm:$0xff]
  %v1310 = vld [vmem:[%s3] sm:$0xff]
  %v1311 = vld [vmem:[%s3 + $0x8] sm:$0xff]
  %v1312 = vld [vmem:[%s3 + $0x10] sm:$0xff]
  %v1313 = vld [vmem:[%s3 + $0x18] sm:$0xff]
  %v1314 = vld [vmem:[%s3 + $0x20] sm:$0xff]
  %v1315 = vld [vmem:[%s3 + $0x28] sm:$0xff]
  %v1316 = vld [vmem:[%s3 + $0x30] sm:$0xff]
  %v1317 = vld [vmem:[%s3 + $0x38] sm:$0xff]
  %v1318 = vld [vmem:[%s3 + $0x40] sm:$0xff]
  %v1319 = vld [vmem:[%s3 + $0x48] sm:$0xff]
  %v1320 = vld [vmem:[%s3 + $0x50] sm:$0xff]
  %v1321 = vld [vmem:[%s3 + $0x58] sm:$0xff]
  %v1322 = vld [vmem:[%s3 + $0x60] sm:$0xff]
  %v1323 = vld [vmem:[%s3 + $0x68] sm:$0xff]
  %v1324 = vld [vmem:[%s3 + $0x70] sm:$0xff]
  %v1325 = vld [vmem:[%s3 + $0x78] sm:$0xff]
  %v1326 = vld [vmem:[%s3 + $0x80] sm:$0xff]
  %v1327 = vld [vmem:[%s3 + $0x88] sm:$0xff]
  %v1328 = vld [vmem:[%s3 + $0x90] sm:$0xff]
  %v1329 = vld [vmem:[%s3 + $0x98] sm:$0xff]
  %v1330 = vld [vmem:[%s3 + $0xa0] sm:$0xff]
  %v1331 = vld [vmem:[%s3 + $0xa8] sm:$0xff]
  %v1332 = vld [vmem:[%s3 + $0xb0] sm:$0xff]
  %v1333 = vld [vmem:[%s3 + $0xb8] sm:$0xff]
  %v1334 = vld [vmem:[%s3 + $0xc0] sm:$0xff]
  %v1335 = vld [vmem:[%s3 + $0xc8] sm:$0xff]
  %v1336 = vld [vmem:[%s3 + $0xd0] sm:$0xff]
  %v1337 = vld [vmem:[%s3 + $0xd8] sm:$0xff]
  %v1338 = vld [vmem:[%s3 + $0xe0] sm:$0xff]
  %v1339 = vld [vmem:[%s3 + $0xe8] sm:$0xff]
  %v1340 = vld [vmem:[%s3 + $0xf0] sm:$0xff]
  %v1341 = vld [vmem:[%s3 + $0xf8] sm:$0xff]
  %v1342 = vld [vmem:[%s3 + $0x100] sm:$0xff]
  %v1343 = vld [vmem:[%s3 + $0x108] sm:$0xff]
  %v1344 = vld [vmem:[%s3 + $0x110] sm:$0xff]
  %v1345 = vld [vmem:[%s3 + $0x118] sm:$0xff]
  %v1346 = vld [vmem:[%s3 + $0x120] sm:$0xff]
  %v1347 = vld [vmem:[%s3 + $0x128] sm:$0xff]
  %v1348 = vld [vmem:[%s3 + $0x130] sm:$0xff]
  %v1349 = vld [vmem:[%s3 + $0x138] sm:$0xff]
  %v1350 = vld [vmem:[%s3 + $0x140] sm:$0xff]
  %v1351 = vld [vmem:[%s3 + $0x148] sm:$0xff]
  %v1352 = vld [vmem:[%s3 + $0x150] sm:$0xff]
  %v1353 = vld [vmem:[%s3 + $0x158] sm:$0xff]
  %v1354 = vld [vmem:[%s3 + $0x160] sm:$0xff]
  %v1355 = vld [vmem:[%s3 + $0x168] sm:$0xff]
  %v1356 = vld [vmem:[%s3 + $0x170] sm:$0xff]
  %v1357 = vld [vmem:[%s3 + $0x178] sm:$0xff]
  %v1358 = vld [vmem:[%s3 + $0x180] sm:$0xff]
  %v1359 = vld [vmem:[%s3 + $0x188] sm:$0xff]
  %v1360 = vld [vmem:[%s3 + $0x190] sm:$0xff]
  %v1361 = vld [vmem:[%s3 + $0x198] sm:$0xff]
  %v1362 = vld [vmem:[%s3 + $0x1a0] sm:$0xff]
  %v1363 = vld [vmem:[%s3 + $0x1a8] sm:$0xff]
  %v1364 = vld [vmem:[%s3 + $0x1b0] sm:$0xff]
  %v1365 = vld [vmem:[%s3 + $0x1b8] sm:$0xff]
  %v1366 = vld [vmem:[%s3 + $0x1c0] sm:$0xff]
  %v1367 = vld [vmem:[%s3 + $0x1c8] sm:$0xff]
  %v1368 = vld [vmem:[%s3 + $0x1d0] sm:$0xff]
  %v1369 = vld [vmem:[%s3 + $0x1d8] sm:$0xff]
  %v1370 = vld [vmem:[%s3 + $0x1e0] sm:$0xff]
  %v1371 = vld [vmem:[%s3 + $0x1e8] sm:$0xff]
  %v1372 = vld [vmem:[%s3 + $0x1f0] sm:$0xff]
  %v1373 = vld [vmem:[%s3 + $0x1f8] sm:$0xff]
  %1374 = vmatprep.subr.mxu0 %v1371
  %1375 = vmatpush1.msra.mxu0 %v1370
  %1376 = vmatprep.subr.mxu0 %v1367
  %1377 = vmatpush1.msra.mxu0 %v1366
  %1378 = vmatprep.subr.mxu0 %v1363
  %1379 = vmatpush1.msra.mxu0 %v1362
  %1380 = vmatprep.subr.mxu0 %v1359
  %1381 = vmatpush1.msra.mxu0 %v1358
  %1382 = vmatprep.subr.mxu0 %v1355
  %1383 = vmatpush1.msra.mxu0 %v1354
  %1384 = vmatprep.subr.mxu0 %v1351
  %1385 = vmatpush1.msra.mxu0 %v1350
  %1386 = vmatprep.subr.mxu0 %v1347
  %1387 = vmatpush1.msra.mxu0 %v1346
  %1388 = vmatprep.subr.mxu0 %v1343
  %1389 = vmatpush1.msra.mxu0 %v1342
  %1390 = vmatprep.subr.mxu0 %v1339
  %1391 = vmatpush1.msra.mxu0 %v1338
  %1392 = vmatprep.subr.mxu0 %v1335
  %1393 = vmatpush1.msra.mxu0 %v1334
  %1394 = vmatprep.subr.mxu0 %v1331
  %1395 = vmatpush1.msra.mxu0 %v1330
  %1396 = vmatprep.subr.mxu0 %v1327
  %1397 = vmatpush1.msra.mxu0 %v1326
  %1398 = vmatprep.subr.mxu0 %v1323
  %1399 = vmatpush1.msra.mxu0 %v1322
  %1400 = vmatprep.subr.mxu0 %v1319
  %1401 = vmatpush1.msra.mxu0 %v1318
  %1402 = vmatprep.subr.mxu0 %v1315
  %1403 = vmatpush1.msra.mxu0 %v1314
  %1404 = vmatprep.subr.mxu0 %v1311
  %1405 = vmatpush1.msra.mxu0 %v1310
  %1406 = vmatprep.subr.mxu0 0.0
  %1407 = vmatpush2.msra.mxu0 0.0
  %1408 = vmatprep.subr.mxu0 0.0
  %1409 = vmatpush2.msra.mxu0 0.0
  %1410 = vmatprep.subr.mxu0 0.0
  %1411 = vmatpush2.msra.mxu0 0.0
  %1412 = vmatprep.subr.mxu0 0.0
  %1413 = vmatpush2.msra.mxu0 0.0
  %1414 = vmatprep.subr.mxu0 0.0
  %1415 = vmatpush2.msra.mxu0 0.0
  %1416 = vmatprep.subr.mxu0 0.0
  %1417 = vmatpush2.msra.mxu0 0.0
  %1418 = vmatprep.subr.mxu0 0.0
  %1419 = vmatpush2.msra.mxu0 0.0
  %1420 = vmatprep.subr.mxu0 0.0
  %1421 = vmatpush2.msra.mxu0 0.0
  %1422 = vmatprep.subr.mxu0 0.0
  %1423 = vmatpush2.msra.mxu0 0.0
  %1424 = vmatprep.subr.mxu0 0.0
  %1425 = vmatpush2.msra.mxu0 0.0
  %1426 = vmatprep.subr.mxu0 0.0
  %1427 = vmatpush2.msra.mxu0 0.0
  %1428 = vmatprep.subr.mxu0 0.0
  %1429 = vmatpush2.msra.mxu0 0.0
  %1430 = vmatprep.subr.mxu0 0.0
  %1431 = vmatpush2.msra.mxu0 0.0
  %1432 = vmatprep.subr.mxu0 0.0
  %1433 = vmatpush2.msra.mxu0 0.0
  %1434 = vmatprep.subr.mxu0 0.0
  %1435 = vmatpush2.msra.mxu0 0.0
  %1436 = vmatprep.subr.mxu0 0.0
  %1437 = vmatpush2.msra.mxu0 0.0
  %1438 = vmatprep.mubr.f32.mxu0 0.0
  %1439 = vmatmul.mubr.f32.gmra.mxu0 %v1300
  %v1440 = vpop.f32.mrf.mxu0
  %v1441 = vadd.f32 0.0, %v1440
  %v1442 = vpop.f32.mrf.mxu0
  %v1443 = vadd.f32 0.0, %v1442
  %1444 = vdwg.mxu0
  %1445 = vmatprep.subr.mxu0 %v1373
  %1446 = vmatpush1.msra.mxu0 %v1372
  %1447 = vmatprep.subr.mxu0 %v1369
  %1448 = vmatpush1.msra.mxu0 %v1368
  %1449 = vmatprep.subr.mxu0 %v1365
  %1450 = vmatpush1.msra.mxu0 %v1364
  %1451 = vmatprep.subr.mxu0 %v1361
  %1452 = vmatpush1.msra.mxu0 %v1360
  %1453 = vmatprep.subr.mxu0 %v1357
  %1454 = vmatpush1.msra.mxu0 %v1356
  %1455 = vmatprep.subr.mxu0 %v1353
  %1456 = vmatpush1.msra.mxu0 %v1352
  %1457 = vmatprep.subr.mxu0 %v1349
  %1458 = vmatpush1.msra.mxu0 %v1348
  %1459 = vmatprep.subr.mxu0 %v1345
  %1460 = vmatpush1.msra.mxu0 %v1344
  %1461 = vmatprep.subr.mxu0 %v1341
  %1462 = vmatpush1.msra.mxu0 %v1340
  %1463 = vmatprep.subr.mxu0 %v1337
  %1464 = vmatpush1.msra.mxu0 %v1336
  %1465 = vmatprep.subr.mxu0 %v1333
  %1466 = vmatpush1.msra.mxu0 %v1332
  %1467 = vmatprep.subr.mxu0 %v1329
  %1468 = vmatpush1.msra.mxu0 %v1328
  %1469 = vmatprep.subr.mxu0 %v1325
  %1470 = vmatpush1.msra.mxu0 %v1324
  %1471 = vmatprep.subr.mxu0 %v1321
  %1472 = vmatpush1.msra.mxu0 %v1320
  %1473 = vmatprep.subr.mxu0 %v1317
  %1474 = vmatpush1.msra.mxu0 %v1316
  %1475 = vmatprep.subr.mxu0 %v1313
  %1476 = vmatpush1.msra.mxu0 %v1312
  %1477 = vmatprep.subr.mxu0 0.0
  %1478 = vmatpush2.msra.mxu0 0.0
  %1479 = vmatprep.subr.mxu0 0.0
  %1480 = vmatpush2.msra.mxu0 0.0
  %1481 = vmatprep.subr.mxu0 0.0
  %1482 = vmatpush2.msra.mxu0 0.0
  %1483 = vmatprep.subr.mxu0 0.0
  %1484 = vmatpush2.msra.mxu0 0.0
  %1485 = vmatprep.subr.mxu0 0.0
  %1486 = vmatpush2.msra.mxu0 0.0
  %1487 = vmatprep.subr.mxu0 0.0
  %1488 = vmatpush2.msra.mxu0 0.0
  %1489 = vmatprep.subr.mxu0 0.0
  %1490 = vmatpush2.msra.mxu0 0.0
  %1491 = vmatprep.subr.mxu0 0.0
  %1492 = vmatpush2.msra.mxu0 0.0
  %1493 = vmatprep.subr.mxu0 0.0
  %1494 = vmatpush2.msra.mxu0 0.0
  %1495 = vmatprep.subr.mxu0 0.0
  %1496 = vmatpush2.msra.mxu0 0.0
  %1497 = vmatprep.subr.mxu0 0.0
  %1498 = vmatpush2.msra.mxu0 0.0
  %1499 = vmatprep.subr.mxu0 0.0
  %1500 = vmatpush2.msra.mxu0 0.0
  %1501 = vmatprep.subr.mxu0 0.0
  %1502 = vmatpush2.msra.mxu0 0.0
  %1503 = vmatprep.subr.mxu0 0.0
  %1504 = vmatpush2.msra.mxu0 0.0
  %1505 = vmatprep.subr.mxu0 0.0
  %1506 = vmatpush2.msra.mxu0 0.0
  %1507 = vmatprep.subr.mxu0 0.0
  %1508 = vmatpush2.msra.mxu0 0.0
  %1509 = vmatprep.mubr.f32.mxu0 0.0
  %1510 = vmatmul.mubr.f32.gmra.mxu0 %v1300
  %v1511 = vpop.f32.mrf.mxu0
  %v1512 = vadd.f32 0.0, %v1511
  %v1513 = vpop.f32.mrf.mxu0
  %v1514 = vadd.f32 0.0, %v1513
  %1515 = vdwg.mxu0
  %v1516 = vadd.f32 %v1306, %v1441
  %v1517 = vadd.f32 %v1307, %v1443
  %v1518 = vadd.f32 %v1308, %v1512
  %v1519 = vadd.f32 %v1309, %v1514
  %v1520 = vmul.f32 %v1516, 0.5
  %v1521 = vtanh.pop %v1520
  %v1522 = vmul.f32 %v1521, 0.5
  %v1523 = vadd.f32 %v1522, 0.5
  %v1524 = vmul.f32 %v1517, 0.5
  %v1525 = vtanh.pop %v1524
  %v1526 = vmul.f32 %v1525, 0.5
  %v1527 = vadd.f32 %v1526, 0.5
  %v1528 = vtanh.pop %v1518
  %v1529 = vmul.f32 %v1519, 0.5
  %v1530 = vtanh.pop %v1529
  %v1531 = vmul.f32 %v1530, 0.5
  %v1532 = vadd.f32 %v1531, 0.5
  %v1533 = vmul.f32 %v1527, %v1298
  %v1534 = vmul.f32 %v1523, %v1528
  %v1535 = vadd.f32 %v1533, %v1534
  %v1536 = vtanh.pop %v1535
  %v1537 = vmul.f32 %v1532, %v1536
  %s1538 = scalar_lea.vmem %s6, 32
  %1539 = vst [vmem:[%s1538] sm:$0xff] %v1537
  %s1540 = smul.u32 5, 4
  %s1541 = smul.addr %s1540, 8
  %s1542 = scalar_lea.vmem [#allocation2], %s1541
  %v1543 = vld [vmem:[%s1542] sm:$0xff]
  %v1544 = vld [vmem:[%s1542 + $0x8] sm:$0xff]
  %v1545 = vld [vmem:[%s1542 + $0x10] sm:$0xff]
  %v1546 = vld [vmem:[%s1542 + $0x18] sm:$0xff]
  %v1547 = vld [vmem:[%s3] sm:$0xff]
  %v1548 = vld [vmem:[%s3 + $0x8] sm:$0xff]
  %v1549 = vld [vmem:[%s3 + $0x10] sm:$0xff]
  %v1550 = vld [vmem:[%s3 + $0x18] sm:$0xff]
  %v1551 = vld [vmem:[%s3 + $0x20] sm:$0xff]
  %v1552 = vld [vmem:[%s3 + $0x28] sm:$0xff]
  %v1553 = vld [vmem:[%s3 + $0x30] sm:$0xff]
  %v1554 = vld [vmem:[%s3 + $0x38] sm:$0xff]
  %v1555 = vld [vmem:[%s3 + $0x40] sm:$0xff]
  %v1556 = vld [vmem:[%s3 + $0x48] sm:$0xff]
  %v1557 = vld [vmem:[%s3 + $0x50] sm:$0xff]
  %v1558 = vld [vmem:[%s3 + $0x58] sm:$0xff]
  %v1559 = vld [vmem:[%s3 + $0x60] sm:$0xff]
  %v1560 = vld [vmem:[%s3 + $0x68] sm:$0xff]
  %v1561 = vld [vmem:[%s3 + $0x70] sm:$0xff]
  %v1562 = vld [vmem:[%s3 + $0x78] sm:$0xff]
  %v1563 = vld [vmem:[%s3 + $0x80] sm:$0xff]
  %v1564 = vld [vmem:[%s3 + $0x88] sm:$0xff]
  %v1565 = vld [vmem:[%s3 + $0x90] sm:$0xff]
  %v1566 = vld [vmem:[%s3 + $0x98] sm:$0xff]
  %v1567 = vld [vmem:[%s3 + $0xa0] sm:$0xff]
  %v1568 = vld [vmem:[%s3 + $0xa8] sm:$0xff]
  %v1569 = vld [vmem:[%s3 + $0xb0] sm:$0xff]
  %v1570 = vld [vmem:[%s3 + $0xb8] sm:$0xff]
  %v1571 = vld [vmem:[%s3 + $0xc0] sm:$0xff]
  %v1572 = vld [vmem:[%s3 + $0xc8] sm:$0xff]
  %v1573 = vld [vmem:[%s3 + $0xd0] sm:$0xff]
  %v1574 = vld [vmem:[%s3 + $0xd8] sm:$0xff]
  %v1575 = vld [vmem:[%s3 + $0xe0] sm:$0xff]
  %v1576 = vld [vmem:[%s3 + $0xe8] sm:$0xff]
  %v1577 = vld [vmem:[%s3 + $0xf0] sm:$0xff]
  %v1578 = vld [vmem:[%s3 + $0xf8] sm:$0xff]
  %v1579 = vld [vmem:[%s3 + $0x100] sm:$0xff]
  %v1580 = vld [vmem:[%s3 + $0x108] sm:$0xff]
  %v1581 = vld [vmem:[%s3 + $0x110] sm:$0xff]
  %v1582 = vld [vmem:[%s3 + $0x118] sm:$0xff]
  %v1583 = vld [vmem:[%s3 + $0x120] sm:$0xff]
  %v1584 = vld [vmem:[%s3 + $0x128] sm:$0xff]
  %v1585 = vld [vmem:[%s3 + $0x130] sm:$0xff]
  %v1586 = vld [vmem:[%s3 + $0x138] sm:$0xff]
  %v1587 = vld [vmem:[%s3 + $0x140] sm:$0xff]
  %v1588 = vld [vmem:[%s3 + $0x148] sm:$0xff]
  %v1589 = vld [vmem:[%s3 + $0x150] sm:$0xff]
  %v1590 = vld [vmem:[%s3 + $0x158] sm:$0xff]
  %v1591 = vld [vmem:[%s3 + $0x160] sm:$0xff]
  %v1592 = vld [vmem:[%s3 + $0x168] sm:$0xff]
  %v1593 = vld [vmem:[%s3 + $0x170] sm:$0xff]
  %v1594 = vld [vmem:[%s3 + $0x178] sm:$0xff]
  %v1595 = vld [vmem:[%s3 + $0x180] sm:$0xff]
  %v1596 = vld [vmem:[%s3 + $0x188] sm:$0xff]
  %v1597 = vld [vmem:[%s3 + $0x190] sm:$0xff]
  %v1598 = vld [vmem:[%s3 + $0x198] sm:$0xff]
  %v1599 = vld [vmem:[%s3 + $0x1a0] sm:$0xff]
  %v1600 = vld [vmem:[%s3 + $0x1a8] sm:$0xff]
  %v1601 = vld [vmem:[%s3 + $0x1b0] sm:$0xff]
  %v1602 = vld [vmem:[%s3 + $0x1b8] sm:$0xff]
  %v1603 = vld [vmem:[%s3 + $0x1c0] sm:$0xff]
  %v1604 = vld [vmem:[%s3 + $0x1c8] sm:$0xff]
  %v1605 = vld [vmem:[%s3 + $0x1d0] sm:$0xff]
  %v1606 = vld [vmem:[%s3 + $0x1d8] sm:$0xff]
  %v1607 = vld [vmem:[%s3 + $0x1e0] sm:$0xff]
  %v1608 = vld [vmem:[%s3 + $0x1e8] sm:$0xff]
  %v1609 = vld [vmem:[%s3 + $0x1f0] sm:$0xff]
  %v1610 = vld [vmem:[%s3 + $0x1f8] sm:$0xff]
  %1611 = vmatprep.subr.mxu0 %v1608
  %1612 = vmatpush1.msra.mxu0 %v1607
  %1613 = vmatprep.subr.mxu0 %v1604
  %1614 = vmatpush1.msra.mxu0 %v1603
  %1615 = vmatprep.subr.mxu0 %v1600
  %1616 = vmatpush1.msra.mxu0 %v1599
  %1617 = vmatprep.subr.mxu0 %v1596
  %1618 = vmatpush1.msra.mxu0 %v1595
  %1619 = vmatprep.subr.mxu0 %v1592
  %1620 = vmatpush1.msra.mxu0 %v1591
  %1621 = vmatprep.subr.mxu0 %v1588
  %1622 = vmatpush1.msra.mxu0 %v1587
  %1623 = vmatprep.subr.mxu0 %v1584
  %1624 = vmatpush1.msra.mxu0 %v1583
  %1625 = vmatprep.subr.mxu0 %v1580
  %1626 = vmatpush1.msra.mxu0 %v1579
  %1627 = vmatprep.subr.mxu0 %v1576
  %1628 = vmatpush1.msra.mxu0 %v1575
  %1629 = vmatprep.subr.mxu0 %v1572
  %1630 = vmatpush1.msra.mxu0 %v1571
  %1631 = vmatprep.subr.mxu0 %v1568
  %1632 = vmatpush1.msra.mxu0 %v1567
  %1633 = vmatprep.subr.mxu0 %v1564
  %1634 = vmatpush1.msra.mxu0 %v1563
  %1635 = vmatprep.subr.mxu0 %v1560
  %1636 = vmatpush1.msra.mxu0 %v1559
  %1637 = vmatprep.subr.mxu0 %v1556
  %1638 = vmatpush1.msra.mxu0 %v1555
  %1639 = vmatprep.subr.mxu0 %v1552
  %1640 = vmatpush1.msra.mxu0 %v1551
  %1641 = vmatprep.subr.mxu0 %v1548
  %1642 = vmatpush1.msra.mxu0 %v1547
  %1643 = vmatprep.subr.mxu0 0.0
  %1644 = vmatpush2.msra.mxu0 0.0
  %1645 = vmatprep.subr.mxu0 0.0
  %1646 = vmatpush2.msra.mxu0 0.0
  %1647 = vmatprep.subr.mxu0 0.0
  %1648 = vmatpush2.msra.mxu0 0.0
  %1649 = vmatprep.subr.mxu0 0.0
  %1650 = vmatpush2.msra.mxu0 0.0
  %1651 = vmatprep.subr.mxu0 0.0
  %1652 = vmatpush2.msra.mxu0 0.0
  %1653 = vmatprep.subr.mxu0 0.0
  %1654 = vmatpush2.msra.mxu0 0.0
  %1655 = vmatprep.subr.mxu0 0.0
  %1656 = vmatpush2.msra.mxu0 0.0
  %1657 = vmatprep.subr.mxu0 0.0
  %1658 = vmatpush2.msra.mxu0 0.0
  %1659 = vmatprep.subr.mxu0 0.0
  %1660 = vmatpush2.msra.mxu0 0.0
  %1661 = vmatprep.subr.mxu0 0.0
  %1662 = vmatpush2.msra.mxu0 0.0
  %1663 = vmatprep.subr.mxu0 0.0
  %1664 = vmatpush2.msra.mxu0 0.0
  %1665 = vmatprep.subr.mxu0 0.0
  %1666 = vmatpush2.msra.mxu0 0.0
  %1667 = vmatprep.subr.mxu0 0.0
  %1668 = vmatpush2.msra.mxu0 0.0
  %1669 = vmatprep.subr.mxu0 0.0
  %1670 = vmatpush2.msra.mxu0 0.0
  %1671 = vmatprep.subr.mxu0 0.0
  %1672 = vmatpush2.msra.mxu0 0.0
  %1673 = vmatprep.subr.mxu0 0.0
  %1674 = vmatpush2.msra.mxu0 0.0
  %1675 = vmatprep.mubr.f32.mxu0 0.0
  %1676 = vmatmul.mubr.f32.gmra.mxu0 %v1537
  %v1677 = vpop.f32.mrf.mxu0
  %v1678 = vadd.f32 0.0, %v1677
  %v1679 = vpop.f32.mrf.mxu0
  %v1680 = vadd.f32 0.0, %v1679
  %1681 = vdwg.mxu0
  %1682 = vmatprep.subr.mxu0 %v1610
  %1683 = vmatpush1.msra.mxu0 %v1609
  %1684 = vmatprep.subr.mxu0 %v1606
  %1685 = vmatpush1.msra.mxu0 %v1605
  %1686 = vmatprep.subr.mxu0 %v1602
  %1687 = vmatpush1.msra.mxu0 %v1601
  %1688 = vmatprep.subr.mxu0 %v1598
  %1689 = vmatpush1.msra.mxu0 %v1597
  %1690 = vmatprep.subr.mxu0 %v1594
  %1691 = vmatpush1.msra.mxu0 %v1593
  %1692 = vmatprep.subr.mxu0 %v1590
  %1693 = vmatpush1.msra.mxu0 %v1589
  %1694 = vmatprep.subr.mxu0 %v1586
  %1695 = vmatpush1.msra.mxu0 %v1585
  %1696 = vmatprep.subr.mxu0 %v1582
  %1697 = vmatpush1.msra.mxu0 %v1581
  %1698 = vmatprep.subr.mxu0 %v1578
  %1699 = vmatpush1.msra.mxu0 %v1577
  %1700 = vmatprep.subr.mxu0 %v1574
  %1701 = vmatpush1.msra.mxu0 %v1573
  %1702 = vmatprep.subr.mxu0 %v1570
  %1703 = vmatpush1.msra.mxu0 %v1569
  %1704 = vmatprep.subr.mxu0 %v1566
  %1705 = vmatpush1.msra.mxu0 %v1565
  %1706 = vmatprep.subr.mxu0 %v1562
  %1707 = vmatpush1.msra.mxu0 %v1561
  %1708 = vmatprep.subr.mxu0 %v1558
  %1709 = vmatpush1.msra.mxu0 %v1557
  %1710 = vmatprep.subr.mxu0 %v1554
  %1711 = vmatpush1.msra.mxu0 %v1553
  %1712 = vmatprep.subr.mxu0 %v1550
  %1713 = vmatpush1.msra.mxu0 %v1549
  %1714 = vmatprep.subr.mxu0 0.0
  %1715 = vmatpush2.msra.mxu0 0.0
  %1716 = vmatprep.subr.mxu0 0.0
  %1717 = vmatpush2.msra.mxu0 0.0
  %1718 = vmatprep.subr.mxu0 0.0
  %1719 = vmatpush2.msra.mxu0 0.0
  %1720 = vmatprep.subr.mxu0 0.0
  %1721 = vmatpush2.msra.mxu0 0.0
  %1722 = vmatprep.subr.mxu0 0.0
  %1723 = vmatpush2.msra.mxu0 0.0
  %1724 = vmatprep.subr.mxu0 0.0
  %1725 = vmatpush2.msra.mxu0 0.0
  %1726 = vmatprep.subr.mxu0 0.0
  %1727 = vmatpush2.msra.mxu0 0.0
  %1728 = vmatprep.subr.mxu0 0.0
  %1729 = vmatpush2.msra.mxu0 0.0
  %1730 = vmatprep.subr.mxu0 0.0
  %1731 = vmatpush2.msra.mxu0 0.0
  %1732 = vmatprep.subr.mxu0 0.0
  %1733 = vmatpush2.msra.mxu0 0.0
  %1734 = vmatprep.subr.mxu0 0.0
  %1735 = vmatpush2.msra.mxu0 0.0
  %1736 = vmatprep.subr.mxu0 0.0
  %1737 = vmatpush2.msra.mxu0 0.0
  %1738 = vmatprep.subr.mxu0 0.0
  %1739 = vmatpush2.msra.mxu0 0.0
  %1740 = vmatprep.subr.mxu0 0.0
  %1741 = vmatpush2.msra.mxu0 0.0
  %1742 = vmatprep.subr.mxu0 0.0
  %1743 = vmatpush2.msra.mxu0 0.0
  %1744 = vmatprep.subr.mxu0 0.0
  %1745 = vmatpush2.msra.mxu0 0.0
  %1746 = vmatprep.mubr.f32.mxu0 0.0
  %1747 = vmatmul.mubr.f32.gmra.mxu0 %v1537
  %v1748 = vpop.f32.mrf.mxu0
  %v1749 = vadd.f32 0.0, %v1748
  %v1750 = vpop.f32.mrf.mxu0
  %v1751 = vadd.f32 0.0, %v1750
  %1752 = vdwg.mxu0
  %v1753 = vadd.f32 %v1543, %v1678
  %v1754 = vadd.f32 %v1544, %v1680
  %v1755 = vadd.f32 %v1545, %v1749
  %v1756 = vadd.f32 %v1546, %v1751
  %v1757 = vmul.f32 %v1753, 0.5
  %v1758 = vtanh.pop %v1757
  %v1759 = vmul.f32 %v1758, 0.5
  %v1760 = vadd.f32 %v1759, 0.5
  %v1761 = vmul.f32 %v1754, 0.5
  %v1762 = vtanh.pop %v1761
  %v1763 = vmul.f32 %v1762, 0.5
  %v1764 = vadd.f32 %v1763, 0.5
  %v1765 = vtanh.pop %v1755
  %v1766 = vmul.f32 %v1756, 0.5
  %v1767 = vtanh.pop %v1766
  %v1768 = vmul.f32 %v1767, 0.5
  %v1769 = vadd.f32 %v1768, 0.5
  %v1770 = vmul.f32 %v1764, %v1535
  %v1771 = vmul.f32 %v1760, %v1765
  %v1772 = vadd.f32 %v1770, %v1771
  %v1773 = vtanh.pop %v1772
  %v1774 = vmul.f32 %v1769, %v1773
  %s1775 = scalar_lea.vmem %s6, 40
  %1776 = vst [vmem:[%s1775] sm:$0xff] %v1774
  %s1777 = smul.u32 6, 4
  %s1778 = smul.addr %s1777, 8
  %s1779 = scalar_lea.vmem [#allocation2], %s1778
  %v1780 = vld [vmem:[%s1779] sm:$0xff]
  %v1781 = vld [vmem:[%s1779 + $0x8] sm:$0xff]
  %v1782 = vld [vmem:[%s1779 + $0x10] sm:$0xff]
  %v1783 = vld [vmem:[%s1779 + $0x18] sm:$0xff]
  %v1784 = vld [vmem:[%s3] sm:$0xff]
  %v1785 = vld [vmem:[%s3 + $0x8] sm:$0xff]
  %v1786 = vld [vmem:[%s3 + $0x10] sm:$0xff]
  %v1787 = vld [vmem:[%s3 + $0x18] sm:$0xff]
  %v1788 = vld [vmem:[%s3 + $0x20] sm:$0xff]
  %v1789 = vld [vmem:[%s3 + $0x28] sm:$0xff]
  %v1790 = vld [vmem:[%s3 + $0x30] sm:$0xff]
  %v1791 = vld [vmem:[%s3 + $0x38] sm:$0xff]
  %v1792 = vld [vmem:[%s3 + $0x40] sm:$0xff]
  %v1793 = vld [vmem:[%s3 + $0x48] sm:$0xff]
  %v1794 = vld [vmem:[%s3 + $0x50] sm:$0xff]
  %v1795 = vld [vmem:[%s3 + $0x58] sm:$0xff]
  %v1796 = vld [vmem:[%s3 + $0x60] sm:$0xff]
  %v1797 = vld [vmem:[%s3 + $0x68] sm:$0xff]
  %v1798 = vld [vmem:[%s3 + $0x70] sm:$0xff]
  %v1799 = vld [vmem:[%s3 + $0x78] sm:$0xff]
  %v1800 = vld [vmem:[%s3 + $0x80] sm:$0xff]
  %v1801 = vld [vmem:[%s3 + $0x88] sm:$0xff]
  %v1802 = vld [vmem:[%s3 + $0x90] sm:$0xff]
  %v1803 = vld [vmem:[%s3 + $0x98] sm:$0xff]
  %v1804 = vld [vmem:[%s3 + $0xa0] sm:$0xff]
  %v1805 = vld [vmem:[%s3 + $0xa8] sm:$0xff]
  %v1806 = vld [vmem:[%s3 + $0xb0] sm:$0xff]
  %v1807 = vld [vmem:[%s3 + $0xb8] sm:$0xff]
  %v1808 = vld [vmem:[%s3 + $0xc0] sm:$0xff]
  %v1809 = vld [vmem:[%s3 + $0xc8] sm:$0xff]
  %v1810 = vld [vmem:[%s3 + $0xd0] sm:$0xff]
  %v1811 = vld [vmem:[%s3 + $0xd8] sm:$0xff]
  %v1812 = vld [vmem:[%s3 + $0xe0] sm:$0xff]
  %v1813 = vld [vmem:[%s3 + $0xe8] sm:$0xff]
  %v1814 = vld [vmem:[%s3 + $0xf0] sm:$0xff]
  %v1815 = vld [vmem:[%s3 + $0xf8] sm:$0xff]
  %v1816 = vld [vmem:[%s3 + $0x100] sm:$0xff]
  %v1817 = vld [vmem:[%s3 + $0x108] sm:$0xff]
  %v1818 = vld [vmem:[%s3 + $0x110] sm:$0xff]
  %v1819 = vld [vmem:[%s3 + $0x118] sm:$0xff]
  %v1820 = vld [vmem:[%s3 + $0x120] sm:$0xff]
  %v1821 = vld [vmem:[%s3 + $0x128] sm:$0xff]
  %v1822 = vld [vmem:[%s3 + $0x130] sm:$0xff]
  %v1823 = vld [vmem:[%s3 + $0x138] sm:$0xff]
  %v1824 = vld [vmem:[%s3 + $0x140] sm:$0xff]
  %v1825 = vld [vmem:[%s3 + $0x148] sm:$0xff]
  %v1826 = vld [vmem:[%s3 + $0x150] sm:$0xff]
  %v1827 = vld [vmem:[%s3 + $0x158] sm:$0xff]
  %v1828 = vld [vmem:[%s3 + $0x160] sm:$0xff]
  %v1829 = vld [vmem:[%s3 + $0x168] sm:$0xff]
  %v1830 = vld [vmem:[%s3 + $0x170] sm:$0xff]
  %v1831 = vld [vmem:[%s3 + $0x178] sm:$0xff]
  %v1832 = vld [vmem:[%s3 + $0x180] sm:$0xff]
  %v1833 = vld [vmem:[%s3 + $0x188] sm:$0xff]
  %v1834 = vld [vmem:[%s3 + $0x190] sm:$0xff]
  %v1835 = vld [vmem:[%s3 + $0x198] sm:$0xff]
  %v1836 = vld [vmem:[%s3 + $0x1a0] sm:$0xff]
  %v1837 = vld [vmem:[%s3 + $0x1a8] sm:$0xff]
  %v1838 = vld [vmem:[%s3 + $0x1b0] sm:$0xff]
  %v1839 = vld [vmem:[%s3 + $0x1b8] sm:$0xff]
  %v1840 = vld [vmem:[%s3 + $0x1c0] sm:$0xff]
  %v1841 = vld [vmem:[%s3 + $0x1c8] sm:$0xff]
  %v1842 = vld [vmem:[%s3 + $0x1d0] sm:$0xff]
  %v1843 = vld [vmem:[%s3 + $0x1d8] sm:$0xff]
  %v1844 = vld [vmem:[%s3 + $0x1e0] sm:$0xff]
  %v1845 = vld [vmem:[%s3 + $0x1e8] sm:$0xff]
  %v1846 = vld [vmem:[%s3 + $0x1f0] sm:$0xff]
  %v1847 = vld [vmem:[%s3 + $0x1f8] sm:$0xff]
  %1848 = vmatprep.subr.mxu0 %v1845
  %1849 = vmatpush1.msra.mxu0 %v1844
  %1850 = vmatprep.subr.mxu0 %v1841
  %1851 = vmatpush1.msra.mxu0 %v1840
  %1852 = vmatprep.subr.mxu0 %v1837
  %1853 = vmatpush1.msra.mxu0 %v1836
  %1854 = vmatprep.subr.mxu0 %v1833
  %1855 = vmatpush1.msra.mxu0 %v1832
  %1856 = vmatprep.subr.mxu0 %v1829
  %1857 = vmatpush1.msra.mxu0 %v1828
  %1858 = vmatprep.subr.mxu0 %v1825
  %1859 = vmatpush1.msra.mxu0 %v1824
  %1860 = vmatprep.subr.mxu0 %v1821
  %1861 = vmatpush1.msra.mxu0 %v1820
  %1862 = vmatprep.subr.mxu0 %v1817
  %1863 = vmatpush1.msra.mxu0 %v1816
  %1864 = vmatprep.subr.mxu0 %v1813
  %1865 = vmatpush1.msra.mxu0 %v1812
  %1866 = vmatprep.subr.mxu0 %v1809
  %1867 = vmatpush1.msra.mxu0 %v1808
  %1868 = vmatprep.subr.mxu0 %v1805
  %1869 = vmatpush1.msra.mxu0 %v1804
  %1870 = vmatprep.subr.mxu0 %v1801
  %1871 = vmatpush1.msra.mxu0 %v1800
  %1872 = vmatprep.subr.mxu0 %v1797
  %1873 = vmatpush1.msra.mxu0 %v1796
  %1874 = vmatprep.subr.mxu0 %v1793
  %1875 = vmatpush1.msra.mxu0 %v1792
  %1876 = vmatprep.subr.mxu0 %v1789
  %1877 = vmatpush1.msra.mxu0 %v1788
  %1878 = vmatprep.subr.mxu0 %v1785
  %1879 = vmatpush1.msra.mxu0 %v1784
  %1880 = vmatprep.subr.mxu0 0.0
  %1881 = vmatpush2.msra.mxu0 0.0
  %1882 = vmatprep.subr.mxu0 0.0
  %1883 = vmatpush2.msra.mxu0 0.0
  %1884 = vmatprep.subr.mxu0 0.0
  %1885 = vmatpush2.msra.mxu0 0.0
  %1886 = vmatprep.subr.mxu0 0.0
  %1887 = vmatpush2.msra.mxu0 0.0
  %1888 = vmatprep.subr.mxu0 0.0
  %1889 = vmatpush2.msra.mxu0 0.0
  %1890 = vmatprep.subr.mxu0 0.0
  %1891 = vmatpush2.msra.mxu0 0.0
  %1892 = vmatprep.subr.mxu0 0.0
  %1893 = vmatpush2.msra.mxu0 0.0
  %1894 = vmatprep.subr.mxu0 0.0
  %1895 = vmatpush2.msra.mxu0 0.0
  %1896 = vmatprep.subr.mxu0 0.0
  %1897 = vmatpush2.msra.mxu0 0.0
  %1898 = vmatprep.subr.mxu0 0.0
  %1899 = vmatpush2.msra.mxu0 0.0
  %1900 = vmatprep.subr.mxu0 0.0
  %1901 = vmatpush2.msra.mxu0 0.0
  %1902 = vmatprep.subr.mxu0 0.0
  %1903 = vmatpush2.msra.mxu0 0.0
  %1904 = vmatprep.subr.mxu0 0.0
  %1905 = vmatpush2.msra.mxu0 0.0
  %1906 = vmatprep.subr.mxu0 0.0
  %1907 = vmatpush2.msra.mxu0 0.0
  %1908 = vmatprep.subr.mxu0 0.0
  %1909 = vmatpush2.msra.mxu0 0.0
  %1910 = vmatprep.subr.mxu0 0.0
  %1911 = vmatpush2.msra.mxu0 0.0
  %1912 = vmatprep.mubr.f32.mxu0 0.0
  %1913 = vmatmul.mubr.f32.gmra.mxu0 %v1774
  %v1914 = vpop.f32.mrf.mxu0
  %v1915 = vadd.f32 0.0, %v1914
  %v1916 = vpop.f32.mrf.mxu0
  %v1917 = vadd.f32 0.0, %v1916
  %1918 = vdwg.mxu0
  %1919 = vmatprep.subr.mxu0 %v1847
  %1920 = vmatpush1.msra.mxu0 %v1846
  %1921 = vmatprep.subr.mxu0 %v1843
  %1922 = vmatpush1.msra.mxu0 %v1842
  %1923 = vmatprep.subr.mxu0 %v1839
  %1924 = vmatpush1.msra.mxu0 %v1838
  %1925 = vmatprep.subr.mxu0 %v1835
  %1926 = vmatpush1.msra.mxu0 %v1834
  %1927 = vmatprep.subr.mxu0 %v1831
  %1928 = vmatpush1.msra.mxu0 %v1830
  %1929 = vmatprep.subr.mxu0 %v1827
  %1930 = vmatpush1.msra.mxu0 %v1826
  %1931 = vmatprep.subr.mxu0 %v1823
  %1932 = vmatpush1.msra.mxu0 %v1822
  %1933 = vmatprep.subr.mxu0 %v1819
  %1934 = vmatpush1.msra.mxu0 %v1818
  %1935 = vmatprep.subr.mxu0 %v1815
  %1936 = vmatpush1.msra.mxu0 %v1814
  %1937 = vmatprep.subr.mxu0 %v1811
  %1938 = vmatpush1.msra.mxu0 %v1810
  %1939 = vmatprep.subr.mxu0 %v1807
  %1940 = vmatpush1.msra.mxu0 %v1806
  %1941 = vmatprep.subr.mxu0 %v1803
  %1942 = vmatpush1.msra.mxu0 %v1802
  %1943 = vmatprep.subr.mxu0 %v1799
  %1944 = vmatpush1.msra.mxu0 %v1798
  %1945 = vmatprep.subr.mxu0 %v1795
  %1946 = vmatpush1.msra.mxu0 %v1794
  %1947 = vmatprep.subr.mxu0 %v1791
  %1948 = vmatpush1.msra.mxu0 %v1790
  %1949 = vmatprep.subr.mxu0 %v1787
  %1950 = vmatpush1.msra.mxu0 %v1786
  %1951 = vmatprep.subr.mxu0 0.0
  %1952 = vmatpush2.msra.mxu0 0.0
  %1953 = vmatprep.subr.mxu0 0.0
  %1954 = vmatpush2.msra.mxu0 0.0
  %1955 = vmatprep.subr.mxu0 0.0
  %1956 = vmatpush2.msra.mxu0 0.0
  %1957 = vmatprep.subr.mxu0 0.0
  %1958 = vmatpush2.msra.mxu0 0.0
  %1959 = vmatprep.subr.mxu0 0.0
  %1960 = vmatpush2.msra.mxu0 0.0
  %1961 = vmatprep.subr.mxu0 0.0
  %1962 = vmatpush2.msra.mxu0 0.0
  %1963 = vmatprep.subr.mxu0 0.0
  %1964 = vmatpush2.msra.mxu0 0.0
  %1965 = vmatprep.subr.mxu0 0.0
  %1966 = vmatpush2.msra.mxu0 0.0
  %1967 = vmatprep.subr.mxu0 0.0
  %1968 = vmatpush2.msra.mxu0 0.0
  %1969 = vmatprep.subr.mxu0 0.0
  %1970 = vmatpush2.msra.mxu0 0.0
  %1971 = vmatprep.subr.mxu0 0.0
  %1972 = vmatpush2.msra.mxu0 0.0
  %1973 = vmatprep.subr.mxu0 0.0
  %1974 = vmatpush2.msra.mxu0 0.0
  %1975 = vmatprep.subr.mxu0 0.0
  %1976 = vmatpush2.msra.mxu0 0.0
  %1977 = vmatprep.subr.mxu0 0.0
  %1978 = vmatpush2.msra.mxu0 0.0
  %1979 = vmatprep.subr.mxu0 0.0
  %1980 = vmatpush2.msra.mxu0 0.0
  %1981 = vmatprep.subr.mxu0 0.0
  %1982 = vmatpush2.msra.mxu0 0.0
  %1983 = vmatprep.mubr.f32.mxu0 0.0
  %1984 = vmatmul.mubr.f32.gmra.mxu0 %v1774
  %v1985 = vpop.f32.mrf.mxu0
  %v1986 = vadd.f32 0.0, %v1985
  %v1987 = vpop.f32.mrf.mxu0
  %v1988 = vadd.f32 0.0, %v1987
  %1989 = vdwg.mxu0
  %v1990 = vadd.f32 %v1780, %v1915
  %v1991 = vadd.f32 %v1781, %v1917
  %v1992 = vadd.f32 %v1782, %v1986
  %v1993 = vadd.f32 %v1783, %v1988
  %v1994 = vmul.f32 %v1990, 0.5
  %v1995 = vtanh.pop %v1994
  %v1996 = vmul.f32 %v1995, 0.5
  %v1997 = vadd.f32 %v1996, 0.5
  %v1998 = vmul.f32 %v1991, 0.5
  %v1999 = vtanh.pop %v1998
  %v2000 = vmul.f32 %v1999, 0.5
  %v2001 = vadd.f32 %v2000, 0.5
  %v2002 = vtanh.pop %v1992
  %v2003 = vmul.f32 %v1993, 0.5
  %v2004 = vtanh.pop %v2003
  %v2005 = vmul.f32 %v2004, 0.5
  %v2006 = vadd.f32 %v2005, 0.5
  %v2007 = vmul.f32 %v2001, %v1772
  %v2008 = vmul.f32 %v1997, %v2002
  %v2009 = vadd.f32 %v2007, %v2008
  %v2010 = vtanh.pop %v2009
  %v2011 = vmul.f32 %v2006, %v2010
  %s2012 = scalar_lea.vmem %s6, 48
  %2013 = vst [vmem:[%s2012] sm:$0xff] %v2011
  %s2014 = smul.u32 7, 4
  %s2015 = smul.addr %s2014, 8
  %s2016 = scalar_lea.vmem [#allocation2], %s2015
  %v2017 = vld [vmem:[%s2016] sm:$0xff]
  %v2018 = vld [vmem:[%s2016 + $0x8] sm:$0xff]
  %v2019 = vld [vmem:[%s2016 + $0x10] sm:$0xff]
  %v2020 = vld [vmem:[%s2016 + $0x18] sm:$0xff]
  %v2021 = vld [vmem:[%s3] sm:$0xff]
  %v2022 = vld [vmem:[%s3 + $0x8] sm:$0xff]
  %v2023 = vld [vmem:[%s3 + $0x10] sm:$0xff]
  %v2024 = vld [vmem:[%s3 + $0x18] sm:$0xff]
  %v2025 = vld [vmem:[%s3 + $0x20] sm:$0xff]
  %v2026 = vld [vmem:[%s3 + $0x28] sm:$0xff]
  %v2027 = vld [vmem:[%s3 + $0x30] sm:$0xff]
  %v2028 = vld [vmem:[%s3 + $0x38] sm:$0xff]
  %v2029 = vld [vmem:[%s3 + $0x40] sm:$0xff]
  %v2030 = vld [vmem:[%s3 + $0x48] sm:$0xff]
  %v2031 = vld [vmem:[%s3 + $0x50] sm:$0xff]
  %v2032 = vld [vmem:[%s3 + $0x58] sm:$0xff]
  %v2033 = vld [vmem:[%s3 + $0x60] sm:$0xff]
  %v2034 = vld [vmem:[%s3 + $0x68] sm:$0xff]
  %v2035 = vld [vmem:[%s3 + $0x70] sm:$0xff]
  %v2036 = vld [vmem:[%s3 + $0x78] sm:$0xff]
  %v2037 = vld [vmem:[%s3 + $0x80] sm:$0xff]
  %v2038 = vld [vmem:[%s3 + $0x88] sm:$0xff]
  %v2039 = vld [vmem:[%s3 + $0x90] sm:$0xff]
  %v2040 = vld [vmem:[%s3 + $0x98] sm:$0xff]
  %v2041 = vld [vmem:[%s3 + $0xa0] sm:$0xff]
  %v2042 = vld [vmem:[%s3 + $0xa8] sm:$0xff]
  %v2043 = vld [vmem:[%s3 + $0xb0] sm:$0xff]
  %v2044 = vld [vmem:[%s3 + $0xb8] sm:$0xff]
  %v2045 = vld [vmem:[%s3 + $0xc0] sm:$0xff]
  %v2046 = vld [vmem:[%s3 + $0xc8] sm:$0xff]
  %v2047 = vld [vmem:[%s3 + $0xd0] sm:$0xff]
  %v2048 = vld [vmem:[%s3 + $0xd8] sm:$0xff]
  %v2049 = vld [vmem:[%s3 + $0xe0] sm:$0xff]
  %v2050 = vld [vmem:[%s3 + $0xe8] sm:$0xff]
  %v2051 = vld [vmem:[%s3 + $0xf0] sm:$0xff]
  %v2052 = vld [vmem:[%s3 + $0xf8] sm:$0xff]
  %v2053 = vld [vmem:[%s3 + $0x100] sm:$0xff]
  %v2054 = vld [vmem:[%s3 + $0x108] sm:$0xff]
  %v2055 = vld [vmem:[%s3 + $0x110] sm:$0xff]
  %v2056 = vld [vmem:[%s3 + $0x118] sm:$0xff]
  %v2057 = vld [vmem:[%s3 + $0x120] sm:$0xff]
  %v2058 = vld [vmem:[%s3 + $0x128] sm:$0xff]
  %v2059 = vld [vmem:[%s3 + $0x130] sm:$0xff]
  %v2060 = vld [vmem:[%s3 + $0x138] sm:$0xff]
  %v2061 = vld [vmem:[%s3 + $0x140] sm:$0xff]
  %v2062 = vld [vmem:[%s3 + $0x148] sm:$0xff]
  %v2063 = vld [vmem:[%s3 + $0x150] sm:$0xff]
  %v2064 = vld [vmem:[%s3 + $0x158] sm:$0xff]
  %v2065 = vld [vmem:[%s3 + $0x160] sm:$0xff]
  %v2066 = vld [vmem:[%s3 + $0x168] sm:$0xff]
  %v2067 = vld [vmem:[%s3 + $0x170] sm:$0xff]
  %v2068 = vld [vmem:[%s3 + $0x178] sm:$0xff]
  %v2069 = vld [vmem:[%s3 + $0x180] sm:$0xff]
  %v2070 = vld [vmem:[%s3 + $0x188] sm:$0xff]
  %v2071 = vld [vmem:[%s3 + $0x190] sm:$0xff]
  %v2072 = vld [vmem:[%s3 + $0x198] sm:$0xff]
  %v2073 = vld [vmem:[%s3 + $0x1a0] sm:$0xff]
  %v2074 = vld [vmem:[%s3 + $0x1a8] sm:$0xff]
  %v2075 = vld [vmem:[%s3 + $0x1b0] sm:$0xff]
  %v2076 = vld [vmem:[%s3 + $0x1b8] sm:$0xff]
  %v2077 = vld [vmem:[%s3 + $0x1c0] sm:$0xff]
  %v2078 = vld [vmem:[%s3 + $0x1c8] sm:$0xff]
  %v2079 = vld [vmem:[%s3 + $0x1d0] sm:$0xff]
  %v2080 = vld [vmem:[%s3 + $0x1d8] sm:$0xff]
  %v2081 = vld [vmem:[%s3 + $0x1e0] sm:$0xff]
  %v2082 = vld [vmem:[%s3 + $0x1e8] sm:$0xff]
  %v2083 = vld [vmem:[%s3 + $0x1f0] sm:$0xff]
  %v2084 = vld [vmem:[%s3 + $0x1f8] sm:$0xff]
  %2085 = vmatprep.subr.mxu0 %v2082
  %2086 = vmatpush1.msra.mxu0 %v2081
  %2087 = vmatprep.subr.mxu0 %v2078
  %2088 = vmatpush1.msra.mxu0 %v2077
  %2089 = vmatprep.subr.mxu0 %v2074
  %2090 = vmatpush1.msra.mxu0 %v2073
  %2091 = vmatprep.subr.mxu0 %v2070
  %2092 = vmatpush1.msra.mxu0 %v2069
  %2093 = vmatprep.subr.mxu0 %v2066
  %2094 = vmatpush1.msra.mxu0 %v2065
  %2095 = vmatprep.subr.mxu0 %v2062
  %2096 = vmatpush1.msra.mxu0 %v2061
  %2097 = vmatprep.subr.mxu0 %v2058
  %2098 = vmatpush1.msra.mxu0 %v2057
  %2099 = vmatprep.subr.mxu0 %v2054
  %2100 = vmatpush1.msra.mxu0 %v2053
  %2101 = vmatprep.subr.mxu0 %v2050
  %2102 = vmatpush1.msra.mxu0 %v2049
  %2103 = vmatprep.subr.mxu0 %v2046
  %2104 = vmatpush1.msra.mxu0 %v2045
  %2105 = vmatprep.subr.mxu0 %v2042
  %2106 = vmatpush1.msra.mxu0 %v2041
  %2107 = vmatprep.subr.mxu0 %v2038
  %2108 = vmatpush1.msra.mxu0 %v2037
  %2109 = vmatprep.subr.mxu0 %v2034
  %2110 = vmatpush1.msra.mxu0 %v2033
  %2111 = vmatprep.subr.mxu0 %v2030
  %2112 = vmatpush1.msra.mxu0 %v2029
  %2113 = vmatprep.subr.mxu0 %v2026
  %2114 = vmatpush1.msra.mxu0 %v2025
  %2115 = vmatprep.subr.mxu0 %v2022
  %2116 = vmatpush1.msra.mxu0 %v2021
  %2117 = vmatprep.subr.mxu0 0.0
  %2118 = vmatpush2.msra.mxu0 0.0
  %2119 = vmatprep.subr.mxu0 0.0
  %2120 = vmatpush2.msra.mxu0 0.0
  %2121 = vmatprep.subr.mxu0 0.0
  %2122 = vmatpush2.msra.mxu0 0.0
  %2123 = vmatprep.subr.mxu0 0.0
  %2124 = vmatpush2.msra.mxu0 0.0
  %2125 = vmatprep.subr.mxu0 0.0
  %2126 = vmatpush2.msra.mxu0 0.0
  %2127 = vmatprep.subr.mxu0 0.0
  %2128 = vmatpush2.msra.mxu0 0.0
  %2129 = vmatprep.subr.mxu0 0.0
  %2130 = vmatpush2.msra.mxu0 0.0
  %2131 = vmatprep.subr.mxu0 0.0
  %2132 = vmatpush2.msra.mxu0 0.0
  %2133 = vmatprep.subr.mxu0 0.0
  %2134 = vmatpush2.msra.mxu0 0.0
  %2135 = vmatprep.subr.mxu0 0.0
  %2136 = vmatpush2.msra.mxu0 0.0
  %2137 = vmatprep.subr.mxu0 0.0
  %2138 = vmatpush2.msra.mxu0 0.0
  %2139 = vmatprep.subr.mxu0 0.0
  %2140 = vmatpush2.msra.mxu0 0.0
  %2141 = vmatprep.subr.mxu0 0.0
  %2142 = vmatpush2.msra.mxu0 0.0
  %2143 = vmatprep.subr.mxu0 0.0
  %2144 = vmatpush2.msra.mxu0 0.0
  %2145 = vmatprep.subr.mxu0 0.0
  %2146 = vmatpush2.msra.mxu0 0.0
  %2147 = vmatprep.subr.mxu0 0.0
  %2148 = vmatpush2.msra.mxu0 0.0
  %2149 = vmatprep.mubr.f32.mxu0 0.0
  %2150 = vmatmul.mubr.f32.gmra.mxu0 %v2011
  %v2151 = vpop.f32.mrf.mxu0
  %v2152 = vadd.f32 0.0, %v2151
  %v2153 = vpop.f32.mrf.mxu0
  %v2154 = vadd.f32 0.0, %v2153
  %2155 = vdwg.mxu0
  %2156 = vmatprep.subr.mxu0 %v2084
  %2157 = vmatpush1.msra.mxu0 %v2083
  %2158 = vmatprep.subr.mxu0 %v2080
  %2159 = vmatpush1.msra.mxu0 %v2079
  %2160 = vmatprep.subr.mxu0 %v2076
  %2161 = vmatpush1.msra.mxu0 %v2075
  %2162 = vmatprep.subr.mxu0 %v2072
  %2163 = vmatpush1.msra.mxu0 %v2071
  %2164 = vmatprep.subr.mxu0 %v2068
  %2165 = vmatpush1.msra.mxu0 %v2067
  %2166 = vmatprep.subr.mxu0 %v2064
  %2167 = vmatpush1.msra.mxu0 %v2063
  %2168 = vmatprep.subr.mxu0 %v2060
  %2169 = vmatpush1.msra.mxu0 %v2059
  %2170 = vmatprep.subr.mxu0 %v2056
  %2171 = vmatpush1.msra.mxu0 %v2055
  %2172 = vmatprep.subr.mxu0 %v2052
  %2173 = vmatpush1.msra.mxu0 %v2051
  %2174 = vmatprep.subr.mxu0 %v2048
  %2175 = vmatpush1.msra.mxu0 %v2047
  %2176 = vmatprep.subr.mxu0 %v2044
  %2177 = vmatpush1.msra.mxu0 %v2043
  %2178 = vmatprep.subr.mxu0 %v2040
  %2179 = vmatpush1.msra.mxu0 %v2039
  %2180 = vmatprep.subr.mxu0 %v2036
  %2181 = vmatpush1.msra.mxu0 %v2035
  %2182 = vmatprep.subr.mxu0 %v2032
  %2183 = vmatpush1.msra.mxu0 %v2031
  %2184 = vmatprep.subr.mxu0 %v2028
  %2185 = vmatpush1.msra.mxu0 %v2027
  %2186 = vmatprep.subr.mxu0 %v2024
  %2187 = vmatpush1.msra.mxu0 %v2023
  %2188 = vmatprep.subr.mxu0 0.0
  %2189 = vmatpush2.msra.mxu0 0.0
  %2190 = vmatprep.subr.mxu0 0.0
  %2191 = vmatpush2.msra.mxu0 0.0
  %2192 = vmatprep.subr.mxu0 0.0
  %2193 = vmatpush2.msra.mxu0 0.0
  %2194 = vmatprep.subr.mxu0 0.0
  %2195 = vmatpush2.msra.mxu0 0.0
  %2196 = vmatprep.subr.mxu0 0.0
  %2197 = vmatpush2.msra.mxu0 0.0
  %2198 = vmatprep.subr.mxu0 0.0
  %2199 = vmatpush2.msra.mxu0 0.0
  %2200 = vmatprep.subr.mxu0 0.0
  %2201 = vmatpush2.msra.mxu0 0.0
  %2202 = vmatprep.subr.mxu0 0.0
  %2203 = vmatpush2.msra.mxu0 0.0
  %2204 = vmatprep.subr.mxu0 0.0
  %2205 = vmatpush2.msra.mxu0 0.0
  %2206 = vmatprep.subr.mxu0 0.0
  %2207 = vmatpush2.msra.mxu0 0.0
  %2208 = vmatprep.subr.mxu0 0.0
  %2209 = vmatpush2.msra.mxu0 0.0
  %2210 = vmatprep.subr.mxu0 0.0
  %2211 = vmatpush2.msra.mxu0 0.0
  %2212 = vmatprep.subr.mxu0 0.0
  %2213 = vmatpush2.msra.mxu0 0.0
  %2214 = vmatprep.subr.mxu0 0.0
  %2215 = vmatpush2.msra.mxu0 0.0
  %2216 = vmatprep.subr.mxu0 0.0
  %2217 = vmatpush2.msra.mxu0 0.0
  %2218 = vmatprep.subr.mxu0 0.0
  %2219 = vmatpush2.msra.mxu0 0.0
  %2220 = vmatprep.mubr.f32.mxu0 0.0
  %2221 = vmatmul.mubr.f32.gmra.mxu0 %v2011
  %v2222 = vpop.f32.mrf.mxu0
  %v2223 = vadd.f32 0.0, %v2222
  %v2224 = vpop.f32.mrf.mxu0
  %v2225 = vadd.f32 0.0, %v2224
  %2226 = vdwg.mxu0
  %v2227 = vadd.f32 %v2017, %v2152
  %v2228 = vadd.f32 %v2018, %v2154
  %v2229 = vadd.f32 %v2019, %v2223
  %v2230 = vadd.f32 %v2020, %v2225
  %v2231 = vmul.f32 %v2227, 0.5
  %v2232 = vtanh.pop %v2231
  %v2233 = vmul.f32 %v2232, 0.5
  %v2234 = vadd.f32 %v2233, 0.5
  %v2235 = vmul.f32 %v2228, 0.5
  %v2236 = vtanh.pop %v2235
  %v2237 = vmul.f32 %v2236, 0.5
  %v2238 = vadd.f32 %v2237, 0.5
  %v2239 = vtanh.pop %v2229
  %v2240 = vmul.f32 %v2230, 0.5
  %v2241 = vtanh.pop %v2240
  %v2242 = vmul.f32 %v2241, 0.5
  %v2243 = vadd.f32 %v2242, 0.5
  %v2244 = vmul.f32 %v2238, %v2009
  %v2245 = vmul.f32 %v2234, %v2239
  %v2246 = vadd.f32 %v2244, %v2245
  %v2247 = vtanh.pop %v2246
  %v2248 = vmul.f32 %v2243, %v2247
  %s2249 = scalar_lea.vmem %s6, 56
  %2250 = vst [vmem:[%s2249] sm:$0xff] %v2248
  %2251 = vst [vmem:[#allocation3] sm:$0xff] %v2248
  %2252 = vst [vmem:[#allocation4] sm:$0xff] %v2246
  // Predicated region
  $region30: #{cudnn_lstm_forward.1} parent=0 // pred_check
    %p2253 = pneg %p25
  $region31: #{cudnn_lstm_forward.1} parent=0 // pred_check_branch
    %2255 = sbr.rel (%p2253) target = $region33
  $region32: #{cudnn_lstm_forward.1} parent=0 // pred_region
    %2256 = vst [vmem:[%s7] sm:$0xff] %v2246
  $region33: #{cudnn_lstm_forward.1} parent=0 // pred_fallthru
    _
  // Predicated region
  $region34: #{cudnn_lstm_forward.1} parent=0 // pred_check
    _
  $region35: #{cudnn_lstm_forward.1} parent=0 // pred_check_branch
    %2258 = sbr.rel (0) target = $region37
  $region36: #{cudnn_lstm_forward.1} parent=0 // pred_region
    _
  $region37: #{cudnn_lstm_forward.1} parent=0 // pred_fallthru
    _
  // Predicated region
  $region38: #{cudnn_lstm_forward.1} parent=0 // pred_check
    _
  $region39: #{cudnn_lstm_forward.1} parent=0 // pred_check_branch
    %2260 = sbr.rel (0) target = $region41
  $region40: #{cudnn_lstm_forward.1} parent=0 // pred_region
    _
  $region41: #{cudnn_lstm_forward.1} parent=0 // pred_fallthru
    _
  // Predicated region
  $region42: #{cudnn_lstm_forward.1} parent=0 // pred_check
    _
  $region43: #{cudnn_lstm_forward.1} parent=0 // pred_check_branch
    %2262 = sbr.rel (0) target = $region45
  $region44: #{cudnn_lstm_forward.1} parent=0 // pred_region
    _
  $region45: #{cudnn_lstm_forward.1} parent=0 // pred_fallthru
    _
  // Predicated region
  $region46: #{cudnn_lstm_forward.1} parent=0 // pred_check
    _
  $region47: #{cudnn_lstm_forward.1} parent=0 // pred_check_branch
    %2264 = sbr.rel (0) target = $region49
  $region48: #{cudnn_lstm_forward.1} parent=0 // pred_region
    _
  $region49: #{cudnn_lstm_forward.1} parent=0 // pred_fallthru
    _

</llo_original>
